<compile_context>
chip_gen: v6e
topology: v6e:2x2x1
jax: 0.10.0
libtpu: 0.0.40
codegen_flags: <defaults>
</compile_context>

<pallas_src>
import jax
import jax.numpy as jnp
from jax import lax
from jax.experimental import pallas as pl
from jax.experimental.pallas import tpu as pltpu


# ------------------------------ device-derived config -------------------------------
def _device_config():
    kind = ""
    try:
        kind = jax.devices()[0].device_kind.lower()
    except Exception:
        pass
    vmem_cap = None
    try:
        vmem_cap = getattr(pltpu.get_tpu_info(), "vmem_capacity_bytes", None)
    except Exception:
        vmem_cap = None
    if not vmem_cap:
        # v7x has 64 MiB/TC, earlier gens 128 MiB; be conservative when unknown.
        vmem_cap = 64 * 1024 * 1024 if ("v7" in kind or kind == "") else 128 * 1024 * 1024
    small_vmem = vmem_cap < 100 * 1024 * 1024
    return dict(
        kind=kind,
        vmem_limit=min(100 * 1024 * 1024, int(vmem_cap * 0.85)),
        tq_target=512 if small_vmem else 1024,           # bigger query tiles on v5e/v6e
        x_single_buffered=small_vmem,                    # save one x block on v7x
        use_bf16_exp=("v6" in kind) or ("v7" in kind),   # bf16 EUP; not on v5e
    )


def _pick_tq(hwp, target):
    """Largest multiple of 128 that divides hwp and is <= target."""
    n = hwp // 128
    cap = max(1, target // 128)
    best = 1
    for d in range(1, min(n, cap) + 1):
        if n % d == 0:
            best = d
    return 128 * best


# ------------------------------- wrapper + kernel -----------------------------------
def affinity_attention(x, params):
    B, C, H, W = x.shape
    HW = H * W
    HWP = ((HW + 127) // 128) * 128            # lane-dense spatial length (mult of 128)
    C8 = params["wq"].shape[0]                 # query/key channels (C // 8)
    C8P = ((C8 + 15) // 16) * 16               # bf16 sublane packing
    CV = ((C + 1 + 15) // 16) * 16             # value rows + MXU row-sum ones row
    eps = 1e-5
    f32, bf16 = jnp.float32, jnp.bfloat16

    cfg = _device_config()
    TQ = _pick_tq(HWP, cfg["tq_target"])
    NQ = HWP // TQ
    use_bf16_exp = cfg["use_bf16_exp"]

    # ---- host-side parameter folding (tiny, one-off) --------------------------------
    def fold_conv_bn(w_taps, conv_b, g, b, m, v):
        # w_taps: (3, C8, C).  Eval-mode BN scale folded into the weights, conv bias +
        # BN shift into a per-channel vector.  Padded rows stay exactly zero.
        a = g / jnp.sqrt(v + eps)                                   # (C8,)
        w = w_taps * a[None, :, None]                               # (3, C8, C)
        w = jnp.pad(w, ((0, 0), (0, C8P - C8), (0, 0)))
        shift = a * (conv_b - m) + b
        shift = jnp.pad(shift, (0, C8P - C8)).reshape(C8P, 1)
        return w.astype(bf16), shift.astype(f32)

    wq_taps = jnp.transpose(params["wq"][:, :, 0, :], (2, 0, 1))    # taps: w-1, w, w+1
    wk_taps = jnp.transpose(params["wk"][:, :, :, 0], (2, 0, 1))    # taps: h-1, h, h+1
    wq3, bq_s = fold_conv_bn(wq_taps, params["bq"], params["bn_q_g"],
                             params["bn_q_b"], params["bn_q_m"], params["bn_q_v"])
    wk3, bk_s = fold_conv_bn(wk_taps, params["bk"], params["bn_k_g"],
                             params["bn_k_b"], params["bn_k_m"], params["bn_k_v"])
    # 1x1 value conv padded with an all-ones row (weight 0 / bias 1) at index C so the
    # spatial-softmax row-sum falls out of the V @ E matmul for free.
    wv_p = jnp.pad(params["wv"][:, :, 0, 0], ((0, CV - C), (0, 0))).astype(bf16)
    bv_full = jnp.pad(params["bv"], (0, CV - C)).at[C].set(1.0)
    bv_p = bv_full.reshape(CV, 1).astype(f32)
    gammas = jnp.stack([params["gamma_s"][0], params["gamma_c"][0]]).astype(f32)

    x2 = x.reshape(B, C, HW).astype(f32)
    if HWP != HW:
        x2 = jnp.pad(x2, ((0, 0), (0, 0), (0, HWP - HW)))           # zero lane padding

    # ---- kernel ----------------------------------------------------------------------
    def kernel(x_ref, wq_ref, bq_ref, wk_ref, bk_ref, wv_ref, bv_ref, g_ref,
               o_ref, q_sc, k_sc, v_sc, pc_sc, mask_sc):
        qi = pl.program_id(1)

        # Per batch element (first query tile): conv taps built just-in-time with
        # roll + boundary mask, accumulated over three per-tap matmuls; value conv;
        # gamma_c-scaled channel probabilities; additive padded-key mask.
        @pl.when(qi == 0)
        def _per_batch_setup():
            x = x_ref[...]                                          # (C, HWP) f32
            x_hi = x.astype(bf16)
            lane = lax.broadcasted_iota(jnp.int32, (1, HWP), 1)
            wcol = lane % W

            def tap(shift, valid):
                # shifted copy of the flattened image; cross-row / wrap-around leakage
                # is zeroed by the mask; one live (C,HWP) temp, consumed by its dot.
                return jnp.where(valid, pltpu.roll(x, shift, axis=1), 0.0).astype(bf16)

            # 1x3 query conv (BN folded): three per-tap matmuls, f32 accumulation.
            q = jnp.dot(wq_ref[1], x_hi, preferred_element_type=f32)
            q = q + jnp.dot(wq_ref[0], tap(1, wcol != 0),
                            preferred_element_type=f32)             # x[h, w-1]
            q = q + jnp.dot(wq_ref[2], tap(HWP - 1, wcol != W - 1),
                            preferred_element_type=f32)             # x[h, w+1]
            q_sc[...] = jnp.maximum(q + bq_ref[...], 0.0).astype(bf16)   # (C8P, HWP)

            # 3x1 key conv (BN folded).
            k = jnp.dot(wk_ref[1], x_hi, preferred_element_type=f32)
            k = k + jnp.dot(wk_ref[0], tap(W, lane >= W),
                            preferred_element_type=f32)             # x[h-1, w]
            k = k + jnp.dot(wk_ref[2], tap(HWP - W, lane < HW - W),
                            preferred_element_type=f32)             # x[h+1, w]
            k_sc[...] = jnp.maximum(k + bk_ref[...], 0.0).astype(bf16)   # (C8P, HWP)

            # 1x1 value conv; row C is the all-ones row (MXU row-sum of e).
            v = jnp.dot(wv_ref[...], x_hi, preferred_element_type=f32) + bv_ref[...]
            v_sc[...] = v.astype(bf16)                              # (CV, HWP)

            # Channel attention.  Gram via explicit hi/lo bf16 split (~f32 accuracy,
            # 3 bf16 MXU passes; avoids uncontrolled f32 MXU emulation on v7x).
            # softmax(rowmax - G) == softmax(-G); shift by rowmin so max logit is 0.
            x_lo = (x - x_hi.astype(f32)).astype(bf16)
            dims = (((1,), (1,)), ((), ()))
            gram = lax.dot_general(x_hi, x_hi, dims, preferred_element_type=f32)
            gram = gram + lax.dot_general(x_hi, x_lo, dims, preferred_element_type=f32)
            gram = gram + lax.dot_general(x_lo, x_hi, dims, preferred_element_type=f32)
            logits = jnp.min(gram, axis=-1, keepdims=True) - gram
            ec = jnp.exp(logits)
            inv_rc = pl.reciprocal(jnp.sum(ec, axis=-1, keepdims=True), approx=True)
            pc_sc[...] = ((g_ref[1] * inv_rc) * ec).astype(bf16)    # gamma_c folded in

            if HWP != HW:   # additive -inf mask for padded key positions (built once)
                key_idx = lax.broadcasted_iota(jnp.int32, (HWP, 1), 0)
                mask_sc[...] = jnp.where(key_idx < HW, 0.0, -1e30)

        # Per query tile: spatial attention, keys on sublanes so softmax stats are
        # (1, TQ) lane vectors; normalization deferred to an approx reciprocal.
        start = pl.multiple_of(qi * TQ, TQ)
        x_t = x_ref[:, pl.ds(start, TQ)]                            # (C, TQ) f32
        q_t = q_sc[:, pl.ds(start, TQ)]                             # (C8P, TQ) bf16

        # s[j, i] = sum_c k[c, j] * q[c, i]
        s = lax.dot_general(k_sc[...], q_t, (((0,), (0,)), ((), ())),
                            preferred_element_type=f32)             # (HWP, TQ)
        if HWP != HW:
            s = s + mask_sc[...]                                    # mask padded keys
        m = jnp.max(s, axis=0, keepdims=True)                       # (1, TQ)
        arg = s - m
        if use_bf16_exp:      # bf16 EUP on v6e/v7x; e feeds the MXU in bf16 anyway
            e = jnp.exp(arg.astype(bf16))
        else:                 # v5e / unknown: f32 EUP, then cast for the MXU
            e = jnp.exp(arg).astype(bf16)

        wsf = jnp.dot(v_sc[...], e, preferred_element_type=f32)     # (CV, TQ)
        inv_r = pl.reciprocal(wsf[C:C + 1, :], approx=True)         # row-sum from MXU
        wc = jnp.dot(pc_sc[...], x_t.astype(bf16), preferred_element_type=f32)

        # out = (gamma_s*ws_norm + x) + (gamma_c*wc_norm + x)
        o_ref[...] = (g_ref[0] * inv_r) * wsf[:C, :] + wc + 2.0 * x_t

    # ---- pallas_call (with a no-pipeline_mode fallback for older jax) ----------------
    def build_and_call(use_buffered):
        def const_spec(shape):
            idx = lambda b, qi: (0,) * len(shape)
            if use_buffered:   # grid-invariant operands: no double-buffering
                return pl.BlockSpec(shape, idx, pipeline_mode=pl.Buffered(1))
            return pl.BlockSpec(shape, idx)

        x_idx = lambda b, qi: (b, 0, 0)
        if use_buffered and cfg["x_single_buffered"]:
            x_spec = pl.BlockSpec((None, C, HWP), x_idx, pipeline_mode=pl.Buffered(1))
        else:
            x_spec = pl.BlockSpec((None, C, HWP), x_idx)

        return pl.pallas_call(
            kernel,
            out_shape=jax.ShapeDtypeStruct((B, C, HWP), f32),
            grid=(B, NQ),
            in_specs=[
                x_spec,                                   # x (full per batch element)
                const_spec((3, C8P, C)),                  # q conv taps (BN folded)
                const_spec((C8P, 1)),                     # q conv+BN shift
                const_spec((3, C8P, C)),                  # k conv taps (BN folded)
                const_spec((C8P, 1)),                     # k conv+BN shift
                const_spec((CV, C)),                      # value 1x1 weight (+ones row)
                const_spec((CV, 1)),                      # value bias (+ones row)
                pl.BlockSpec(memory_space=pltpu.MemorySpace.SMEM),  # (gamma_s, gamma_c)
            ],
            out_specs=pl.BlockSpec((None, C, TQ), lambda b, qi: (b, 0, qi)),
            scratch_shapes=[
                pltpu.VMEM((C8P, HWP), bf16),    # q (per batch element)
                pltpu.VMEM((C8P, HWP), bf16),    # k
                pltpu.VMEM((CV, HWP), bf16),     # v + ones row
                pltpu.VMEM((C, C), bf16),        # gamma_c * channel softmax probs
                pltpu.VMEM((HWP, 1), f32),       # additive padded-key mask
            ],
            compiler_params=pltpu.CompilerParams(
                dimension_semantics=("parallel", "arbitrary"),
                vmem_limit_bytes=cfg["vmem_limit"]),
        )(x2, wq3, bq_s, wk3, bk_s, wv_p, bv_p, gammas)

    try:
        out = build_and_call(True)
    except Exception:
        # pipeline_mode=pl.Buffered unsupported on this jax -> default double-buffering
        out = build_and_call(False)

    return out[:, :, :HW].reshape(B, C, H, W)


# ------------------------------ pure-JAX reference ----------------------------------
def affinity_attention_ref(x, params):
    B, C, H, W = x.shape
    HW = H * W
    eps = 1e-5

    def conv(x, w, b, pad):
        y = lax.conv_general_dilated(x, w, (1, 1), pad,
                                     dimension_numbers=("NCHW", "OIHW", "NCHW"),
                                     precision=lax.Precision.HIGHEST)
        return y + b[None, :, None, None]

    def bn(y, g, b, m, v):
        return (y - m[None, :, None, None]) / jnp.sqrt(v[None, :, None, None] + eps) \
               * g[None, :, None, None] + b[None, :, None, None]

    q = jax.nn.relu(bn(conv(x, params["wq"], params["bq"], ((0, 0), (1, 1))),
                       params["bn_q_g"], params["bn_q_b"],
                       params["bn_q_m"], params["bn_q_v"]))
    k = jax.nn.relu(bn(conv(x, params["wk"], params["bk"], ((1, 1), (0, 0))),
                       params["bn_k_g"], params["bn_k_b"],
                       params["bn_k_m"], params["bn_k_v"]))
    v = conv(x, params["wv"], params["bv"], ((0, 0), (0, 0)))

    pq = q.reshape(B, -1, HW).transpose(0, 2, 1)
    pk = k.reshape(B, -1, HW)
    aff = jnp.einsum("bic,bcj->bij", pq, pk, precision="highest")
    aff = jax.nn.softmax(aff, axis=-1)
    pv = v.reshape(B, C, HW)
    ws = jnp.einsum("bcj,bij->bci", pv, aff, precision="highest")
    sab = params["gamma_s"][0] * ws.reshape(B, C, H, W) + x

    x2 = x.reshape(B, C, HW)
    affc = jnp.einsum("bci,bdi->bcd", x2, x2, precision="highest")
    affc = jnp.max(affc, axis=-1, keepdims=True) - affc
    affc = jax.nn.softmax(affc, axis=-1)
    wc = jnp.einsum("bcd,bdi->bci", affc, x2, precision="highest")
    cab = params["gamma_c"][0] * wc.reshape(B, C, H, W) + x
    return sab + cab


# --------------------------------------- main ----------------------------------------
if __name__ == "__main__":
    f32 = jnp.float32

    def make_params(key, C):
        C8 = max(1, C // 8)
        ks = jax.random.split(key, 14)
        return {
            # query branch: Conv2d(C, C//8, (1,3), pad=(0,1)) + BN + ReLU
            "wq": 0.1 * jax.random.normal(ks[0], (C8, C, 1, 3), f32),
            "bq": 0.1 * jax.random.normal(ks[1], (C8,), f32),
            "bn_q_g": 1.0 + 0.1 * jax.random.normal(ks[2], (C8,), f32),
            "bn_q_b": 0.1 * jax.random.normal(ks[3], (C8,), f32),
            "bn_q_m": 0.1 * jax.random.normal(ks[4], (C8,), f32),
            "bn_q_v": 1.0 + 0.1 * jax.random.uniform(ks[5], (C8,), f32),
            # key branch: Conv2d(C, C//8, (3,1), pad=(1,0)) + BN + ReLU
            "wk": 0.1 * jax.random.normal(ks[6], (C8, C, 3, 1), f32),
            "bk": 0.1 * jax.random.normal(ks[7], (C8,), f32),
            "bn_k_g": 1.0 + 0.1 * jax.random.normal(ks[8], (C8,), f32),
            "bn_k_b": 0.1 * jax.random.normal(ks[9], (C8,), f32),
            "bn_k_m": 0.1 * jax.random.normal(ks[10], (C8,), f32),
            "bn_k_v": 1.0 + 0.1 * jax.random.uniform(ks[11], (C8,), f32),
            # value branch: Conv2d(C, C, 1)
            "wv": 0.1 * jax.random.normal(ks[12], (C, C, 1, 1), f32),
            "bv": 0.1 * jax.random.normal(ks[13], (C,), f32),
            # torch inits gammas to 0 (out would be exactly 2*x); nonzero to exercise
            "gamma_s": jnp.array([0.5], f32),
            "gamma_c": jnp.array([0.7], f32),
        }

    def run_case(key, B, C, H, W, tol):
        kp, kx = jax.random.split(key)
        params = make_params(kp, C)
        x = jax.random.normal(kx, (B, C, H, W), f32)
        out = jax.block_until_ready(affinity_attention(x, params))
        ref = affinity_attention_ref(x, params)
        assert out.shape == (B, C, H, W)
        err = float(jnp.max(jnp.abs(out - ref)))
        if err > tol:
            raise AssertionError(
                f"shape ({B},{C},{H},{W}): max abs err {err:.4e} > {tol:.1e}")

    key = jax.random.PRNGKey(0)
    k1, k2 = jax.random.split(key)
    # Small case: single query tile, lane padding exercised (HW=64 < 128).
    run_case(k1, B=2, C=16, H=8, W=8, tol=5e-2)
    # Non-square, non-power-of-two case that forces NQ > 1 (HW=1085 -> HWP=1152,
    # TQ=384) and exercises the roll boundary masks + padded-key mask on a
    # multi-tile query grid.
    run_case(k2, B=1, C=16, H=35, W=31, tol=6e-2)
    print("KERNEL_OK")
</pallas_src>

<mosaic_0001>
module attributes {stable_mosaic.version = 11 : i64} {
  func.func @kernel(%arg0: i32, %arg1: i32, %arg2: memref<1x16x128xf32, #tpu.memory_space<vmem>>, %arg3: memref<3x16x16xbf16, #tpu.memory_space<vmem>>, %arg4: memref<16x1xf32, #tpu.memory_space<vmem>>, %arg5: memref<3x16x16xbf16, #tpu.memory_space<vmem>>, %arg6: memref<16x1xf32, #tpu.memory_space<vmem>>, %arg7: memref<32x16xbf16, #tpu.memory_space<vmem>>, %arg8: memref<32x1xf32, #tpu.memory_space<vmem>>, %arg9: memref<2xf32, #tpu.memory_space<smem>>, %arg10: memref<1x16x128xf32, #tpu.memory_space<vmem>>, %arg11: memref<16x128xbf16, #tpu.memory_space<vmem>>, %arg12: memref<16x128xbf16, #tpu.memory_space<vmem>>, %arg13: memref<32x128xbf16, #tpu.memory_space<vmem>>, %arg14: memref<16x16xbf16, #tpu.memory_space<vmem>>, %arg15: memref<128x1xf32, #tpu.memory_space<vmem>>) attributes {dimension_semantics = [#tpu.dimension_semantics<parallel>, #tpu.dimension_semantics<arbitrary>], iteration_bounds = array<i64: 2, 1>, scalar_prefetch = 0 : i64, scratch_operands = 5 : i64, tpu.core_type = #tpu.core_type<tc>, window_params = [{transform_indices = @transform_0, window_bounds = array<i64: 1, 16, 128>}, {pipeline_mode = #tpu.pipeline_mode<synchronous>, transform_indices = @transform_1, window_bounds = array<i64: 3, 16, 16>}, {pipeline_mode = #tpu.pipeline_mode<synchronous>, transform_indices = @transform_2, window_bounds = array<i64: 16, 1>}, {pipeline_mode = #tpu.pipeline_mode<synchronous>, transform_indices = @transform_3, window_bounds = array<i64: 3, 16, 16>}, {pipeline_mode = #tpu.pipeline_mode<synchronous>, transform_indices = @transform_4, window_bounds = array<i64: 16, 1>}, {pipeline_mode = #tpu.pipeline_mode<synchronous>, transform_indices = @transform_5, window_bounds = array<i64: 32, 16>}, {pipeline_mode = #tpu.pipeline_mode<synchronous>, transform_indices = @transform_6, window_bounds = array<i64: 32, 1>}, {transform_indices = @transform_7, window_bounds = array<i64: 2>}, {transform_indices = @transform_8, window_bounds = array<i64: 1, 16, 128>}]} {
    %c0_i32 = arith.constant 0 : i32
    %0 = arith.cmpi eq, %arg1, %c0_i32 : i32
    %1 = arith.extui %0 : i1 to i32
    %c0_i32_0 = arith.constant 0 : i32
    %2 = arith.cmpi ne, %1, %c0_i32_0 : i32
    scf.if %2 {
      %c0_19 = arith.constant 0 : index
      %c0_20 = arith.constant 0 : index
      %c0_21 = arith.constant 0 : index
      %41 = vector.load %arg2[%c0_19, %c0_20, %c0_21] : memref<1x16x128xf32, #tpu.memory_space<vmem>>, vector<1x16x128xf32>
      %42 = vector.shape_cast %41 : vector<1x16x128xf32> to vector<16x128xf32>
      %43 = arith.truncf %42 : vector<16x128xf32> to vector<16x128xbf16>
      %44 = tpu.iota {dimensions = array<i32: 1>} : vector<1x128xi32>
      %c8_i32 = arith.constant 8 : i32
      %c0_i32_22 = arith.constant 0 : i32
      %45 = arith.cmpi eq, %c8_i32, %c0_i32_22 : i32
      %c1_i32 = arith.constant 1 : i32
      %46 = arith.select %45, %c1_i32, %c8_i32 : i32
      %47 = vector.broadcast %46 : i32 to vector<1x128xi32>
      %48 = arith.remsi %44, %47 : vector<1x128xi32>
      %c0_i32_23 = arith.constant 0 : i32
      %49 = vector.broadcast %c0_i32_23 : i32 to vector<1x128xi32>
      %50 = arith.cmpi ne, %48, %49 : vector<1x128xi32>
      %c0_i32_24 = arith.constant 0 : i32
      %51 = vector.broadcast %c0_i32_24 : i32 to vector<1x128xi32>
      %52 = arith.cmpi slt, %48, %51 : vector<1x128xi32>
      %c0_i32_25 = arith.constant 0 : i32
      %53 = arith.cmpi slt, %46, %c0_i32_25 : i32
      %54 = vector.broadcast %53 : i1 to vector<1x128xi1>
      %55 = vector.broadcast %54 : vector<1x128xi1> to vector<1x128xi1>
      %56 = arith.xori %52, %55 : vector<1x128xi1>
      %57 = arith.andi %56, %50 : vector<1x128xi1>
      %58 = vector.broadcast %46 : i32 to vector<1x128xi32>
      %59 = arith.addi %48, %58 : vector<1x128xi32>
      %60 = arith.select %57, %59, %48 : vector<1x128xi1>, vector<1x128xi32>
      %c1 = arith.constant 1 : index
      %c0_26 = arith.constant 0 : index
      %c0_27 = arith.constant 0 : index
      %61 = vector.load %arg3[%c1, %c0_26, %c0_27] : memref<3x16x16xbf16, #tpu.memory_space<vmem>>, vector<1x16x16xbf16>
      %62 = vector.shape_cast %61 : vector<1x16x16xbf16> to vector<16x16xbf16>
      %cst_28 = arith.constant dense<0.000000e+00> : vector<16x128xf32>
      %63 = tpu.matmul %62, %43, %cst_28 {dimension_numbers = #tpu.dot_dimension_numbers<[1], [0], [0], [1], [0, 0, 1, 1], [], []>} : vector<16x16xbf16>, vector<16x128xbf16>, vector<16x128xf32> -> vector<16x128xf32>
      %c0_29 = arith.constant 0 : index
      %c0_30 = arith.constant 0 : index
      %c0_31 = arith.constant 0 : index
      %64 = vector.load %arg3[%c0_29, %c0_30, %c0_31] : memref<3x16x16xbf16, #tpu.memory_space<vmem>>, vector<1x16x16xbf16>
      %65 = vector.shape_cast %64 : vector<1x16x16xbf16> to vector<16x16xbf16>
      %c0_i32_32 = arith.constant 0 : i32
      %66 = vector.broadcast %c0_i32_32 : i32 to vector<1x128xi32>
      %67 = arith.cmpi ne, %60, %66 : vector<1x128xi32>
      %c1_i32_33 = arith.constant 1 : i32
      %68 = tpu.dynamic_rotate %42 by %c1_i32_33 dim 1 : vector<16x128xf32>, i32 -> vector<16x128xf32>
      %cst_34 = arith.constant 0.000000e+00 : f32
      %69 = vector.shape_cast %67 : vector<1x128xi1> to vector<1x128xi1>
      %70 = vector.broadcast %69 : vector<1x128xi1> to vector<16x128xi1>
      %71 = vector.broadcast %cst_34 : f32 to vector<16x128xf32>
      %72 = arith.select %70, %68, %71 : vector<16x128xi1>, vector<16x128xf32>
      %73 = arith.truncf %72 : vector<16x128xf32> to vector<16x128xbf16>
      %cst_35 = arith.constant dense<0.000000e+00> : vector<16x128xf32>
      %74 = tpu.matmul %65, %73, %cst_35 {dimension_numbers = #tpu.dot_dimension_numbers<[1], [0], [0], [1], [0, 0, 1, 1], [], []>} : vector<16x16xbf16>, vector<16x128xbf16>, vector<16x128xf32> -> vector<16x128xf32>
      %75 = arith.addf %63, %74 : vector<16x128xf32>
      %c2 = arith.constant 2 : index
      %c0_36 = arith.constant 0 : index
      %c0_37 = arith.constant 0 : index
      %76 = vector.load %arg3[%c2, %c0_36, %c0_37] : memref<3x16x16xbf16, #tpu.memory_space<vmem>>, vector<1x16x16xbf16>
      %77 = vector.shape_cast %76 : vector<1x16x16xbf16> to vector<16x16xbf16>
      %c7_i32 = arith.constant 7 : i32
      %78 = vector.broadcast %c7_i32 : i32 to vector<1x128xi32>
      %79 = arith.cmpi ne, %60, %78 : vector<1x128xi32>
      %c127_i32 = arith.constant 127 : i32
      %80 = tpu.dynamic_rotate %42 by %c127_i32 dim 1 : vector<16x128xf32>, i32 -> vector<16x128xf32>
      %cst_38 = arith.constant 0.000000e+00 : f32
      %81 = vector.shape_cast %79 : vector<1x128xi1> to vector<1x128xi1>
      %82 = vector.broadcast %81 : vector<1x128xi1> to vector<16x128xi1>
      %83 = vector.broadcast %cst_38 : f32 to vector<16x128xf32>
      %84 = arith.select %82, %80, %83 : vector<16x128xi1>, vector<16x128xf32>
      %85 = arith.truncf %84 : vector<16x128xf32> to vector<16x128xbf16>
      %cst_39 = arith.constant dense<0.000000e+00> : vector<16x128xf32>
      %86 = tpu.matmul %77, %85, %cst_39 {dimension_numbers = #tpu.dot_dimension_numbers<[1], [0], [0], [1], [0, 0, 1, 1], [], []>} : vector<16x16xbf16>, vector<16x128xbf16>, vector<16x128xf32> -> vector<16x128xf32>
      %87 = arith.addf %75, %86 : vector<16x128xf32>
      %c0_40 = arith.constant 0 : index
      %c0_41 = arith.constant 0 : index
      %88 = vector.load %arg4[%c0_40, %c0_41] : memref<16x1xf32, #tpu.memory_space<vmem>>, vector<16x1xf32>
      %89 = vector.broadcast %88 : vector<16x1xf32> to vector<16x128xf32>
      %90 = arith.addf %87, %89 : vector<16x128xf32>
      %cst_42 = arith.constant 0.000000e+00 : f32
      %91 = vector.broadcast %cst_42 : f32 to vector<16x128xf32>
      %92 = arith.maximumf %90, %91 : vector<16x128xf32>
      %93 = arith.truncf %92 : vector<16x128xf32> to vector<16x128xbf16>
      %c0_43 = arith.constant 0 : index
      %c0_44 = arith.constant 0 : index
      %94 = vector.load %arg11[%c0_43, %c0_44] : memref<16x128xbf16, #tpu.memory_space<vmem>>, vector<16x128xbf16>
      tpu.vector_store %arg11[%c0_43, %c0_44], %93 {strides = array<i32>} : memref<16x128xbf16, #tpu.memory_space<vmem>>, vector<16x128xbf16>,
      %c1_45 = arith.constant 1 : index
      %c0_46 = arith.constant 0 : index
      %c0_47 = arith.constant 0 : index
      %95 = vector.load %arg5[%c1_45, %c0_46, %c0_47] : memref<3x16x16xbf16, #tpu.memory_space<vmem>>, vector<1x16x16xbf16>
      %96 = vector.shape_cast %95 : vector<1x16x16xbf16> to vector<16x16xbf16>
      %cst_48 = arith.constant dense<0.000000e+00> : vector<16x128xf32>
      %97 = tpu.matmul %96, %43, %cst_48 {dimension_numbers = #tpu.dot_dimension_numbers<[1], [0], [0], [1], [0, 0, 1, 1], [], []>} : vector<16x16xbf16>, vector<16x128xbf16>, vector<16x128xf32> -> vector<16x128xf32>
      %c0_49 = arith.constant 0 : index
      %c0_50 = arith.constant 0 : index
      %c0_51 = arith.constant 0 : index
      %98 = vector.load %arg5[%c0_49, %c0_50, %c0_51] : memref<3x16x16xbf16, #tpu.memory_space<vmem>>, vector<1x16x16xbf16>
      %99 = vector.shape_cast %98 : vector<1x16x16xbf16> to vector<16x16xbf16>
      %c8_i32_52 = arith.constant 8 : i32
      %100 = vector.broadcast %c8_i32_52 : i32 to vector<1x128xi32>
      %101 = arith.cmpi sge, %44, %100 : vector<1x128xi32>
      %c8_i32_53 = arith.constant 8 : i32
      %102 = tpu.dynamic_rotate %42 by %c8_i32_53 dim 1 : vector<16x128xf32>, i32 -> vector<16x128xf32>
      %cst_54 = arith.constant 0.000000e+00 : f32
      %103 = vector.shape_cast %101 : vector<1x128xi1> to vector<1x128xi1>
      %104 = vector.broadcast %103 : vector<1x128xi1> to vector<16x128xi1>
      %105 = vector.broadcast %cst_54 : f32 to vector<16x128xf32>
      %106 = arith.select %104, %102, %105 : vector<16x128xi1>, vector<16x128xf32>
      %107 = arith.truncf %106 : vector<16x128xf32> to vector<16x128xbf16>
      %cst_55 = arith.constant dense<0.000000e+00> : vector<16x128xf32>
      %108 = tpu.matmul %99, %107, %cst_55 {dimension_numbers = #tpu.dot_dimension_numbers<[1], [0], [0], [1], [0, 0, 1, 1], [], []>} : vector<16x16xbf16>, vector<16x128xbf16>, vector<16x128xf32> -> vector<16x128xf32>
      %109 = arith.addf %97, %108 : vector<16x128xf32>
      %c2_56 = arith.constant 2 : index
      %c0_57 = arith.constant 0 : index
      %c0_58 = arith.constant 0 : index
      %110 = vector.load %arg5[%c2_56, %c0_57, %c0_58] : memref<3x16x16xbf16, #tpu.memory_space<vmem>>, vector<1x16x16xbf16>
      %111 = vector.shape_cast %110 : vector<1x16x16xbf16> to vector<16x16xbf16>
      %c56_i32 = arith.constant 56 : i32
      %112 = vector.broadcast %c56_i32 : i32 to vector<1x128xi32>
      %113 = arith.cmpi slt, %44, %112 : vector<1x128xi32>
      %c120_i32 = arith.constant 120 : i32
      %114 = tpu.dynamic_rotate %42 by %c120_i32 dim 1 : vector<16x128xf32>, i32 -> vector<16x128xf32>
      %cst_59 = arith.constant 0.000000e+00 : f32
      %115 = vector.shape_cast %113 : vector<1x128xi1> to vector<1x128xi1>
      %116 = vector.broadcast %115 : vector<1x128xi1> to vector<16x128xi1>
      %117 = vector.broadcast %cst_59 : f32 to vector<16x128xf32>
      %118 = arith.select %116, %114, %117 : vector<16x128xi1>, vector<16x128xf32>
      %119 = arith.truncf %118 : vector<16x128xf32> to vector<16x128xbf16>
      %cst_60 = arith.constant dense<0.000000e+00> : vector<16x128xf32>
      %120 = tpu.matmul %111, %119, %cst_60 {dimension_numbers = #tpu.dot_dimension_numbers<[1], [0], [0], [1], [0, 0, 1, 1], [], []>} : vector<16x16xbf16>, vector<16x128xbf16>, vector<16x128xf32> -> vector<16x128xf32>
      %121 = arith.addf %109, %120 : vector<16x128xf32>
      %c0_61 = arith.constant 0 : index
      %c0_62 = arith.constant 0 : index
      %122 = vector.load %arg6[%c0_61, %c0_62] : memref<16x1xf32, #tpu.memory_space<vmem>>, vector<16x1xf32>
      %123 = vector.broadcast %122 : vector<16x1xf32> to vector<16x128xf32>
      %124 = arith.addf %121, %123 : vector<16x128xf32>
      %cst_63 = arith.constant 0.000000e+00 : f32
      %125 = vector.broadcast %cst_63 : f32 to vector<16x128xf32>
      %126 = arith.maximumf %124, %125 : vector<16x128xf32>
      %127 = arith.truncf %126 : vector<16x128xf32> to vector<16x128xbf16>
      %c0_64 = arith.constant 0 : index
      %c0_65 = arith.constant 0 : index
      %128 = vector.load %arg12[%c0_64, %c0_65] : memref<16x128xbf16, #tpu.memory_space<vmem>>, vector<16x128xbf16>
      tpu.vector_store %arg12[%c0_64, %c0_65], %127 {strides = array<i32>} : memref<16x128xbf16, #tpu.memory_space<vmem>>, vector<16x128xbf16>,
      %c0_66 = arith.constant 0 : index
      %c0_67 = arith.constant 0 : index
      %129 = vector.load %arg7[%c0_66, %c0_67] : memref<32x16xbf16, #tpu.memory_space<vmem>>, vector<32x16xbf16>
      %cst_68 = arith.constant dense<0.000000e+00> : vector<32x128xf32>
      %130 = tpu.matmul %129, %43, %cst_68 {dimension_numbers = #tpu.dot_dimension_numbers<[1], [0], [0], [1], [0, 0, 1, 1], [], []>} : vector<32x16xbf16>, vector<16x128xbf16>, vector<32x128xf32> -> vector<32x128xf32>
      %c0_69 = arith.constant 0 : index
      %c0_70 = arith.constant 0 : index
      %131 = vector.load %arg8[%c0_69, %c0_70] : memref<32x1xf32, #tpu.memory_space<vmem>>, vector<32x1xf32>
      %132 = vector.broadcast %131 : vector<32x1xf32> to vector<32x128xf32>
      %133 = arith.addf %130, %132 : vector<32x128xf32>
      %134 = arith.truncf %133 : vector<32x128xf32> to vector<32x128xbf16>
      %c0_71 = arith.constant 0 : index
      %c0_72 = arith.constant 0 : index
      %135 = vector.load %arg13[%c0_71, %c0_72] : memref<32x128xbf16, #tpu.memory_space<vmem>>, vector<32x128xbf16>
      tpu.vector_store %arg13[%c0_71, %c0_72], %134 {strides = array<i32>} : memref<32x128xbf16, #tpu.memory_space<vmem>>, vector<32x128xbf16>,
      %136 = arith.extf %43 : vector<16x128xbf16> to vector<16x128xf32>
      %137 = arith.subf %42, %136 : vector<16x128xf32>
      %138 = arith.truncf %137 : vector<16x128xf32> to vector<16x128xbf16>
      %cst_73 = arith.constant dense<0.000000e+00> : vector<16x16xf32>
      %139 = tpu.matmul %43, %43, %cst_73 {dimension_numbers = #tpu.dot_dimension_numbers<[1], [1], [0], [0], [0, 0, 1, 0], [], []>} : vector<16x128xbf16>, vector<16x128xbf16>, vector<16x16xf32> -> vector<16x16xf32>
      %cst_74 = arith.constant dense<0.000000e+00> : vector<16x16xf32>
      %140 = tpu.matmul %43, %138, %cst_74 {dimension_numbers = #tpu.dot_dimension_numbers<[1], [1], [0], [0], [0, 0, 1, 0], [], []>} : vector<16x128xbf16>, vector<16x128xbf16>, vector<16x16xf32> -> vector<16x16xf32>
      %141 = arith.addf %139, %140 : vector<16x16xf32>
      %cst_75 = arith.constant dense<0.000000e+00> : vector<16x16xf32>
      %142 = tpu.matmul %138, %43, %cst_75 {dimension_numbers = #tpu.dot_dimension_numbers<[1], [1], [0], [0], [0, 0, 1, 0], [], []>} : vector<16x128xbf16>, vector<16x128xbf16>, vector<16x16xf32> -> vector<16x16xf32>
      %143 = arith.addf %141, %142 : vector<16x16xf32>
      %cst_76 = arith.constant dense<0x7F800000> : vector<16xf32>
      %144 = vector.multi_reduction <minimumf>, %143, %cst_76 [1] : vector<16x16xf32> to vector<16xf32>
      %145 = vector.shape_cast %144 : vector<16xf32> to vector<16x1xf32>
      %146 = vector.broadcast %145 : vector<16x1xf32> to vector<16x16xf32>
      %147 = arith.subf %146, %143 : vector<16x16xf32>
      %148 = math.exp %147 : vector<16x16xf32>
      %cst_77 = arith.constant dense<0.000000e+00> : vector<16xf32>
      %149 = vector.multi_reduction <add>, %148, %cst_77 [1] : vector<16x16xf32> to vector<16xf32>
      %150 = vector.shape_cast %149 : vector<16xf32> to vector<16x1xf32>
      %151 = tpu.reciprocal %150 {approx = true} : vector<16x1xf32> -> vector<16x1xf32>
      %c1_78 = arith.constant 1 : index
      %152 = memref.load %arg9[%c1_78] : memref<2xf32, #tpu.memory_space<smem>>
      %153 = vector.broadcast %152 : f32 to vector<16x1xf32>
      %154 = arith.mulf %153, %151 : vector<16x1xf32>
      %155 = vector.broadcast %154 : vector<16x1xf32> to vector<16x16xf32>
      %156 = arith.mulf %155, %148 : vector<16x16xf32>
      %157 = arith.truncf %156 : vector<16x16xf32> to vector<16x16xbf16>
      %c0_79 = arith.constant 0 : index
      %c0_80 = arith.constant 0 : index
      %158 = vector.load %arg14[%c0_79, %c0_80] : memref<16x16xbf16, #tpu.memory_space<vmem>>, vector<16x16xbf16>
      tpu.vector_store %arg14[%c0_79, %c0_80], %157 {strides = array<i32>} : memref<16x16xbf16, #tpu.memory_space<vmem>>, vector<16x16xbf16>,
      %159 = tpu.iota {dimensions = array<i32: 0>} : vector<128x1xi32>
      %c64_i32 = arith.constant 64 : i32
      %160 = vector.broadcast %c64_i32 : i32 to vector<128x1xi32>
      %161 = arith.cmpi slt, %159, %160 : vector<128x1xi32>
      %cst_81 = arith.constant 0.000000e+00 : f32
      %cst_82 = arith.constant -1.000000e+30 : f32
      %162 = vector.broadcast %cst_81 : f32 to vector<128x1xf32>
      %163 = vector.broadcast %cst_82 : f32 to vector<128x1xf32>
      %164 = arith.select %161, %162, %163 : vector<128x1xi1>, vector<128x1xf32>
      %c0_83 = arith.constant 0 : index
      %c0_84 = arith.constant 0 : index
      %165 = vector.load %arg15[%c0_83, %c0_84] : memref<128x1xf32, #tpu.memory_space<vmem>>, vector<128x1xf32>
      tpu.vector_store %arg15[%c0_83, %c0_84], %164 {strides = array<i32>} : memref<128x1xf32, #tpu.memory_space<vmem>>, vector<128x1xf32>,
    } else {
    }
    %c128_i32 = arith.constant 128 : i32
    %3 = arith.muli %arg1, %c128_i32 : i32
    %4 = tpu.assume_multiple %3, 128 : i32
    %c0 = arith.constant 0 : index
    %c0_1 = arith.constant 0 : index
    %5 = arith.index_cast %4 : i32 to index
    %6 = vector.load %arg2[%c0, %c0_1, %5] : memref<1x16x128xf32, #tpu.memory_space<vmem>>, vector<1x16x128xf32>
    %7 = vector.shape_cast %6 : vector<1x16x128xf32> to vector<16x128xf32>
    %c0_2 = arith.constant 0 : index
    %8 = arith.index_cast %4 : i32 to index
    %9 = vector.load %arg11[%c0_2, %8] : memref<16x128xbf16, #tpu.memory_space<vmem>>, vector<16x128xbf16>
    %c0_3 = arith.constant 0 : index
    %c0_4 = arith.constant 0 : index
    %10 = vector.load %arg12[%c0_3, %c0_4] : memref<16x128xbf16, #tpu.memory_space<vmem>>, vector<16x128xbf16>
    %cst = arith.constant dense<0.000000e+00> : vector<128x128xf32>
    %11 = tpu.matmul %10, %9, %cst {dimension_numbers = #tpu.dot_dimension_numbers<[0], [0], [1], [1], [0, 1, 1, 1], [], []>} : vector<16x128xbf16>, vector<16x128xbf16>, vector<128x128xf32> -> vector<128x128xf32>
    %c0_5 = arith.constant 0 : index
    %c0_6 = arith.constant 0 : index
    %12 = vector.load %arg15[%c0_5, %c0_6] : memref<128x1xf32, #tpu.memory_space<vmem>>, vector<128x1xf32>
    %13 = vector.broadcast %12 : vector<128x1xf32> to vector<128x128xf32>
    %14 = arith.addf %11, %13 : vector<128x128xf32>
    %cst_7 = arith.constant dense<0xFF800000> : vector<128xf32>
    %15 = vector.multi_reduction <maximumf>, %14, %cst_7 [0] : vector<128x128xf32> to vector<128xf32>
    %16 = vector.shape_cast %15 : vector<128xf32> to vector<1x128xf32>
    %17 = vector.broadcast %16 : vector<1x128xf32> to vector<128x128xf32>
    %18 = arith.subf %14, %17 : vector<128x128xf32>
    %19 = math.exp %18 : vector<128x128xf32>
    %20 = arith.truncf %19 : vector<128x128xf32> to vector<128x128xbf16>
    %c0_8 = arith.constant 0 : index
    %c0_9 = arith.constant 0 : index
    %21 = vector.load %arg13[%c0_8, %c0_9] : memref<32x128xbf16, #tpu.memory_space<vmem>>, vector<32x128xbf16>
    %cst_10 = arith.constant dense<0.000000e+00> : vector<32x128xf32>
    %22 = tpu.matmul %21, %20, %cst_10 {dimension_numbers = #tpu.dot_dimension_numbers<[1], [0], [0], [1], [0, 0, 1, 1], [], []>} : vector<32x128xbf16>, vector<128x128xbf16>, vector<32x128xf32> -> vector<32x128xf32>
    %23 = vector.extract_strided_slice %22 {offsets = [16, 0], sizes = [1, 128], strides = [1, 1]} : vector<32x128xf32> to vector<1x128xf32>
    %24 = tpu.reciprocal %23 {approx = true} : vector<1x128xf32> -> vector<1x128xf32>
    %c0_11 = arith.constant 0 : index
    %c0_12 = arith.constant 0 : index
    %25 = vector.load %arg14[%c0_11, %c0_12] : memref<16x16xbf16, #tpu.memory_space<vmem>>, vector<16x16xbf16>
    %26 = arith.truncf %7 : vector<16x128xf32> to vector<16x128xbf16>
    %cst_13 = arith.constant dense<0.000000e+00> : vector<16x128xf32>
    %27 = tpu.matmul %25, %26, %cst_13 {dimension_numbers = #tpu.dot_dimension_numbers<[1], [0], [0], [1], [0, 0, 1, 1], [], []>} : vector<16x16xbf16>, vector<16x128xbf16>, vector<16x128xf32> -> vector<16x128xf32>
    %c0_14 = arith.constant 0 : index
    %28 = memref.load %arg9[%c0_14] : memref<2xf32, #tpu.memory_space<smem>>
    %29 = vector.broadcast %28 : f32 to vector<1x128xf32>
    %30 = arith.mulf %29, %24 : vector<1x128xf32>
    %31 = vector.extract_strided_slice %22 {offsets = [0, 0], sizes = [16, 128], strides = [1, 1]} : vector<32x128xf32> to vector<16x128xf32>
    %32 = vector.broadcast %30 : vector<1x128xf32> to vector<16x128xf32>
    %33 = arith.mulf %32, %31 : vector<16x128xf32>
    %34 = arith.addf %33, %27 : vector<16x128xf32>
    %cst_15 = arith.constant 2.000000e+00 : f32
    %35 = vector.broadcast %cst_15 : f32 to vector<16x128xf32>
    %36 = arith.mulf %35, %7 : vector<16x128xf32>
    %37 = arith.addf %34, %36 : vector<16x128xf32>
    %c0_16 = arith.constant 0 : index
    %c0_17 = arith.constant 0 : index
    %c0_18 = arith.constant 0 : index
    %38 = vector.load %arg10[%c0_16, %c0_17, %c0_18] : memref<1x16x128xf32, #tpu.memory_space<vmem>>, vector<1x16x128xf32>
    %39 = vector.shape_cast %38 : vector<1x16x128xf32> to vector<16x128xf32>
    %40 = vector.shape_cast %37 : vector<16x128xf32> to vector<1x16x128xf32>
    tpu.vector_store %arg10[%c0_16, %c0_17, %c0_18], %40 {strides = array<i32>} : memref<1x16x128xf32, #tpu.memory_space<vmem>>, vector<1x16x128xf32>,
    return
  }
  func.func @transform_0(%arg0: i32, %arg1: i32) -> (i32, i32, i32) {
    %c0_i32 = arith.constant 0 : i32
    %c0_i32_0 = arith.constant 0 : i32
    %c0_i32_1 = arith.constant 0 : i32
    return %arg0, %c0_i32, %c0_i32_0 : i32, i32, i32
  }
  func.func @transform_1(%arg0: i32, %arg1: i32) -> (i32, i32, i32) {
    %c0_i32 = arith.constant 0 : i32
    %c0_i32_0 = arith.constant 0 : i32
    %c0_i32_1 = arith.constant 0 : i32
    %c0_i32_2 = arith.constant 0 : i32
    return %c0_i32, %c0_i32_0, %c0_i32_1 : i32, i32, i32
  }
  func.func @transform_2(%arg0: i32, %arg1: i32) -> (i32, i32) {
    %c0_i32 = arith.constant 0 : i32
    %c0_i32_0 = arith.constant 0 : i32
    %c0_i32_1 = arith.constant 0 : i32
    return %c0_i32, %c0_i32_0 : i32, i32
  }
  func.func @transform_3(%arg0: i32, %arg1: i32) -> (i32, i32, i32) {
    %c0_i32 = arith.constant 0 : i32
    %c0_i32_0 = arith.constant 0 : i32
    %c0_i32_1 = arith.constant 0 : i32
    %c0_i32_2 = arith.constant 0 : i32
    return %c0_i32, %c0_i32_0, %c0_i32_1 : i32, i32, i32
  }
  func.func @transform_4(%arg0: i32, %arg1: i32) -> (i32, i32) {
    %c0_i32 = arith.constant 0 : i32
    %c0_i32_0 = arith.constant 0 : i32
    %c0_i32_1 = arith.constant 0 : i32
    return %c0_i32, %c0_i32_0 : i32, i32
  }
  func.func @transform_5(%arg0: i32, %arg1: i32) -> (i32, i32) {
    %c0_i32 = arith.constant 0 : i32
    %c0_i32_0 = arith.constant 0 : i32
    %c0_i32_1 = arith.constant 0 : i32
    return %c0_i32, %c0_i32_0 : i32, i32
  }
  func.func @transform_6(%arg0: i32, %arg1: i32) -> (i32, i32) {
    %c0_i32 = arith.constant 0 : i32
    %c0_i32_0 = arith.constant 0 : i32
    %c0_i32_1 = arith.constant 0 : i32
    return %c0_i32, %c0_i32_0 : i32, i32
  }
  func.func @transform_7(%arg0: i32, %arg1: i32) -> i32 {
    %c0_i32 = arith.constant 0 : i32
    %c0_i32_0 = arith.constant 0 : i32
    return %c0_i32 : i32
  }
  func.func @transform_8(%arg0: i32, %arg1: i32) -> (i32, i32, i32) {
    %c0_i32 = arith.constant 0 : i32
    %c0_i32_0 = arith.constant 0 : i32
    return %arg0, %c0_i32, %arg1 : i32, i32, i32
  }
}

module attributes {stable_mosaic.version = 11 : i64} {
  func.func @kernel(%arg0: i32, %arg1: i32, %arg2: memref<1x16x128xf32, #tpu.memory_space<vmem>>, %arg3: memref<3x16x16xbf16, #tpu.memory_space<vmem>>, %arg4: memref<16x1xf32, #tpu.memory_space<vmem>>, %arg5: memref<3x16x16xbf16, #tpu.memory_space<vmem>>, %arg6: memref<16x1xf32, #tpu.memory_space<vmem>>, %arg7: memref<32x16xbf16, #tpu.memory_space<vmem>>, %arg8: memref<32x1xf32, #tpu.memory_space<vmem>>, %arg9: memref<2xf32, #tpu.memory_space<smem>>, %arg10: memref<1x16x128xf32, #tpu.memory_space<vmem>>, %arg11: memref<16x128xbf16, #tpu.memory_space<vmem>>, %arg12: memref<16x128xbf16, #tpu.memory_space<vmem>>, %arg13: memref<32x128xbf16, #tpu.memory_space<vmem>>, %arg14: memref<16x16xbf16, #tpu.memory_space<vmem>>, %arg15: memref<128x1xf32, #tpu.memory_space<vmem>>) attributes {dimension_semantics = [#tpu.dimension_semantics<parallel>, #tpu.dimension_semantics<arbitrary>], iteration_bounds = array<i64: 2, 1>, scalar_prefetch = 0 : i64, scratch_operands = 5 : i64, tpu.core_type = #tpu.core_type<tc>, window_params = [{transform_indices = @transform_0, window_bounds = array<i64: 1, 16, 128>}, {pipeline_mode = #tpu.pipeline_mode<synchronous>, transform_indices = @transform_1, window_bounds = array<i64: 3, 16, 16>}, {pipeline_mode = #tpu.pipeline_mode<synchronous>, transform_indices = @transform_2, window_bounds = array<i64: 16, 1>}, {pipeline_mode = #tpu.pipeline_mode<synchronous>, transform_indices = @transform_3, window_bounds = array<i64: 3, 16, 16>}, {pipeline_mode = #tpu.pipeline_mode<synchronous>, transform_indices = @transform_4, window_bounds = array<i64: 16, 1>}, {pipeline_mode = #tpu.pipeline_mode<synchronous>, transform_indices = @transform_5, window_bounds = array<i64: 32, 16>}, {pipeline_mode = #tpu.pipeline_mode<synchronous>, transform_indices = @transform_6, window_bounds = array<i64: 32, 1>}, {transform_indices = @transform_7, window_bounds = array<i64: 2>}, {transform_indices = @transform_8, window_bounds = array<i64: 1, 16, 128>}]} {
    %c0_i32 = arith.constant 0 : i32
    %0 = arith.cmpi eq, %arg1, %c0_i32 : i32
    %1 = arith.extui %0 : i1 to i32
    %c0_i32_0 = arith.constant 0 : i32
    %2 = arith.cmpi ne, %1, %c0_i32_0 : i32
    scf.if %2 {
      %c0_19 = arith.constant 0 : index
      %c0_20 = arith.constant 0 : index
      %c0_21 = arith.constant 0 : index
      %41 = vector.load %arg2[%c0_19, %c0_20, %c0_21] : memref<1x16x128xf32, #tpu.memory_space<vmem>>, vector<1x16x128xf32>
      %42 = vector.shape_cast %41 : vector<1x16x128xf32> to vector<16x128xf32>
      %43 = arith.truncf %42 : vector<16x128xf32> to vector<16x128xbf16>
      %44 = tpu.iota {dimensions = array<i32: 1>} : vector<1x128xi32>
      %c8_i32 = arith.constant 8 : i32
      %c0_i32_22 = arith.constant 0 : i32
      %45 = arith.cmpi eq, %c8_i32, %c0_i32_22 : i32
      %c1_i32 = arith.constant 1 : i32
      %46 = arith.select %45, %c1_i32, %c8_i32 : i32
      %47 = vector.broadcast %46 : i32 to vector<1x128xi32>
      %48 = arith.remsi %44, %47 : vector<1x128xi32>
      %c0_i32_23 = arith.constant 0 : i32
      %49 = vector.broadcast %c0_i32_23 : i32 to vector<1x128xi32>
      %50 = arith.cmpi ne, %48, %49 : vector<1x128xi32>
      %c0_i32_24 = arith.constant 0 : i32
      %51 = vector.broadcast %c0_i32_24 : i32 to vector<1x128xi32>
      %52 = arith.cmpi slt, %48, %51 : vector<1x128xi32>
      %c0_i32_25 = arith.constant 0 : i32
      %53 = arith.cmpi slt, %46, %c0_i32_25 : i32
      %54 = vector.broadcast %53 : i1 to vector<1x128xi1>
      %55 = vector.broadcast %54 : vector<1x128xi1> to vector<1x128xi1>
      %56 = arith.xori %52, %55 : vector<1x128xi1>
      %57 = arith.andi %56, %50 : vector<1x128xi1>
      %58 = vector.broadcast %46 : i32 to vector<1x128xi32>
      %59 = arith.addi %48, %58 : vector<1x128xi32>
      %60 = arith.select %57, %59, %48 : vector<1x128xi1>, vector<1x128xi32>
      %c1 = arith.constant 1 : index
      %c0_26 = arith.constant 0 : index
      %c0_27 = arith.constant 0 : index
      %61 = vector.load %arg3[%c1, %c0_26, %c0_27] : memref<3x16x16xbf16, #tpu.memory_space<vmem>>, vector<1x16x16xbf16>
      %62 = vector.shape_cast %61 : vector<1x16x16xbf16> to vector<16x16xbf16>
      %cst_28 = arith.constant dense<0.000000e+00> : vector<16x128xf32>
      %63 = tpu.matmul %62, %43, %cst_28 {dimension_numbers = #tpu.dot_dimension_numbers<[1], [0], [0], [1], [0, 0, 1, 1], [], []>} : vector<16x16xbf16>, vector<16x128xbf16>, vector<16x128xf32> -> vector<16x128xf32>
      %c0_29 = arith.constant 0 : index
      %c0_30 = arith.constant 0 : index
      %c0_31 = arith.constant 0 : index
      %64 = vector.load %arg3[%c0_29, %c0_30, %c0_31] : memref<3x16x16xbf16, #tpu.memory_space<vmem>>, vector<1x16x16xbf16>
      %65 = vector.shape_cast %64 : vector<1x16x16xbf16> to vector<16x16xbf16>
      %c0_i32_32 = arith.constant 0 : i32
      %66 = vector.broadcast %c0_i32_32 : i32 to vector<1x128xi32>
      %67 = arith.cmpi ne, %60, %66 : vector<1x128xi32>
      %c1_i32_33 = arith.constant 1 : i32
      %68 = tpu.dynamic_rotate %42 by %c1_i32_33 dim 1 : vector<16x128xf32>, i32 -> vector<16x128xf32>
      %cst_34 = arith.constant 0.000000e+00 : f32
      %69 = vector.shape_cast %67 : vector<1x128xi1> to vector<1x128xi1>
      %70 = vector.broadcast %69 : vector<1x128xi1> to vector<16x128xi1>
      %71 = vector.broadcast %cst_34 : f32 to vector<16x128xf32>
      %72 = arith.select %70, %68, %71 : vector<16x128xi1>, vector<16x128xf32>
      %73 = arith.truncf %72 : vector<16x128xf32> to vector<16x128xbf16>
      %cst_35 = arith.constant dense<0.000000e+00> : vector<16x128xf32>
      %74 = tpu.matmul %65, %73, %cst_35 {dimension_numbers = #tpu.dot_dimension_numbers<[1], [0], [0], [1], [0, 0, 1, 1], [], []>} : vector<16x16xbf16>, vector<16x128xbf16>, vector<16x128xf32> -> vector<16x128xf32>
      %75 = arith.addf %63, %74 : vector<16x128xf32>
      %c2 = arith.constant 2 : index
      %c0_36 = arith.constant 0 : index
      %c0_37 = arith.constant 0 : index
      %76 = vector.load %arg3[%c2, %c0_36, %c0_37] : memref<3x16x16xbf16, #tpu.memory_space<vmem>>, vector<1x16x16xbf16>
      %77 = vector.shape_cast %76 : vector<1x16x16xbf16> to vector<16x16xbf16>
      %c7_i32 = arith.constant 7 : i32
      %78 = vector.broadcast %c7_i32 : i32 to vector<1x128xi32>
      %79 = arith.cmpi ne, %60, %78 : vector<1x128xi32>
      %c127_i32 = arith.constant 127 : i32
      %80 = tpu.dynamic_rotate %42 by %c127_i32 dim 1 : vector<16x128xf32>, i32 -> vector<16x128xf32>
      %cst_38 = arith.constant 0.000000e+00 : f32
      %81 = vector.shape_cast %79 : vector<1x128xi1> to vector<1x128xi1>
      %82 = vector.broadcast %81 : vector<1x128xi1> to vector<16x128xi1>
      %83 = vector.broadcast %cst_38 : f32 to vector<16x128xf32>
      %84 = arith.select %82, %80, %83 : vector<16x128xi1>, vector<16x128xf32>
      %85 = arith.truncf %84 : vector<16x128xf32> to vector<16x128xbf16>
      %cst_39 = arith.constant dense<0.000000e+00> : vector<16x128xf32>
      %86 = tpu.matmul %77, %85, %cst_39 {dimension_numbers = #tpu.dot_dimension_numbers<[1], [0], [0], [1], [0, 0, 1, 1], [], []>} : vector<16x16xbf16>, vector<16x128xbf16>, vector<16x128xf32> -> vector<16x128xf32>
      %87 = arith.addf %75, %86 : vector<16x128xf32>
      %c0_40 = arith.constant 0 : index
      %c0_41 = arith.constant 0 : index
      %88 = vector.load %arg4[%c0_40, %c0_41] : memref<16x1xf32, #tpu.memory_space<vmem>>, vector<16x1xf32>
      %89 = vector.broadcast %88 : vector<16x1xf32> to vector<16x128xf32>
      %90 = arith.addf %87, %89 : vector<16x128xf32>
      %cst_42 = arith.constant 0.000000e+00 : f32
      %91 = vector.broadcast %cst_42 : f32 to vector<16x128xf32>
      %92 = arith.maximumf %90, %91 : vector<16x128xf32>
      %93 = arith.truncf %92 : vector<16x128xf32> to vector<16x128xbf16>
      %c0_43 = arith.constant 0 : index
      %c0_44 = arith.constant 0 : index
      %94 = vector.load %arg11[%c0_43, %c0_44] : memref<16x128xbf16, #tpu.memory_space<vmem>>, vector<16x128xbf16>
      tpu.vector_store %arg11[%c0_43, %c0_44], %93 {strides = array<i32>} : memref<16x128xbf16, #tpu.memory_space<vmem>>, vector<16x128xbf16>,
      %c1_45 = arith.constant 1 : index
      %c0_46 = arith.constant 0 : index
      %c0_47 = arith.constant 0 : index
      %95 = vector.load %arg5[%c1_45, %c0_46, %c0_47] : memref<3x16x16xbf16, #tpu.memory_space<vmem>>, vector<1x16x16xbf16>
      %96 = vector.shape_cast %95 : vector<1x16x16xbf16> to vector<16x16xbf16>
      %cst_48 = arith.constant dense<0.000000e+00> : vector<16x128xf32>
      %97 = tpu.matmul %96, %43, %cst_48 {dimension_numbers = #tpu.dot_dimension_numbers<[1], [0], [0], [1], [0, 0, 1, 1], [], []>} : vector<16x16xbf16>, vector<16x128xbf16>, vector<16x128xf32> -> vector<16x128xf32>
      %c0_49 = arith.constant 0 : index
      %c0_50 = arith.constant 0 : index
      %c0_51 = arith.constant 0 : index
      %98 = vector.load %arg5[%c0_49, %c0_50, %c0_51] : memref<3x16x16xbf16, #tpu.memory_space<vmem>>, vector<1x16x16xbf16>
      %99 = vector.shape_cast %98 : vector<1x16x16xbf16> to vector<16x16xbf16>
      %c8_i32_52 = arith.constant 8 : i32
      %100 = vector.broadcast %c8_i32_52 : i32 to vector<1x128xi32>
      %101 = arith.cmpi sge, %44, %100 : vector<1x128xi32>
      %c8_i32_53 = arith.constant 8 : i32
      %102 = tpu.dynamic_rotate %42 by %c8_i32_53 dim 1 : vector<16x128xf32>, i32 -> vector<16x128xf32>
      %cst_54 = arith.constant 0.000000e+00 : f32
      %103 = vector.shape_cast %101 : vector<1x128xi1> to vector<1x128xi1>
      %104 = vector.broadcast %103 : vector<1x128xi1> to vector<16x128xi1>
      %105 = vector.broadcast %cst_54 : f32 to vector<16x128xf32>
      %106 = arith.select %104, %102, %105 : vector<16x128xi1>, vector<16x128xf32>
      %107 = arith.truncf %106 : vector<16x128xf32> to vector<16x128xbf16>
      %cst_55 = arith.constant dense<0.000000e+00> : vector<16x128xf32>
      %108 = tpu.matmul %99, %107, %cst_55 {dimension_numbers = #tpu.dot_dimension_numbers<[1], [0], [0], [1], [0, 0, 1, 1], [], []>} : vector<16x16xbf16>, vector<16x128xbf16>, vector<16x128xf32> -> vector<16x128xf32>
      %109 = arith.addf %97, %108 : vector<16x128xf32>
      %c2_56 = arith.constant 2 : index
      %c0_57 = arith.constant 0 : index
      %c0_58 = arith.constant 0 : index
      %110 = vector.load %arg5[%c2_56, %c0_57, %c0_58] : memref<3x16x16xbf16, #tpu.memory_space<vmem>>, vector<1x16x16xbf16>
      %111 = vector.shape_cast %110 : vector<1x16x16xbf16> to vector<16x16xbf16>
      %c56_i32 = arith.constant 56 : i32
      %112 = vector.broadcast %c56_i32 : i32 to vector<1x128xi32>
      %113 = arith.cmpi slt, %44, %112 : vector<1x128xi32>
      %c120_i32 = arith.constant 120 : i32
      %114 = tpu.dynamic_rotate %42 by %c120_i32 dim 1 : vector<16x128xf32>, i32 -> vector<16x128xf32>
      %cst_59 = arith.constant 0.000000e+00 : f32
      %115 = vector.shape_cast %113 : vector<1x128xi1> to vector<1x128xi1>
      %116 = vector.broadcast %115 : vector<1x128xi1> to vector<16x128xi1>
      %117 = vector.broadcast %cst_59 : f32 to vector<16x128xf32>
      %118 = arith.select %116, %114, %117 : vector<16x128xi1>, vector<16x128xf32>
      %119 = arith.truncf %118 : vector<16x128xf32> to vector<16x128xbf16>
      %cst_60 = arith.constant dense<0.000000e+00> : vector<16x128xf32>
      %120 = tpu.matmul %111, %119, %cst_60 {dimension_numbers = #tpu.dot_dimension_numbers<[1], [0], [0], [1], [0, 0, 1, 1], [], []>} : vector<16x16xbf16>, vector<16x128xbf16>, vector<16x128xf32> -> vector<16x128xf32>
      %121 = arith.addf %109, %120 : vector<16x128xf32>
      %c0_61 = arith.constant 0 : index
      %c0_62 = arith.constant 0 : index
      %122 = vector.load %arg6[%c0_61, %c0_62] : memref<16x1xf32, #tpu.memory_space<vmem>>, vector<16x1xf32>
      %123 = vector.broadcast %122 : vector<16x1xf32> to vector<16x128xf32>
      %124 = arith.addf %121, %123 : vector<16x128xf32>
      %cst_63 = arith.constant 0.000000e+00 : f32
      %125 = vector.broadcast %cst_63 : f32 to vector<16x128xf32>
      %126 = arith.maximumf %124, %125 : vector<16x128xf32>
      %127 = arith.truncf %126 : vector<16x128xf32> to vector<16x128xbf16>
      %c0_64 = arith.constant 0 : index
      %c0_65 = arith.constant 0 : index
      %128 = vector.load %arg12[%c0_64, %c0_65] : memref<16x128xbf16, #tpu.memory_space<vmem>>, vector<16x128xbf16>
      tpu.vector_store %arg12[%c0_64, %c0_65], %127 {strides = array<i32>} : memref<16x128xbf16, #tpu.memory_space<vmem>>, vector<16x128xbf16>,
      %c0_66 = arith.constant 0 : index
      %c0_67 = arith.constant 0 : index
      %129 = vector.load %arg7[%c0_66, %c0_67] : memref<32x16xbf16, #tpu.memory_space<vmem>>, vector<32x16xbf16>
      %cst_68 = arith.constant dense<0.000000e+00> : vector<32x128xf32>
      %130 = tpu.matmul %129, %43, %cst_68 {dimension_numbers = #tpu.dot_dimension_numbers<[1], [0], [0], [1], [0, 0, 1, 1], [], []>} : vector<32x16xbf16>, vector<16x128xbf16>, vector<32x128xf32> -> vector<32x128xf32>
      %c0_69 = arith.constant 0 : index
      %c0_70 = arith.constant 0 : index
      %131 = vector.load %arg8[%c0_69, %c0_70] : memref<32x1xf32, #tpu.memory_space<vmem>>, vector<32x1xf32>
      %132 = vector.broadcast %131 : vector<32x1xf32> to vector<32x128xf32>
      %133 = arith.addf %130, %132 : vector<32x128xf32>
      %134 = arith.truncf %133 : vector<32x128xf32> to vector<32x128xbf16>
      %c0_71 = arith.constant 0 : index
      %c0_72 = arith.constant 0 : index
      %135 = vector.load %arg13[%c0_71, %c0_72] : memref<32x128xbf16, #tpu.memory_space<vmem>>, vector<32x128xbf16>
      tpu.vector_store %arg13[%c0_71, %c0_72], %134 {strides = array<i32>} : memref<32x128xbf16, #tpu.memory_space<vmem>>, vector<32x128xbf16>,
      %136 = arith.extf %43 : vector<16x128xbf16> to vector<16x128xf32>
      %137 = arith.subf %42, %136 : vector<16x128xf32>
      %138 = arith.truncf %137 : vector<16x128xf32> to vector<16x128xbf16>
      %cst_73 = arith.constant dense<0.000000e+00> : vector<16x16xf32>
      %139 = tpu.matmul %43, %43, %cst_73 {dimension_numbers = #tpu.dot_dimension_numbers<[1], [1], [0], [0], [0, 0, 1, 0], [], []>} : vector<16x128xbf16>, vector<16x128xbf16>, vector<16x16xf32> -> vector<16x16xf32>
      %cst_74 = arith.constant dense<0.000000e+00> : vector<16x16xf32>
      %140 = tpu.matmul %43, %138, %cst_74 {dimension_numbers = #tpu.dot_dimension_numbers<[1], [1], [0], [0], [0, 0, 1, 0], [], []>} : vector<16x128xbf16>, vector<16x128xbf16>, vector<16x16xf32> -> vector<16x16xf32>
      %141 = arith.addf %139, %140 : vector<16x16xf32>
      %cst_75 = arith.constant dense<0.000000e+00> : vector<16x16xf32>
      %142 = tpu.matmul %138, %43, %cst_75 {dimension_numbers = #tpu.dot_dimension_numbers<[1], [1], [0], [0], [0, 0, 1, 0], [], []>} : vector<16x128xbf16>, vector<16x128xbf16>, vector<16x16xf32> -> vector<16x16xf32>
      %143 = arith.addf %141, %142 : vector<16x16xf32>
      %cst_76 = arith.constant dense<0x7F800000> : vector<16xf32>
      %144 = vector.multi_reduction <minimumf>, %143, %cst_76 [1] : vector<16x16xf32> to vector<16xf32>
      %145 = vector.shape_cast %144 : vector<16xf32> to vector<16x1xf32>
      %146 = vector.broadcast %145 : vector<16x1xf32> to vector<16x16xf32>
      %147 = arith.subf %146, %143 : vector<16x16xf32>
      %148 = math.exp %147 : vector<16x16xf32>
      %cst_77 = arith.constant dense<0.000000e+00> : vector<16xf32>
      %149 = vector.multi_reduction <add>, %148, %cst_77 [1] : vector<16x16xf32> to vector<16xf32>
      %150 = vector.shape_cast %149 : vector<16xf32> to vector<16x1xf32>
      %151 = tpu.reciprocal %150 {approx = true} : vector<16x1xf32> -> vector<16x1xf32>
      %c1_78 = arith.constant 1 : index
      %152 = memref.load %arg9[%c1_78] : memref<2xf32, #tpu.memory_space<smem>>
      %153 = vector.broadcast %152 : f32 to vector<16x1xf32>
      %154 = arith.mulf %153, %151 : vector<16x1xf32>
      %155 = vector.broadcast %154 : vector<16x1xf32> to vector<16x16xf32>
      %156 = arith.mulf %155, %148 : vector<16x16xf32>
      %157 = arith.truncf %156 : vector<16x16xf32> to vector<16x16xbf16>
      %c0_79 = arith.constant 0 : index
      %c0_80 = arith.constant 0 : index
      %158 = vector.load %arg14[%c0_79, %c0_80] : memref<16x16xbf16, #tpu.memory_space<vmem>>, vector<16x16xbf16>
      tpu.vector_store %arg14[%c0_79, %c0_80], %157 {strides = array<i32>} : memref<16x16xbf16, #tpu.memory_space<vmem>>, vector<16x16xbf16>,
      %159 = tpu.iota {dimensions = array<i32: 0>} : vector<128x1xi32>
      %c64_i32 = arith.constant 64 : i32
      %160 = vector.broadcast %c64_i32 : i32 to vector<128x1xi32>
      %161 = arith.cmpi slt, %159, %160 : vector<128x1xi32>
      %cst_81 = arith.constant 0.000000e+00 : f32
      %cst_82 = arith.constant -1.000000e+30 : f32
      %162 = vector.broadcast %cst_81 : f32 to vector<128x1xf32>
      %163 = vector.broadcast %cst_82 : f32 to vector<128x1xf32>
      %164 = arith.select %161, %162, %163 : vector<128x1xi1>, vector<128x1xf32>
      %c0_83 = arith.constant 0 : index
      %c0_84 = arith.constant 0 : index
      %165 = vector.load %arg15[%c0_83, %c0_84] : memref<128x1xf32, #tpu.memory_space<vmem>>, vector<128x1xf32>
      tpu.vector_store %arg15[%c0_83, %c0_84], %164 {strides = array<i32>} : memref<128x1xf32, #tpu.memory_space<vmem>>, vector<128x1xf32>,
    } else {
    }
    %c128_i32 = arith.constant 128 : i32
    %3 = arith.muli %arg1, %c128_i32 : i32
    %4 = tpu.assume_multiple %3, 128 : i32
    %c0 = arith.constant 0 : index
    %c0_1 = arith.constant 0 : index
    %5 = arith.index_cast %4 : i32 to index
    %6 = vector.load %arg2[%c0, %c0_1, %5] : memref<1x16x128xf32, #tpu.memory_space<vmem>>, vector<1x16x128xf32>
    %7 = vector.shape_cast %6 : vector<1x16x128xf32> to vector<16x128xf32>
    %c0_2 = arith.constant 0 : index
    %8 = arith.index_cast %4 : i32 to index
    %9 = vector.load %arg11[%c0_2, %8] : memref<16x128xbf16, #tpu.memory_space<vmem>>, vector<16x128xbf16>
    %c0_3 = arith.constant 0 : index
    %c0_4 = arith.constant 0 : index
    %10 = vector.load %arg12[%c0_3, %c0_4] : memref<16x128xbf16, #tpu.memory_space<vmem>>, vector<16x128xbf16>
    %cst = arith.constant dense<0.000000e+00> : vector<128x128xf32>
    %11 = tpu.matmul %10, %9, %cst {dimension_numbers = #tpu.dot_dimension_numbers<[0], [0], [1], [1], [0, 1, 1, 1], [], []>} : vector<16x128xbf16>, vector<16x128xbf16>, vector<128x128xf32> -> vector<128x128xf32>
    %c0_5 = arith.constant 0 : index
    %c0_6 = arith.constant 0 : index
    %12 = vector.load %arg15[%c0_5, %c0_6] : memref<128x1xf32, #tpu.memory_space<vmem>>, vector<128x1xf32>
    %13 = vector.broadcast %12 : vector<128x1xf32> to vector<128x128xf32>
    %14 = arith.addf %11, %13 : vector<128x128xf32>
    %cst_7 = arith.constant dense<0xFF800000> : vector<128xf32>
    %15 = vector.multi_reduction <maximumf>, %14, %cst_7 [0] : vector<128x128xf32> to vector<128xf32>
    %16 = vector.shape_cast %15 : vector<128xf32> to vector<1x128xf32>
    %17 = vector.broadcast %16 : vector<1x128xf32> to vector<128x128xf32>
    %18 = arith.subf %14, %17 : vector<128x128xf32>
    %19 = math.exp %18 : vector<128x128xf32>
    %20 = arith.truncf %19 : vector<128x128xf32> to vector<128x128xbf16>
    %c0_8 = arith.constant 0 : index
    %c0_9 = arith.constant 0 : index
    %21 = vector.load %arg13[%c0_8, %c0_9] : memref<32x128xbf16, #tpu.memory_space<vmem>>, vector<32x128xbf16>
    %cst_10 = arith.constant dense<0.000000e+00> : vector<32x128xf32>
    %22 = tpu.matmul %21, %20, %cst_10 {dimension_numbers = #tpu.dot_dimension_numbers<[1], [0], [0], [1], [0, 0, 1, 1], [], []>} : vector<32x128xbf16>, vector<128x128xbf16>, vector<32x128xf32> -> vector<32x128xf32>
    %23 = vector.extract_strided_slice %22 {offsets = [16, 0], sizes = [1, 128], strides = [1, 1]} : vector<32x128xf32> to vector<1x128xf32>
    %24 = tpu.reciprocal %23 {approx = true} : vector<1x128xf32> -> vector<1x128xf32>
    %c0_11 = arith.constant 0 : index
    %c0_12 = arith.constant 0 : index
    %25 = vector.load %arg14[%c0_11, %c0_12] : memref<16x16xbf16, #tpu.memory_space<vmem>>, vector<16x16xbf16>
    %26 = arith.truncf %7 : vector<16x128xf32> to vector<16x128xbf16>
    %cst_13 = arith.constant dense<0.000000e+00> : vector<16x128xf32>
    %27 = tpu.matmul %25, %26, %cst_13 {dimension_numbers = #tpu.dot_dimension_numbers<[1], [0], [0], [1], [0, 0, 1, 1], [], []>} : vector<16x16xbf16>, vector<16x128xbf16>, vector<16x128xf32> -> vector<16x128xf32>
    %c0_14 = arith.constant 0 : index
    %28 = memref.load %arg9[%c0_14] : memref<2xf32, #tpu.memory_space<smem>>
    %29 = vector.broadcast %28 : f32 to vector<1x128xf32>
    %30 = arith.mulf %29, %24 : vector<1x128xf32>
    %31 = vector.extract_strided_slice %22 {offsets = [0, 0], sizes = [16, 128], strides = [1, 1]} : vector<32x128xf32> to vector<16x128xf32>
    %32 = vector.broadcast %30 : vector<1x128xf32> to vector<16x128xf32>
    %33 = arith.mulf %32, %31 : vector<16x128xf32>
    %34 = arith.addf %33, %27 : vector<16x128xf32>
    %cst_15 = arith.constant 2.000000e+00 : f32
    %35 = vector.broadcast %cst_15 : f32 to vector<16x128xf32>
    %36 = arith.mulf %35, %7 : vector<16x128xf32>
    %37 = arith.addf %34, %36 : vector<16x128xf32>
    %c0_16 = arith.constant 0 : index
    %c0_17 = arith.constant 0 : index
    %c0_18 = arith.constant 0 : index
    %38 = vector.load %arg10[%c0_16, %c0_17, %c0_18] : memref<1x16x128xf32, #tpu.memory_space<vmem>>, vector<1x16x128xf32>
    %39 = vector.shape_cast %38 : vector<1x16x128xf32> to vector<16x128xf32>
    %40 = vector.shape_cast %37 : vector<16x128xf32> to vector<1x16x128xf32>
    tpu.vector_store %arg10[%c0_16, %c0_17, %c0_18], %40 {strides = array<i32>} : memref<1x16x128xf32, #tpu.memory_space<vmem>>, vector<1x16x128xf32>,
    return
  }
  func.func @transform_0(%arg0: i32, %arg1: i32) -> (i32, i32, i32) {
    %c0_i32 = arith.constant 0 : i32
    %c0_i32_0 = arith.constant 0 : i32
    %c0_i32_1 = arith.constant 0 : i32
    return %arg0, %c0_i32, %c0_i32_0 : i32, i32, i32
  }
  func.func @transform_1(%arg0: i32, %arg1: i32) -> (i32, i32, i32) {
    %c0_i32 = arith.constant 0 : i32
    %c0_i32_0 = arith.constant 0 : i32
    %c0_i32_1 = arith.constant 0 : i32
    %c0_i32_2 = arith.constant 0 : i32
    return %c0_i32, %c0_i32_0, %c0_i32_1 : i32, i32, i32
  }
  func.func @transform_2(%arg0: i32, %arg1: i32) -> (i32, i32) {
    %c0_i32 = arith.constant 0 : i32
    %c0_i32_0 = arith.constant 0 : i32
    %c0_i32_1 = arith.constant 0 : i32
    return %c0_i32, %c0_i32_0 : i32, i32
  }
  func.func @transform_3(%arg0: i32, %arg1: i32) -> (i32, i32, i32) {
    %c0_i32 = arith.constant 0 : i32
    %c0_i32_0 = arith.constant 0 : i32
    %c0_i32_1 = arith.constant 0 : i32
    %c0_i32_2 = arith.constant 0 : i32
    return %c0_i32, %c0_i32_0, %c0_i32_1 : i32, i32, i32
  }
  func.func @transform_4(%arg0: i32, %arg1: i32) -> (i32, i32) {
    %c0_i32 = arith.constant 0 : i32
    %c0_i32_0 = arith.constant 0 : i32
    %c0_i32_1 = arith.constant 0 : i32
    return %c0_i32, %c0_i32_0 : i32, i32
  }
  func.func @transform_5(%arg0: i32, %arg1: i32) -> (i32, i32) {
    %c0_i32 = arith.constant 0 : i32
    %c0_i32_0 = arith.constant 0 : i32
    %c0_i32_1 = arith.constant 0 : i32
    return %c0_i32, %c0_i32_0 : i32, i32
  }
  func.func @transform_6(%arg0: i32, %arg1: i32) -> (i32, i32) {
    %c0_i32 = arith.constant 0 : i32
    %c0_i32_0 = arith.constant 0 : i32
    %c0_i32_1 = arith.constant 0 : i32
    return %c0_i32, %c0_i32_0 : i32, i32
  }
  func.func @transform_7(%arg0: i32, %arg1: i32) -> i32 {
    %c0_i32 = arith.constant 0 : i32
    %c0_i32_0 = arith.constant 0 : i32
    return %c0_i32 : i32
  }
  func.func @transform_8(%arg0: i32, %arg1: i32) -> (i32, i32, i32) {
    %c0_i32 = arith.constant 0 : i32
    %c0_i32_0 = arith.constant 0 : i32
    return %arg0, %c0_i32, %arg1 : i32, i32, i32
  }
}

</mosaic_0001>

<llo_original>
// kernel: tpu_custom_call.1
$region0: #{tpu_custom_call.1}
  #allocation0 [shape = 'u32[]', space=smem, size = 0x4, offset = 0x4, fixed_abs, tag = 'smem constant byte address 0x4 - core index']
  #allocation1 [shape = 'u32[144,128]{1,0:T(1,128)}', space=vmem, size = 0x12000, scoped, tag = 'internal scratch']
  #allocation2 [shape = 'bf16[16,128]{1,0:T(8,128)(2,1)}', space=vmem, size = 0x1000, scoped, tag = 'scratch operand']
  #allocation3 [shape = 'bf16[16,128]{1,0:T(8,128)(2,1)}', space=vmem, size = 0x1000, scoped, tag = 'scratch operand']
  #allocation4 [shape = 'bf16[32,128]{1,0:T(8,128)(2,1)}', space=vmem, size = 0x2000, scoped, tag = 'scratch operand']
  #allocation5 [shape = 'bf16[16,16]{1,0:T(8,128)(2,1)}', space=vmem, size = 0x1000, scoped, tag = 'scratch operand']
  #allocation6 [shape = 'f32[128,1]{1,0:T(8,128)}', space=vmem, size = 0x10000, scoped, tag = 'scratch operand']
  %s0 = inlined_call_operand.vmem [shape: f32[2,16,128], index: 0, kind: input, shape index: {}]
  %s1 = inlined_call_operand.vmem [shape: bf16[3,16,16], index: 1, kind: input, shape index: {}]
  %s2 = inlined_call_operand.vmem [shape: f32[16,1], index: 2, kind: input, shape index: {}]
  %s3 = inlined_call_operand.vmem [shape: bf16[3,16,16], index: 3, kind: input, shape index: {}]
  %s4 = inlined_call_operand.vmem [shape: f32[16,1], index: 4, kind: input, shape index: {}]
  %s5 = inlined_call_operand.vmem [shape: bf16[32,16], index: 5, kind: input, shape index: {}]
  %s6 = inlined_call_operand.vmem [shape: f32[32,1], index: 6, kind: input, shape index: {}]
  %s7 = inlined_call_operand.vmem [shape: f32[2], index: 7, kind: input, shape index: {}]
  %s8 = inlined_call_operand.hbm [shape: f32[2,16,128], index: 8, kind: output, shape index: {}]
  %s9 = sld [smem:[#allocation0]]
  $region73: #{tpu_custom_call.1} parent=0
    _
  %s11 = ssub.s32 1, %s9
  %s12 = scalar_select 0, %s11, %s9
  $region1: #{tpu_custom_call.1} parent=0
    #allocation7 [shape = 'u8[512]{0}', space=smem, size = 0x200, scoped, tag = 'input window, operand 7, single buffered']
    #allocation8 [shape = 's32[2]{0}', space=sflag, size = 0x8, scoped, tag = 'scoped memory for tpu_custom_call.1']
    #allocation9 [shape = 's32[2]{0}', space=sflag, size = 0x8, scoped, tag = 'scoped memory for tpu_custom_call.1']
    #allocation10 [shape = 'u8[16384]{0}', space=vmem, size = 0x4000, scoped, tag = 'output window, operand 0']
    %13 = vsyncpa [#allocation9], 0
    %14 = vsyncpa [#allocation8], 0
    %s15 = scalar_lea.sflag [#allocation8], 1
    %16 = vsyncpa %s15, 0
    loop: start=0, step=1, limit=4
    $region2: #{tpu_custom_call.1} parent=1 // loop_pre_header
      _
    $region3: #{tpu_custom_call.1} parent=1 // loop_header
      %s18 = sphi 0, %s22
      %p19 = scmp.ge.s32.totalorder %s18, 4
      %s25 = sphi 0, %s37
      %s26 = sphi 0, %s33
      %s27 = sphi 0, %s25
      %s28 = sphi 0, %s26
      %s29 = sphi 0, %s27
      %s30 = sphi 0, %s28
      %s40 = sphi 0, %s42
      %s43 = sphi 0, %s40
      %s44 = sphi 0, %s43
      %s60 = sphi 0, %s44
      %s64 = sphi 0, %s64
      %s66 = sphi 0, %s64
      %s67 = sphi 0, %s66
      %s81 = sphi 0, %s67
      %s85 = sphi 0, %s85
      %s87 = sphi 0, %s85
      %s88 = sphi 0, %s87
      %s102 = sphi 0, %s88
      %s106 = sphi 0, %s106
      %s108 = sphi 0, %s106
      %s109 = sphi 0, %s108
      %s123 = sphi 0, %s109
      %s127 = sphi 0, %s127
      %s129 = sphi 0, %s127
      %s130 = sphi 0, %s129
      %s144 = sphi 0, %s130
      %s148 = sphi 0, %s148
      %s150 = sphi 0, %s148
      %s151 = sphi 0, %s150
      %s165 = sphi 0, %s151
      %s169 = sphi 0, %s169
      %s171 = sphi 0, %s169
      %s172 = sphi 0, %s171
      %s186 = sphi 0, %s172
      %s190 = sphi 0, %s190
      %s192 = sphi 0, %s190
      %s193 = sphi 0, %s192
      %s207 = sphi 0, %s193
      %s215 = sphi 0, %s217
      %s218 = sphi 0, %s215
      %s219 = sphi 0, %s218
      %s235 = sphi 0, %s219
    $region4: #{tpu_custom_call.1} parent=1 // loop_header_branch
      %21 = sbr.rel (%p19) target = $region8
    $region5: #{tpu_custom_call.1} parent=1 // loop_body
      %s23 = ssub.s32 %s18, 1
      %s24 = ssub.s32 %s18, 2
      %s31 = sadd.s32 1, %s26
      %p32 = scmp.ge.s32.totalorder %s31, 1
      %s33 = scalar_select %p32, 0, %s31
      %s34 = sadd.s32 1, %s25
      %s35 = scalar_select %p32, %s34, %s25
      %p36 = scmp.ge.s32.totalorder %s35, 2
      %s37 = scalar_select %p36, 0, %s35
      %s38 = ssub.s32 %s25, %s37
      %p39 = scmp.eq.s32.totalorder %s38, 0
      %s41 = sadd.s32 %s40, 1
      %s42 = scalar_select %p39, %s40, %s41
      %p45 = pneg %p39
      %p46 = scmp.eq.s32.totalorder %s18, 1
      %p47 = por %p45, %p46
      %p48 = scmp.ne.s32.totalorder %s40, %s43
      %p49 = scmp.eq.s32.totalorder %s18, 0
      %p50 = por %p48, %p49
      %p51 = scmp.ne.s32.totalorder %s40, %s43
      %p52 = scmp.eq.s32.totalorder %s23, 1
      %p53 = por %p51, %p52
      %p54 = scmp.ne.s32.totalorder %s43, %s44
      %p55 = scmp.eq.s32.totalorder %s23, 0
      %p56 = por %p54, %p55
      %p57 = scmp.ne.s32.totalorder %s43, %s44
      %p58 = scmp.eq.s32.totalorder %s24, 1
      %p59 = por %p57, %p58
      %p61 = scmp.ne.s32.totalorder %s44, %s60
      %p62 = scmp.eq.s32.totalorder %s24, 0
      %p63 = por %p61, %p62
      %s65 = sadd.s32 %s64, 1
      %p68 = scmp.eq.s32.totalorder %s18, 1
      %p69 = scmp.ne.s32.totalorder %s64, %s66
      %p70 = scmp.eq.s32.totalorder %s18, 0
      %p71 = por %p69, %p70
      %p72 = scmp.ne.s32.totalorder %s64, %s66
      %p73 = scmp.eq.s32.totalorder %s23, 1
      %p74 = por %p72, %p73
      %p75 = scmp.ne.s32.totalorder %s66, %s67
      %p76 = scmp.eq.s32.totalorder %s23, 0
      %p77 = por %p75, %p76
      %p78 = scmp.ne.s32.totalorder %s66, %s67
      %p79 = scmp.eq.s32.totalorder %s24, 1
      %p80 = por %p78, %p79
      %p82 = scmp.ne.s32.totalorder %s67, %s81
      %p83 = scmp.eq.s32.totalorder %s24, 0
      %p84 = por %p82, %p83
      %s86 = sadd.s32 %s85, 1
      %p89 = scmp.eq.s32.totalorder %s18, 1
      %p90 = scmp.ne.s32.totalorder %s85, %s87
      %p91 = scmp.eq.s32.totalorder %s18, 0
      %p92 = por %p90, %p91
      %p93 = scmp.ne.s32.totalorder %s85, %s87
      %p94 = scmp.eq.s32.totalorder %s23, 1
      %p95 = por %p93, %p94
      %p96 = scmp.ne.s32.totalorder %s87, %s88
      %p97 = scmp.eq.s32.totalorder %s23, 0
      %p98 = por %p96, %p97
      %p99 = scmp.ne.s32.totalorder %s87, %s88
      %p100 = scmp.eq.s32.totalorder %s24, 1
      %p101 = por %p99, %p100
      %p103 = scmp.ne.s32.totalorder %s88, %s102
      %p104 = scmp.eq.s32.totalorder %s24, 0
      %p105 = por %p103, %p104
      %s107 = sadd.s32 %s106, 1
      %p110 = scmp.eq.s32.totalorder %s18, 1
      %p111 = scmp.ne.s32.totalorder %s106, %s108
      %p112 = scmp.eq.s32.totalorder %s18, 0
      %p113 = por %p111, %p112
      %p114 = scmp.ne.s32.totalorder %s106, %s108
      %p115 = scmp.eq.s32.totalorder %s23, 1
      %p116 = por %p114, %p115
      %p117 = scmp.ne.s32.totalorder %s108, %s109
      %p118 = scmp.eq.s32.totalorder %s23, 0
      %p119 = por %p117, %p118
      %p120 = scmp.ne.s32.totalorder %s108, %s109
      %p121 = scmp.eq.s32.totalorder %s24, 1
      %p122 = por %p120, %p121
      %p124 = scmp.ne.s32.totalorder %s109, %s123
      %p125 = scmp.eq.s32.totalorder %s24, 0
      %p126 = por %p124, %p125
      %s128 = sadd.s32 %s127, 1
      %p131 = scmp.eq.s32.totalorder %s18, 1
      %p132 = scmp.ne.s32.totalorder %s127, %s129
      %p133 = scmp.eq.s32.totalorder %s18, 0
      %p134 = por %p132, %p133
      %p135 = scmp.ne.s32.totalorder %s127, %s129
      %p136 = scmp.eq.s32.totalorder %s23, 1
      %p137 = por %p135, %p136
      %p138 = scmp.ne.s32.totalorder %s129, %s130
      %p139 = scmp.eq.s32.totalorder %s23, 0
      %p140 = por %p138, %p139
      %p141 = scmp.ne.s32.totalorder %s129, %s130
      %p142 = scmp.eq.s32.totalorder %s24, 1
      %p143 = por %p141, %p142
      %p145 = scmp.ne.s32.totalorder %s130, %s144
      %p146 = scmp.eq.s32.totalorder %s24, 0
      %p147 = por %p145, %p146
      %s149 = sadd.s32 %s148, 1
      %p152 = scmp.eq.s32.totalorder %s18, 1
      %p153 = scmp.ne.s32.totalorder %s148, %s150
      %p154 = scmp.eq.s32.totalorder %s18, 0
      %p155 = por %p153, %p154
      %p156 = scmp.ne.s32.totalorder %s148, %s150
      %p157 = scmp.eq.s32.totalorder %s23, 1
      %p158 = por %p156, %p157
      %p159 = scmp.ne.s32.totalorder %s150, %s151
      %p160 = scmp.eq.s32.totalorder %s23, 0
      %p161 = por %p159, %p160
      %p162 = scmp.ne.s32.totalorder %s150, %s151
      %p163 = scmp.eq.s32.totalorder %s24, 1
      %p164 = por %p162, %p163
      %p166 = scmp.ne.s32.totalorder %s151, %s165
      %p167 = scmp.eq.s32.totalorder %s24, 0
      %p168 = por %p166, %p167
      %s170 = sadd.s32 %s169, 1
      %p173 = scmp.eq.s32.totalorder %s18, 1
      %p174 = scmp.ne.s32.totalorder %s169, %s171
      %p175 = scmp.eq.s32.totalorder %s18, 0
      %p176 = por %p174, %p175
      %p177 = scmp.ne.s32.totalorder %s169, %s171
      %p178 = scmp.eq.s32.totalorder %s23, 1
      %p179 = por %p177, %p178
      %p180 = scmp.ne.s32.totalorder %s171, %s172
      %p181 = scmp.eq.s32.totalorder %s23, 0
      %p182 = por %p180, %p181
      %p183 = scmp.ne.s32.totalorder %s171, %s172
      %p184 = scmp.eq.s32.totalorder %s24, 1
      %p185 = por %p183, %p184
      %p187 = scmp.ne.s32.totalorder %s172, %s186
      %p188 = scmp.eq.s32.totalorder %s24, 0
      %p189 = por %p187, %p188
      %s191 = sadd.s32 %s190, 1
      %p194 = scmp.eq.s32.totalorder %s18, 1
      %p195 = scmp.ne.s32.totalorder %s190, %s192
      %p196 = scmp.eq.s32.totalorder %s18, 0
      %p197 = por %p195, %p196
      %p198 = scmp.ne.s32.totalorder %s190, %s192
      %p199 = scmp.eq.s32.totalorder %s23, 1
      %p200 = por %p198, %p199
      %p201 = scmp.ne.s32.totalorder %s192, %s193
      %p202 = scmp.eq.s32.totalorder %s23, 0
      %p203 = por %p201, %p202
      %p204 = scmp.ne.s32.totalorder %s192, %s193
      %p205 = scmp.eq.s32.totalorder %s24, 1
      %p206 = por %p204, %p205
      %p208 = scmp.ne.s32.totalorder %s193, %s207
      %p209 = scmp.eq.s32.totalorder %s24, 0
      %p210 = por %p208, %p209
      %s211 = ssub.s32 %s25, %s37
      %s212 = ssub.s32 %s26, %s33
      %s213 = sor.u32 %s211, %s212
      %p214 = scmp.eq.s32.totalorder %s213, 0
      %s216 = sadd.s32 %s215, 1
      %s217 = scalar_select %p214, %s215, %s216
      %p220 = pneg %p214
      %p221 = scmp.eq.s32.totalorder %s18, 1
      %p222 = por %p220, %p221
      %p223 = scmp.ne.s32.totalorder %s215, %s218
      %p224 = scmp.eq.s32.totalorder %s18, 0
      %p225 = por %p223, %p224
      %p226 = scmp.ne.s32.totalorder %s215, %s218
      %p227 = scmp.eq.s32.totalorder %s23, 1
      %p228 = por %p226, %p227
      %p229 = scmp.ne.s32.totalorder %s218, %s219
      %p230 = scmp.eq.s32.totalorder %s23, 0
      %p231 = por %p229, %p230
      %p232 = scmp.ne.s32.totalorder %s218, %s219
      %p233 = scmp.eq.s32.totalorder %s24, 1
      %p234 = por %p232, %p233
      %p236 = scmp.ne.s32.totalorder %s219, %s235
      %p237 = scmp.eq.s32.totalorder %s24, 0
      %p238 = por %p236, %p237
      %p239 = scmp.le.s32.totalorder 1, %s18
      %p240 = scmp.lt.s32.totalorder %s18, 3
      %p241 = pnand %p239, %p240
      %p242 = pneg %p241
      // Predicated region
      $region9: #{tpu_custom_call.1} parent=5 // pred_check
        _
      $region10: #{tpu_custom_call.1} parent=5 // pred_check_branch
        %244 = sbr.rel (%p241) target = $region12
      $region11: #{tpu_custom_call.1} parent=5 // pred_region
        %s245 = ssub.s32 %s18, 1
        // Predicated region
        $region13: #{tpu_custom_call.1} parent=11 // pred_check
          %p246 = pneg %p77
        $region14: #{tpu_custom_call.1} parent=11 // pred_check_branch
          %248 = sbr.rel (%p246) target = $region16
        $region15: #{tpu_custom_call.1} parent=11 // pred_region
          _
        $region16: #{tpu_custom_call.1} parent=11 // pred_fallthru
          _
        // Predicated region
        $region17: #{tpu_custom_call.1} parent=11 // pred_check
          %p249 = pneg %p98
        $region18: #{tpu_custom_call.1} parent=11 // pred_check_branch
          %251 = sbr.rel (%p249) target = $region20
        $region19: #{tpu_custom_call.1} parent=11 // pred_region
          _
        $region20: #{tpu_custom_call.1} parent=11 // pred_fallthru
          _
        // Predicated region
        $region21: #{tpu_custom_call.1} parent=11 // pred_check
          %p252 = pneg %p119
        $region22: #{tpu_custom_call.1} parent=11 // pred_check_branch
          %254 = sbr.rel (%p252) target = $region24
        $region23: #{tpu_custom_call.1} parent=11 // pred_region
          _
        $region24: #{tpu_custom_call.1} parent=11 // pred_fallthru
          _
        // Predicated region
        $region25: #{tpu_custom_call.1} parent=11 // pred_check
          %p255 = pneg %p140
        $region26: #{tpu_custom_call.1} parent=11 // pred_check_branch
          %257 = sbr.rel (%p255) target = $region28
        $region27: #{tpu_custom_call.1} parent=11 // pred_region
          _
        $region28: #{tpu_custom_call.1} parent=11 // pred_fallthru
          _
        // Predicated region
        $region29: #{tpu_custom_call.1} parent=11 // pred_check
          %p258 = pneg %p161
        $region30: #{tpu_custom_call.1} parent=11 // pred_check_branch
          %260 = sbr.rel (%p258) target = $region32
        $region31: #{tpu_custom_call.1} parent=11 // pred_region
          _
        $region32: #{tpu_custom_call.1} parent=11 // pred_fallthru
          _
        // Predicated region
        $region33: #{tpu_custom_call.1} parent=11 // pred_check
          %p261 = pneg %p182
        $region34: #{tpu_custom_call.1} parent=11 // pred_check_branch
          %263 = sbr.rel (%p261) target = $region36
        $region35: #{tpu_custom_call.1} parent=11 // pred_region
          _
        $region36: #{tpu_custom_call.1} parent=11 // pred_fallthru
          _
        // Predicated region
        $region37: #{tpu_custom_call.1} parent=11 // pred_check
          %p264 = pneg %p203
        $region38: #{tpu_custom_call.1} parent=11 // pred_check_branch
          %266 = sbr.rel (%p264) target = $region40
        $region39: #{tpu_custom_call.1} parent=11 // pred_region
          %s268 = ssub.s32 16, 16
          %269 = vsyncadd [#allocation9], %s268
          %s271 = sshll.u32 %s7, 4
          %s272 = int_to_ptr.vmem [resolvable:$true] %s271
          %274 = dma.vmem_to_smem %s272, 16, [#allocation7], [#allocation9]
        $region40: #{tpu_custom_call.1} parent=11 // pred_fallthru
          _
      $region12: #{tpu_custom_call.1} parent=5 // pred_fallthru
        _
      %p275 = scmp.lt.s32.totalorder %s18, 2
      // Predicated region
      $region41: #{tpu_custom_call.1} parent=5 // pred_check
        %p276 = pneg %p275
      $region42: #{tpu_custom_call.1} parent=5 // pred_check_branch
        %278 = sbr.rel (%p276) target = $region44
      $region43: #{tpu_custom_call.1} parent=5 // pred_region
        // Predicated region
        $region45: #{tpu_custom_call.1} parent=43 // pred_check
          %p279 = pneg %p50
        $region46: #{tpu_custom_call.1} parent=43 // pred_check_branch
          %281 = sbr.rel (%p279) target = $region48
        $region47: #{tpu_custom_call.1} parent=43 // pred_region
          %p282 = scmp.lt.s32.totalorder %s25, 1
          %s283 = scalar_select %p282, %s25, 1
          %s284 = smul.addr %s283, 2
          %s285 = smul.addr %s284, 8
          %s286 = scalar_lea.vmem %s0, %s285
        $region48: #{tpu_custom_call.1} parent=43 // pred_fallthru
          _
      $region44: #{tpu_custom_call.1} parent=5 // pred_fallthru
        _
      %p287 = scmp.le.s32.totalorder 1, %s18
      %p288 = scmp.lt.s32.totalorder %s18, 3
      %p289 = pnand %p287, %p288
      %p290 = pneg %p289
      // Predicated region
      $region49: #{tpu_custom_call.1} parent=5 // pred_check
        _
      $region50: #{tpu_custom_call.1} parent=5 // pred_check_branch
        %292 = sbr.rel (%p289) target = $region52
      $region51: #{tpu_custom_call.1} parent=5 // pred_region
        %s293 = ssub.s32 %s18, 1
        // Predicated region
        $region53: #{tpu_custom_call.1} parent=51 // pred_check
          %p294 = pneg %p203
        $region54: #{tpu_custom_call.1} parent=51 // pred_check_branch
          %296 = sbr.rel (%p294) target = $region56
        $region55: #{tpu_custom_call.1} parent=51 // pred_region
          %297 = dma.done [#allocation9], 16
        $region56: #{tpu_custom_call.1} parent=51 // pred_fallthru
          _
        %298 = sfence
        %p299 = scmp.lt.s32.totalorder %s27, 1
        %s300 = scalar_select %p299, %s27, 1
        %s301 = smul.addr %s300, 2
        %s302 = smul.addr %s301, 8
        %s303 = scalar_lea.vmem %s0, %s302
        %p304 = pneg %p56
        %p305 = pneg %p53
        %p306 = pneg %p77
        %p307 = pneg %p74
        %p308 = pneg %p98
        %p309 = pneg %p95
        %p310 = pneg %p119
        %p311 = pneg %p116
        %p312 = pneg %p140
        %p313 = pneg %p137
        %p314 = pneg %p161
        %p315 = pneg %p158
        %p316 = pneg %p182
        %p317 = pneg %p179
        %p318 = pneg %p203
        %p319 = pneg %p200
        %p320 = pneg %p231
        %p321 = pneg %p228
        %s322 = sand.u32 %s218, 1
        %s323 = scalar_lea.sflag [#allocation8], %s322
        %s324 = sand.u32 %s218, 1
        %s325 = smul.addr %s324, 16
        %s326 = scalar_lea.vmem [#allocation10], %s325
        %p327 = scmp.lt.s32.totalorder %s27, 1
        %s328 = scalar_select %p327, %s27, 1
        %s329 = smul.addr %s328, 2
        %s330 = smul.addr %s329, 8
        %s331 = scalar_lea.vmem %s0, %s330
        %p333 = scmp.eq.s32.totalorder %s28, 0
        // Predicated region
        $region57: #{tpu_custom_call.1} parent=51 // pred_check
          %p334 = pneg %p333
        $region58: #{tpu_custom_call.1} parent=51 // pred_check_branch
          %336 = sbr.rel (%p334) target = $region60
        $region59: #{tpu_custom_call.1} parent=51 // pred_region
          %v337 = vld [vmem:[%s331] sm:$0xff]
          %v338 = vld [vmem:[%s331 + $0x8] sm:$0xff]
          %v339 = vpack.c.bf16 %v338, %v337
          %v340 = vlaneseq
          %v341 = vand.u32 %v340, 127
          %vm342 = vcmp.lt.s32.totalorder %v341, 0
          %v343 = vsub.s32 0, %v341
          %v344 = vsel %vm342, %v343, %v341
          %v345 = vshrl.u32 %v344, 3
          %v346 = vand.u32 %v344, 7
          %v347 = vsub.s32 0, %v346
          %v348 = vsel %vm342, %v347, %v346
          %vm349 = vcmp.ne.s32.totalorder %v348, 0
          %vm350 = vcmp.lt.s32.totalorder %v348, 0
          %vm351 = vmand %vm350, %vm349
          %v352 = vadd.s32 %v348, 8
          %v353 = vsel %vm351, %v352, %v348
          %s354 = scalar_lea.vmem %s1, 8
          %v355 = vld [vmem:[%s354] sm:$0xf]
          %v356 = vld [vmem:[%s354 + $0x4] sm:$0xf]
          %v357 = vld [vmem:[%s1] sm:$0xf]
          %v358 = vld [vmem:[%s1 + $0x4] sm:$0xf]
          %vm359 = vcmp.ne.s32.totalorder %v353, 0
          %360 = vrot.lane.b32.xlu0 %v337, 1
          %v361 = vpop.permute.xlu0 %360
          %362 = vrot.lane.b32.xlu0 %v338, 1
          %v363 = vpop.permute.xlu0 %362
          %v364 = vsel %vm359, 1, 0
          %vm365 = vcmp.eq.s32.totalorder %v364, 1
          %v366 = vsel %vm365, %v361, 0.0
          %v367 = vsel %vm365, %v363, 0.0
          %v368 = vpack.c.bf16 %v367, %v366
          %v371 = vunpack.c.l.b16 %v357
          %v372 = vunpack.c.l.b16 %v358
          %v373 = vpack.c.b16 %v372, %v371
          %vm374 = vcmask 130048
          %v376 = vsel %vm374, %v373, 0
          %378 = vmatprep.subr.bf16.mxu0 0
          %379 = vmatpush1.bf16.msra.mxu0 0
          %380 = vmatprep.subr.bf16.mxu0 0
          %381 = vmatpush1.bf16.msra.mxu0 0
          %382 = vmatprep.subr.bf16.mxu0 0
          %383 = vmatpush1.bf16.msra.mxu0 0
          %384 = vmatprep.subr.bf16.mxu0 0
          %385 = vmatpush1.bf16.msra.mxu0 0
          %386 = vmatprep.subr.bf16.mxu0 0
          %387 = vmatpush1.bf16.msra.mxu0 0
          %388 = vmatprep.subr.bf16.mxu0 0
          %389 = vmatpush1.bf16.msra.mxu0 0
          %390 = vmatprep.subr.bf16.mxu0 0
          %391 = vmatpush1.bf16.msra.mxu0 0
          %392 = vmatprep.subr.bf16.mxu0 0
          %393 = vmatpush1.bf16.msra.mxu0 %v368
          %394 = vmatprep.subr.bf16.mxu0 0
          %395 = vmatpush2.bf16.msra.mxu0 0
          %396 = vmatprep.subr.bf16.mxu0 0
          %397 = vmatpush2.bf16.msra.mxu0 0
          %398 = vmatprep.subr.bf16.mxu0 0
          %399 = vmatpush2.bf16.msra.mxu0 0
          %400 = vmatprep.subr.bf16.mxu0 0
          %401 = vmatpush2.bf16.msra.mxu0 0
          %402 = vmatprep.subr.bf16.mxu0 0
          %403 = vmatpush2.bf16.msra.mxu0 0
          %404 = vmatprep.subr.bf16.mxu0 0
          %405 = vmatpush2.bf16.msra.mxu0 0
          %406 = vmatprep.subr.bf16.mxu0 0
          %407 = vmatpush2.bf16.msra.mxu0 0
          %408 = vmatprep.subr.bf16.mxu0 0
          %409 = vmatpush2.bf16.msra.mxu0 0
          %410 = vmatprep.mubr.bf16.mxu0 0
          %411 = vmatmul.mubr.bf16.gmra.mxu0 %v376
          %v412 = vpop.f32.mrf.mxu0
          %v413 = vadd.f32 0.0, %v412
          %v414 = vpop.f32.mrf.mxu0
          %v415 = vpop.f32.mrf.mxu0
          %v416 = vadd.f32 0.0, %v415
          %v417 = vpop.f32.mrf.mxu0
          %418 = vdwg.mxu0
          %v421 = vunpack.c.l.b16 %v355
          %v422 = vunpack.c.l.b16 %v356
          %v423 = vpack.c.b16 %v422, %v421
          %v425 = vsel %vm374, %v423, 0
          %427 = vmatprep.subr.bf16.mxu0 0
          %428 = vmatpush1.bf16.msra.mxu0 0
          %429 = vmatprep.subr.bf16.mxu0 0
          %430 = vmatpush1.bf16.msra.mxu0 0
          %431 = vmatprep.subr.bf16.mxu0 0
          %432 = vmatpush1.bf16.msra.mxu0 0
          %433 = vmatprep.subr.bf16.mxu0 0
          %434 = vmatpush1.bf16.msra.mxu0 0
          %435 = vmatprep.subr.bf16.mxu0 0
          %436 = vmatpush1.bf16.msra.mxu0 0
          %437 = vmatprep.subr.bf16.mxu0 0
          %438 = vmatpush1.bf16.msra.mxu0 0
          %439 = vmatprep.subr.bf16.mxu0 0
          %440 = vmatpush1.bf16.msra.mxu0 0
          %441 = vmatprep.subr.bf16.mxu0 0
          %442 = vmatpush1.bf16.msra.mxu0 %v339
          %443 = vmatprep.subr.bf16.mxu0 0
          %444 = vmatpush2.bf16.msra.mxu0 0
          %445 = vmatprep.subr.bf16.mxu0 0
          %446 = vmatpush2.bf16.msra.mxu0 0
          %447 = vmatprep.subr.bf16.mxu0 0
          %448 = vmatpush2.bf16.msra.mxu0 0
          %449 = vmatprep.subr.bf16.mxu0 0
          %450 = vmatpush2.bf16.msra.mxu0 0
          %451 = vmatprep.subr.bf16.mxu0 0
          %452 = vmatpush2.bf16.msra.mxu0 0
          %453 = vmatprep.subr.bf16.mxu0 0
          %454 = vmatpush2.bf16.msra.mxu0 0
          %455 = vmatprep.subr.bf16.mxu0 0
          %456 = vmatpush2.bf16.msra.mxu0 0
          %457 = vmatprep.subr.bf16.mxu0 0
          %458 = vmatpush2.bf16.msra.mxu0 0
          %459 = vmatprep.mubr.bf16.mxu0 0
          %460 = vmatmul.mubr.bf16.gmra.mxu0 %v425
          %v461 = vpop.f32.mrf.mxu0
          %v462 = vadd.f32 %v413, %v461
          %v463 = vpop.f32.mrf.mxu0
          %v464 = vpop.f32.mrf.mxu0
          %v465 = vadd.f32 %v416, %v464
          %v466 = vpop.f32.mrf.mxu0
          %467 = vdwg.mxu0
          %s468 = scalar_lea.vmem %s1, 16
          %v469 = vld [vmem:[%s468] sm:$0xf]
          %v470 = vld [vmem:[%s468 + $0x4] sm:$0xf]
          %vm471 = vcmp.ne.s32.totalorder %v353, 7
          %472 = vrot.lane.b32.xlu0 %v337, 127
          %v473 = vpop.permute.xlu0 %472
          %474 = vrot.lane.b32.xlu0 %v338, 127
          %v475 = vpop.permute.xlu0 %474
          %v476 = vsel %vm471, 1, 0
          %vm477 = vcmp.eq.s32.totalorder %v476, 1
          %v478 = vsel %vm477, %v473, 0.0
          %v479 = vsel %vm477, %v475, 0.0
          %v480 = vpack.c.bf16 %v479, %v478
          %v483 = vunpack.c.l.b16 %v469
          %v484 = vunpack.c.l.b16 %v470
          %v485 = vpack.c.b16 %v484, %v483
          %v487 = vsel %vm374, %v485, 0
          %489 = vmatprep.subr.bf16.mxu0 0
          %490 = vmatpush1.bf16.msra.mxu0 0
          %491 = vmatprep.subr.bf16.mxu0 0
          %492 = vmatpush1.bf16.msra.mxu0 0
          %493 = vmatprep.subr.bf16.mxu0 0
          %494 = vmatpush1.bf16.msra.mxu0 0
          %495 = vmatprep.subr.bf16.mxu0 0
          %496 = vmatpush1.bf16.msra.mxu0 0
          %497 = vmatprep.subr.bf16.mxu0 0
          %498 = vmatpush1.bf16.msra.mxu0 0
          %499 = vmatprep.subr.bf16.mxu0 0
          %500 = vmatpush1.bf16.msra.mxu0 0
          %501 = vmatprep.subr.bf16.mxu0 0
          %502 = vmatpush1.bf16.msra.mxu0 0
          %503 = vmatprep.subr.bf16.mxu0 0
          %504 = vmatpush1.bf16.msra.mxu0 %v480
          %505 = vmatprep.subr.bf16.mxu0 0
          %506 = vmatpush2.bf16.msra.mxu0 0
          %507 = vmatprep.subr.bf16.mxu0 0
          %508 = vmatpush2.bf16.msra.mxu0 0
          %509 = vmatprep.subr.bf16.mxu0 0
          %510 = vmatpush2.bf16.msra.mxu0 0
          %511 = vmatprep.subr.bf16.mxu0 0
          %512 = vmatpush2.bf16.msra.mxu0 0
          %513 = vmatprep.subr.bf16.mxu0 0
          %514 = vmatpush2.bf16.msra.mxu0 0
          %515 = vmatprep.subr.bf16.mxu0 0
          %516 = vmatpush2.bf16.msra.mxu0 0
          %517 = vmatprep.subr.bf16.mxu0 0
          %518 = vmatpush2.bf16.msra.mxu0 0
          %519 = vmatprep.subr.bf16.mxu0 0
          %520 = vmatpush2.bf16.msra.mxu0 0
          %521 = vmatprep.mubr.bf16.mxu0 0
          %522 = vmatmul.mubr.bf16.gmra.mxu0 %v487
          %v523 = vpop.f32.mrf.mxu0
          %v524 = vadd.f32 0.0, %v523
          %v525 = vpop.f32.mrf.mxu0
          %v526 = vpop.f32.mrf.mxu0
          %v527 = vadd.f32 0.0, %v526
          %v528 = vpop.f32.mrf.mxu0
          %529 = vdwg.mxu0
          %v530 = vadd.f32 %v462, %v524
          %v531 = vadd.f32 %v465, %v527
          %v532 = vld [vmem:[%s2] sm:$0xff]
          %v533 = vld [vmem:[%s2 + $0x8] sm:$0xff]
          %535 = vset.pattern.permute.xlu0 0
          %536 = vperm.xlu0 %535, %v532
          %v537 = vpop.permute.xlu0 %536
          %540 = vset.pattern.permute.xlu0 0
          %541 = vperm.xlu0 %540, %v533
          %v542 = vpop.permute.xlu0 %541
          %v544 = vadd.f32 %v530, %v537
          %v545 = vadd.f32 %v531, %v542
          %v546 = vmax.f32 %v544, 0.0
          %v547 = vmax.f32 %v545, 0.0
          %v548 = vpack.c.bf16 %v547, %v546
          %v550 = vunpack.c.l.b16 %v548
          %v551 = vunpack.c.h.b16 %v548
          %v552 = vpack.c.b16 %v550, %v550
          %v553 = vpack.c.b16 %v551, %v551
          %556 = vst [vmem:[#allocation2] sm:$0xf] %v552
          %557 = vst [vmem:[#allocation2 + $0x4] sm:$0xf] %v553
          %s558 = scalar_lea.vmem %s3, 8
          %v559 = vld [vmem:[%s558] sm:$0xf]
          %v560 = vld [vmem:[%s558 + $0x4] sm:$0xf]
          %v561 = vld [vmem:[%s3] sm:$0xf]
          %v562 = vld [vmem:[%s3 + $0x4] sm:$0xf]
          %vm563 = vcmp.ge.s32.totalorder %v341, 8
          %564 = vrot.lane.b32.xlu0 %v337, 8
          %v565 = vpop.permute.xlu0 %564
          %566 = vrot.lane.b32.xlu0 %v338, 8
          %v567 = vpop.permute.xlu0 %566
          %v568 = vsel %vm563, 1, 0
          %vm569 = vcmp.eq.s32.totalorder %v568, 1
          %v570 = vsel %vm569, %v565, 0.0
          %v571 = vsel %vm569, %v567, 0.0
          %v572 = vpack.c.bf16 %v571, %v570
          %v575 = vunpack.c.l.b16 %v561
          %v576 = vunpack.c.l.b16 %v562
          %v577 = vpack.c.b16 %v576, %v575
          %v579 = vsel %vm374, %v577, 0
          %581 = vmatprep.subr.bf16.mxu0 0
          %582 = vmatpush1.bf16.msra.mxu0 0
          %583 = vmatprep.subr.bf16.mxu0 0
          %584 = vmatpush1.bf16.msra.mxu0 0
          %585 = vmatprep.subr.bf16.mxu0 0
          %586 = vmatpush1.bf16.msra.mxu0 0
          %587 = vmatprep.subr.bf16.mxu0 0
          %588 = vmatpush1.bf16.msra.mxu0 0
          %589 = vmatprep.subr.bf16.mxu0 0
          %590 = vmatpush1.bf16.msra.mxu0 0
          %591 = vmatprep.subr.bf16.mxu0 0
          %592 = vmatpush1.bf16.msra.mxu0 0
          %593 = vmatprep.subr.bf16.mxu0 0
          %594 = vmatpush1.bf16.msra.mxu0 0
          %595 = vmatprep.subr.bf16.mxu0 0
          %596 = vmatpush1.bf16.msra.mxu0 %v572
          %597 = vmatprep.subr.bf16.mxu0 0
          %598 = vmatpush2.bf16.msra.mxu0 0
          %599 = vmatprep.subr.bf16.mxu0 0
          %600 = vmatpush2.bf16.msra.mxu0 0
          %601 = vmatprep.subr.bf16.mxu0 0
          %602 = vmatpush2.bf16.msra.mxu0 0
          %603 = vmatprep.subr.bf16.mxu0 0
          %604 = vmatpush2.bf16.msra.mxu0 0
          %605 = vmatprep.subr.bf16.mxu0 0
          %606 = vmatpush2.bf16.msra.mxu0 0
          %607 = vmatprep.subr.bf16.mxu0 0
          %608 = vmatpush2.bf16.msra.mxu0 0
          %609 = vmatprep.subr.bf16.mxu0 0
          %610 = vmatpush2.bf16.msra.mxu0 0
          %611 = vmatprep.subr.bf16.mxu0 0
          %612 = vmatpush2.bf16.msra.mxu0 0
          %613 = vmatprep.mubr.bf16.mxu0 0
          %614 = vmatmul.mubr.bf16.gmra.mxu0 %v579
          %v615 = vpop.f32.mrf.mxu0
          %v616 = vadd.f32 0.0, %v615
          %v617 = vpop.f32.mrf.mxu0
          %v618 = vpop.f32.mrf.mxu0
          %v619 = vadd.f32 0.0, %v618
          %v620 = vpop.f32.mrf.mxu0
          %621 = vdwg.mxu0
          %v624 = vunpack.c.l.b16 %v559
          %v625 = vunpack.c.l.b16 %v560
          %v626 = vpack.c.b16 %v625, %v624
          %v628 = vsel %vm374, %v626, 0
          %630 = vmatprep.subr.bf16.mxu0 0
          %631 = vmatpush1.bf16.msra.mxu0 0
          %632 = vmatprep.subr.bf16.mxu0 0
          %633 = vmatpush1.bf16.msra.mxu0 0
          %634 = vmatprep.subr.bf16.mxu0 0
          %635 = vmatpush1.bf16.msra.mxu0 0
          %636 = vmatprep.subr.bf16.mxu0 0
          %637 = vmatpush1.bf16.msra.mxu0 0
          %638 = vmatprep.subr.bf16.mxu0 0
          %639 = vmatpush1.bf16.msra.mxu0 0
          %640 = vmatprep.subr.bf16.mxu0 0
          %641 = vmatpush1.bf16.msra.mxu0 0
          %642 = vmatprep.subr.bf16.mxu0 0
          %643 = vmatpush1.bf16.msra.mxu0 0
          %644 = vmatprep.subr.bf16.mxu0 0
          %645 = vmatpush1.bf16.msra.mxu0 %v339
          %646 = vmatprep.subr.bf16.mxu0 0
          %647 = vmatpush2.bf16.msra.mxu0 0
          %648 = vmatprep.subr.bf16.mxu0 0
          %649 = vmatpush2.bf16.msra.mxu0 0
          %650 = vmatprep.subr.bf16.mxu0 0
          %651 = vmatpush2.bf16.msra.mxu0 0
          %652 = vmatprep.subr.bf16.mxu0 0
          %653 = vmatpush2.bf16.msra.mxu0 0
          %654 = vmatprep.subr.bf16.mxu0 0
          %655 = vmatpush2.bf16.msra.mxu0 0
          %656 = vmatprep.subr.bf16.mxu0 0
          %657 = vmatpush2.bf16.msra.mxu0 0
          %658 = vmatprep.subr.bf16.mxu0 0
          %659 = vmatpush2.bf16.msra.mxu0 0
          %660 = vmatprep.subr.bf16.mxu0 0
          %661 = vmatpush2.bf16.msra.mxu0 0
          %662 = vmatprep.mubr.bf16.mxu0 0
          %663 = vmatmul.mubr.bf16.gmra.mxu0 %v628
          %v664 = vpop.f32.mrf.mxu0
          %v665 = vadd.f32 %v616, %v664
          %v666 = vpop.f32.mrf.mxu0
          %v667 = vpop.f32.mrf.mxu0
          %v668 = vadd.f32 %v619, %v667
          %v669 = vpop.f32.mrf.mxu0
          %670 = vdwg.mxu0
          %s671 = scalar_lea.vmem %s3, 16
          %v672 = vld [vmem:[%s671] sm:$0xf]
          %v673 = vld [vmem:[%s671 + $0x4] sm:$0xf]
          %vm674 = vcmp.lt.s32.totalorder %v341, 56
          %675 = vrot.lane.b32.xlu0 %v337, 120
          %v676 = vpop.permute.xlu0 %675
          %677 = vrot.lane.b32.xlu0 %v338, 120
          %v678 = vpop.permute.xlu0 %677
          %v679 = vsel %vm674, 1, 0
          %vm680 = vcmp.eq.s32.totalorder %v679, 1
          %v681 = vsel %vm680, %v676, 0.0
          %v682 = vsel %vm680, %v678, 0.0
          %v683 = vpack.c.bf16 %v682, %v681
          %v686 = vunpack.c.l.b16 %v672
          %v687 = vunpack.c.l.b16 %v673
          %v688 = vpack.c.b16 %v687, %v686
          %v690 = vsel %vm374, %v688, 0
          %692 = vmatprep.subr.bf16.mxu0 0
          %693 = vmatpush1.bf16.msra.mxu0 0
          %694 = vmatprep.subr.bf16.mxu0 0
          %695 = vmatpush1.bf16.msra.mxu0 0
          %696 = vmatprep.subr.bf16.mxu0 0
          %697 = vmatpush1.bf16.msra.mxu0 0
          %698 = vmatprep.subr.bf16.mxu0 0
          %699 = vmatpush1.bf16.msra.mxu0 0
          %700 = vmatprep.subr.bf16.mxu0 0
          %701 = vmatpush1.bf16.msra.mxu0 0
          %702 = vmatprep.subr.bf16.mxu0 0
          %703 = vmatpush1.bf16.msra.mxu0 0
          %704 = vmatprep.subr.bf16.mxu0 0
          %705 = vmatpush1.bf16.msra.mxu0 0
          %706 = vmatprep.subr.bf16.mxu0 0
          %707 = vmatpush1.bf16.msra.mxu0 %v683
          %708 = vmatprep.subr.bf16.mxu0 0
          %709 = vmatpush2.bf16.msra.mxu0 0
          %710 = vmatprep.subr.bf16.mxu0 0
          %711 = vmatpush2.bf16.msra.mxu0 0
          %712 = vmatprep.subr.bf16.mxu0 0
          %713 = vmatpush2.bf16.msra.mxu0 0
          %714 = vmatprep.subr.bf16.mxu0 0
          %715 = vmatpush2.bf16.msra.mxu0 0
          %716 = vmatprep.subr.bf16.mxu0 0
          %717 = vmatpush2.bf16.msra.mxu0 0
          %718 = vmatprep.subr.bf16.mxu0 0
          %719 = vmatpush2.bf16.msra.mxu0 0
          %720 = vmatprep.subr.bf16.mxu0 0
          %721 = vmatpush2.bf16.msra.mxu0 0
          %722 = vmatprep.subr.bf16.mxu0 0
          %723 = vmatpush2.bf16.msra.mxu0 0
          %724 = vmatprep.mubr.bf16.mxu0 0
          %725 = vmatmul.mubr.bf16.gmra.mxu0 %v690
          %v726 = vpop.f32.mrf.mxu0
          %v727 = vadd.f32 0.0, %v726
          %v728 = vpop.f32.mrf.mxu0
          %v729 = vpop.f32.mrf.mxu0
          %v730 = vadd.f32 0.0, %v729
          %v731 = vpop.f32.mrf.mxu0
          %732 = vdwg.mxu0
          %v733 = vadd.f32 %v665, %v727
          %v734 = vadd.f32 %v668, %v730
          %v735 = vld [vmem:[%s4] sm:$0xff]
          %v736 = vld [vmem:[%s4 + $0x8] sm:$0xff]
          %738 = vset.pattern.permute.xlu0 0
          %739 = vperm.xlu0 %738, %v735
          %v740 = vpop.permute.xlu0 %739
          %743 = vset.pattern.permute.xlu0 0
          %744 = vperm.xlu0 %743, %v736
          %v745 = vpop.permute.xlu0 %744
          %v747 = vadd.f32 %v733, %v740
          %v748 = vadd.f32 %v734, %v745
          %v749 = vmax.f32 %v747, 0.0
          %v750 = vmax.f32 %v748, 0.0
          %v751 = vpack.c.bf16 %v750, %v749
          %v753 = vunpack.c.l.b16 %v751
          %v754 = vunpack.c.h.b16 %v751
          %v755 = vpack.c.b16 %v753, %v753
          %v756 = vpack.c.b16 %v754, %v754
          %759 = vst [vmem:[#allocation3] sm:$0xf] %v755
          %760 = vst [vmem:[#allocation3 + $0x4] sm:$0xf] %v756
          %v761 = vld [vmem:[%s5] sm:$0xf]
          %v762 = vld [vmem:[%s5 + $0x4] sm:$0xf]
          %v763 = vld [vmem:[%s5 + $0x8] sm:$0xf]
          %v764 = vld [vmem:[%s5 + $0xc] sm:$0xf]
          %v765 = vld [vmem:[%s6] sm:$0xff]
          %v766 = vld [vmem:[%s6 + $0x8] sm:$0xff]
          %v767 = vld [vmem:[%s6 + $0x10] sm:$0xff]
          %v768 = vld [vmem:[%s6 + $0x18] sm:$0xff]
          %770 = vset.pattern.permute.xlu0 0
          %771 = vperm.xlu0 %770, %v765
          %v772 = vpop.permute.xlu0 %771
          %775 = vset.pattern.permute.xlu0 0
          %776 = vperm.xlu0 %775, %v766
          %v777 = vpop.permute.xlu0 %776
          %780 = vset.pattern.permute.xlu0 0
          %781 = vperm.xlu0 %780, %v767
          %v782 = vpop.permute.xlu0 %781
          %785 = vset.pattern.permute.xlu0 0
          %786 = vperm.xlu0 %785, %v768
          %v787 = vpop.permute.xlu0 %786
          %v793 = vunpack.c.l.b16 %v761
          %v794 = vunpack.c.l.b16 %v762
          %v795 = vunpack.c.l.b16 %v763
          %v796 = vunpack.c.l.b16 %v764
          %v797 = vpack.c.b16 %v794, %v793
          %v798 = vpack.c.b16 %v796, %v795
          %v800 = vsel %vm374, %v797, 0
          %v803 = vsel %vm374, %v798, 0
          %805 = vmatprep.subr.bf16.mxu0 0
          %806 = vmatpush1.bf16.msra.mxu0 0
          %807 = vmatprep.subr.bf16.mxu0 0
          %808 = vmatpush1.bf16.msra.mxu0 0
          %809 = vmatprep.subr.bf16.mxu0 0
          %810 = vmatpush1.bf16.msra.mxu0 0
          %811 = vmatprep.subr.bf16.mxu0 0
          %812 = vmatpush1.bf16.msra.mxu0 0
          %813 = vmatprep.subr.bf16.mxu0 0
          %814 = vmatpush1.bf16.msra.mxu0 0
          %815 = vmatprep.subr.bf16.mxu0 0
          %816 = vmatpush1.bf16.msra.mxu0 0
          %817 = vmatprep.subr.bf16.mxu0 0
          %818 = vmatpush1.bf16.msra.mxu0 0
          %819 = vmatprep.subr.bf16.mxu0 0
          %820 = vmatpush1.bf16.msra.mxu0 %v339
          %821 = vmatprep.subr.bf16.mxu0 0
          %822 = vmatpush2.bf16.msra.mxu0 0
          %823 = vmatprep.subr.bf16.mxu0 0
          %824 = vmatpush2.bf16.msra.mxu0 0
          %825 = vmatprep.subr.bf16.mxu0 0
          %826 = vmatpush2.bf16.msra.mxu0 0
          %827 = vmatprep.subr.bf16.mxu0 0
          %828 = vmatpush2.bf16.msra.mxu0 0
          %829 = vmatprep.subr.bf16.mxu0 0
          %830 = vmatpush2.bf16.msra.mxu0 0
          %831 = vmatprep.subr.bf16.mxu0 0
          %832 = vmatpush2.bf16.msra.mxu0 0
          %833 = vmatprep.subr.bf16.mxu0 0
          %834 = vmatpush2.bf16.msra.mxu0 0
          %835 = vmatprep.subr.bf16.mxu0 0
          %836 = vmatpush2.bf16.msra.mxu0 0
          %837 = vmatprep.mubr.bf16.mxu0 0
          %838 = vmatmul.mubr.bf16.gmra.mxu0 %v800
          %v839 = vpop.f32.mrf.mxu0
          %v840 = vadd.f32 %v772, %v839
          %v841 = vpop.f32.mrf.mxu0
          %v842 = vpop.f32.mrf.mxu0
          %v843 = vadd.f32 %v777, %v842
          %v844 = vpop.f32.mrf.mxu0
          %845 = vmatprep.mubr.bf16.mxu0 0
          %846 = vmatmul.mubr.bf16.gmra.mxu0 %v803
          %v847 = vpop.f32.mrf.mxu0
          %v848 = vadd.f32 %v782, %v847
          %v849 = vpop.f32.mrf.mxu0
          %v850 = vpop.f32.mrf.mxu0
          %v851 = vadd.f32 %v787, %v850
          %v852 = vpop.f32.mrf.mxu0
          %853 = vdwg.mxu0
          %v854 = vpack.c.bf16 %v843, %v840
          %v855 = vpack.c.bf16 %v851, %v848
          %v858 = vunpack.c.l.b16 %v854
          %v859 = vunpack.c.h.b16 %v854
          %v860 = vunpack.c.l.b16 %v855
          %v861 = vunpack.c.h.b16 %v855
          %v862 = vpack.c.b16 %v858, %v858
          %v863 = vpack.c.b16 %v859, %v859
          %v864 = vpack.c.b16 %v860, %v860
          %v865 = vpack.c.b16 %v861, %v861
          %870 = vst [vmem:[#allocation4] sm:$0xf] %v862
          %871 = vst [vmem:[#allocation4 + $0x4] sm:$0xf] %v863
          %872 = vst [vmem:[#allocation4 + $0x8] sm:$0xf] %v864
          %873 = vst [vmem:[#allocation4 + $0xc] sm:$0xf] %v865
          %v874 = vunpack.c.l.bf16 %v339
          %v875 = vunpack.c.h.bf16 %v339
          %v876 = vsub.f32 %v337, %v874
          %v877 = vsub.f32 %v338, %v875
          %v878 = vpack.c.bf16 %v877, %v876
          %879 = vmatprep.subr.bf16.mxu0 0
          %880 = vmatpush1.bf16.xpose.msra.mxu0 0
          %881 = vmatprep.subr.bf16.mxu0 0
          %882 = vmatpush1.bf16.xpose.msra.mxu0 0
          %883 = vmatprep.subr.bf16.mxu0 0
          %884 = vmatpush1.bf16.xpose.msra.mxu0 0
          %885 = vmatprep.subr.bf16.mxu0 0
          %886 = vmatpush1.bf16.xpose.msra.mxu0 0
          %887 = vmatprep.subr.bf16.mxu0 0
          %888 = vmatpush1.bf16.xpose.msra.mxu0 0
          %889 = vmatprep.subr.bf16.mxu0 0
          %890 = vmatpush1.bf16.xpose.msra.mxu0 0
          %891 = vmatprep.subr.bf16.mxu0 0
          %892 = vmatpush1.bf16.xpose.msra.mxu0 0
          %893 = vmatprep.subr.bf16.mxu0 0
          %894 = vmatpush1.bf16.xpose.msra.mxu0 %v878
          %895 = vmatprep.subr.bf16.mxu0 0
          %896 = vmatpush2.bf16.xpose.msra.mxu0 0
          %897 = vmatprep.subr.bf16.mxu0 0
          %898 = vmatpush2.bf16.xpose.msra.mxu0 0
          %899 = vmatprep.subr.bf16.mxu0 0
          %900 = vmatpush2.bf16.xpose.msra.mxu0 0
          %901 = vmatprep.subr.bf16.mxu0 0
          %902 = vmatpush2.bf16.xpose.msra.mxu0 0
          %903 = vmatprep.subr.bf16.mxu0 0
          %904 = vmatpush2.bf16.xpose.msra.mxu0 0
          %905 = vmatprep.subr.bf16.mxu0 0
          %906 = vmatpush2.bf16.xpose.msra.mxu0 0
          %907 = vmatprep.subr.bf16.mxu0 0
          %908 = vmatpush2.bf16.xpose.msra.mxu0 0
          %909 = vmatprep.subr.bf16.mxu0 0
          %910 = vmatpush2.bf16.xpose.msra.mxu0 0
          %911 = vmatprep.mubr.bf16.mxu0 0
          %912 = vmatmul.mubr.bf16.gmra.mxu0 %v339
          %v913 = vpop.f32.mrf.mxu0
          %v914 = vadd.f32 0.0, %v913
          %v915 = vpop.f32.mrf.mxu0
          %v916 = vpop.f32.mrf.mxu0
          %v917 = vadd.f32 0.0, %v916
          %v918 = vpop.f32.mrf.mxu0
          %919 = vdwg.mxu0
          %920 = vmatprep.subr.bf16.mxu0 0
          %921 = vmatpush1.bf16.xpose.msra.mxu0 0
          %922 = vmatprep.subr.bf16.mxu0 0
          %923 = vmatpush1.bf16.xpose.msra.mxu0 0
          %924 = vmatprep.subr.bf16.mxu0 0
          %925 = vmatpush1.bf16.xpose.msra.mxu0 0
          %926 = vmatprep.subr.bf16.mxu0 0
          %927 = vmatpush1.bf16.xpose.msra.mxu0 0
          %928 = vmatprep.subr.bf16.mxu0 0
          %929 = vmatpush1.bf16.xpose.msra.mxu0 0
          %930 = vmatprep.subr.bf16.mxu0 0
          %931 = vmatpush1.bf16.xpose.msra.mxu0 0
          %932 = vmatprep.subr.bf16.mxu0 0
          %933 = vmatpush1.bf16.xpose.msra.mxu0 0
          %934 = vmatprep.subr.bf16.mxu0 0
          %935 = vmatpush1.bf16.xpose.msra.mxu0 %v339
          %936 = vmatprep.subr.bf16.mxu0 0
          %937 = vmatpush2.bf16.xpose.msra.mxu0 0
          %938 = vmatprep.subr.bf16.mxu0 0
          %939 = vmatpush2.bf16.xpose.msra.mxu0 0
          %940 = vmatprep.subr.bf16.mxu0 0
          %941 = vmatpush2.bf16.xpose.msra.mxu0 0
          %942 = vmatprep.subr.bf16.mxu0 0
          %943 = vmatpush2.bf16.xpose.msra.mxu0 0
          %944 = vmatprep.subr.bf16.mxu0 0
          %945 = vmatpush2.bf16.xpose.msra.mxu0 0
          %946 = vmatprep.subr.bf16.mxu0 0
          %947 = vmatpush2.bf16.xpose.msra.mxu0 0
          %948 = vmatprep.subr.bf16.mxu0 0
          %949 = vmatpush2.bf16.xpose.msra.mxu0 0
          %950 = vmatprep.subr.bf16.mxu0 0
          %951 = vmatpush2.bf16.xpose.msra.mxu0 0
          %952 = vmatprep.mubr.bf16.mxu0 0
          %953 = vmatmul.mubr.bf16.gmra.mxu0 %v339
          %v954 = vpop.f32.mrf.mxu0
          %v955 = vadd.f32 %v914, %v954
          %v956 = vpop.f32.mrf.mxu0
          %v957 = vpop.f32.mrf.mxu0
          %v958 = vadd.f32 %v917, %v957
          %v959 = vpop.f32.mrf.mxu0
          %960 = vdwg.mxu0
          %961 = vmatprep.subr.bf16.mxu0 0
          %962 = vmatpush1.bf16.xpose.msra.mxu0 0
          %963 = vmatprep.subr.bf16.mxu0 0
          %964 = vmatpush1.bf16.xpose.msra.mxu0 0
          %965 = vmatprep.subr.bf16.mxu0 0
          %966 = vmatpush1.bf16.xpose.msra.mxu0 0
          %967 = vmatprep.subr.bf16.mxu0 0
          %968 = vmatpush1.bf16.xpose.msra.mxu0 0
          %969 = vmatprep.subr.bf16.mxu0 0
          %970 = vmatpush1.bf16.xpose.msra.mxu0 0
          %971 = vmatprep.subr.bf16.mxu0 0
          %972 = vmatpush1.bf16.xpose.msra.mxu0 0
          %973 = vmatprep.subr.bf16.mxu0 0
          %974 = vmatpush1.bf16.xpose.msra.mxu0 0
          %975 = vmatprep.subr.bf16.mxu0 0
          %976 = vmatpush1.bf16.xpose.msra.mxu0 %v339
          %977 = vmatprep.subr.bf16.mxu0 0
          %978 = vmatpush2.bf16.xpose.msra.mxu0 0
          %979 = vmatprep.subr.bf16.mxu0 0
          %980 = vmatpush2.bf16.xpose.msra.mxu0 0
          %981 = vmatprep.subr.bf16.mxu0 0
          %982 = vmatpush2.bf16.xpose.msra.mxu0 0
          %983 = vmatprep.subr.bf16.mxu0 0
          %984 = vmatpush2.bf16.xpose.msra.mxu0 0
          %985 = vmatprep.subr.bf16.mxu0 0
          %986 = vmatpush2.bf16.xpose.msra.mxu0 0
          %987 = vmatprep.subr.bf16.mxu0 0
          %988 = vmatpush2.bf16.xpose.msra.mxu0 0
          %989 = vmatprep.subr.bf16.mxu0 0
          %990 = vmatpush2.bf16.xpose.msra.mxu0 0
          %991 = vmatprep.subr.bf16.mxu0 0
          %992 = vmatpush2.bf16.xpose.msra.mxu0 0
          %993 = vmatprep.mubr.bf16.mxu0 0
          %994 = vmatmul.mubr.bf16.gmra.mxu0 %v878
          %v995 = vpop.f32.mrf.mxu0
          %v996 = vadd.f32 0.0, %v995
          %v997 = vpop.f32.mrf.mxu0
          %v998 = vpop.f32.mrf.mxu0
          %v999 = vadd.f32 0.0, %v998
          %v1000 = vpop.f32.mrf.mxu0
          %1001 = vdwg.mxu0
          %v1002 = vadd.f32 %v955, %v996
          %v1003 = vadd.f32 %v958, %v999
          %v1004 = vsel %vm374, %v1002, inf
          %1005 = vmin.xlane.f32.xlu0 %v1004
          %v1006 = vpop.xlane.xlu0 %1005
          %v1007 = vsel %vm374, %v1003, inf
          %1008 = vmin.xlane.f32.xlu0 %v1007
          %v1009 = vpop.xlane.xlu0 %1008
          %v1010 = vsub.f32 %v1006, %v1002
          %v1011 = vsub.f32 %v1009, %v1003
          %v1012 = vmul.f32 %v1010, 1.442695
          %v1013 = vpow.pop %v1012
          %v1014 = vmul.f32 %v1011, 1.442695
          %v1015 = vpow.pop %v1014
          %v1016 = vsel %vm374, %v1013, 0.0
          %1017 = vadd.xlane.f32.xlu0 %v1016
          %v1018 = vpop.xlane.xlu0 %1017
          %v1019 = vsel %vm374, %v1015, 0.0
          %1020 = vadd.xlane.f32.xlu0 %v1019
          %v1021 = vpop.xlane.xlu0 %1020
          %v1022 = vrcp.pop %v1018
          %v1023 = vrcp.pop %v1021
          %s1024 = sld [smem:[#allocation7 + $0x1]]
          %v1025 = vstv %s1024
          %v1026 = vmul.f32 %v1025, %v1022
          %v1027 = vmul.f32 %v1025, %v1023
          %v1028 = vmul.f32 %v1026, %v1013
          %v1029 = vmul.f32 %v1027, %v1015
          %v1030 = vpack.c.bf16 %v1029, %v1028
          %v1032 = vunpack.c.l.b16 %v1030
          %v1033 = vunpack.c.h.b16 %v1030
          %v1034 = vpack.c.b16 %v1032, %v1032
          %v1035 = vpack.c.b16 %v1033, %v1033
          %vm1038 = vcmask 125952
          %1039 = vst.msk [vmem:[#allocation5] sm:$0xf] %vm1038, %v1034
          %1040 = vst.msk [vmem:[#allocation5 + $0x4] sm:$0xf] %vm1038, %v1035
          %v1041 = vlaneseq
          %v1042 = vshrl.u32 %v1041, 7
          %v1043 = vadd.s32 %v1042, 8
          %v1044 = vadd.s32 %v1042, 16
          %v1045 = vadd.s32 %v1042, 24
          %v1046 = vadd.s32 %v1042, 32
          %v1047 = vadd.s32 %v1042, 40
          %v1048 = vadd.s32 %v1042, 48
          %v1049 = vadd.s32 %v1042, 56
          %v1050 = vadd.s32 %v1042, 64
          %v1051 = vadd.s32 %v1042, 72
          %v1052 = vadd.s32 %v1042, 80
          %v1053 = vadd.s32 %v1042, 88
          %v1054 = vadd.s32 %v1042, 96
          %v1055 = vadd.s32 %v1042, 104
          %v1056 = vadd.s32 %v1042, 112
          %v1057 = vadd.s32 %v1042, 120
          %vm1058 = vcmp.lt.s32.totalorder %v1042, 64
          %vm1059 = vcmp.lt.s32.totalorder %v1043, 64
          %vm1060 = vcmp.lt.s32.totalorder %v1044, 64
          %vm1061 = vcmp.lt.s32.totalorder %v1045, 64
          %vm1062 = vcmp.lt.s32.totalorder %v1046, 64
          %vm1063 = vcmp.lt.s32.totalorder %v1047, 64
          %vm1064 = vcmp.lt.s32.totalorder %v1048, 64
          %vm1065 = vcmp.lt.s32.totalorder %v1049, 64
          %vm1066 = vcmp.lt.s32.totalorder %v1050, 64
          %vm1067 = vcmp.lt.s32.totalorder %v1051, 64
          %vm1068 = vcmp.lt.s32.totalorder %v1052, 64
          %vm1069 = vcmp.lt.s32.totalorder %v1053, 64
          %vm1070 = vcmp.lt.s32.totalorder %v1054, 64
          %vm1071 = vcmp.lt.s32.totalorder %v1055, 64
          %vm1072 = vcmp.lt.s32.totalorder %v1056, 64
          %vm1073 = vcmp.lt.s32.totalorder %v1057, 64
          %v1074 = vsel %vm1058, 0.0, -1e+30
          %v1075 = vsel %vm1059, 0.0, -1e+30
          %v1076 = vsel %vm1060, 0.0, -1e+30
          %v1077 = vsel %vm1061, 0.0, -1e+30
          %v1078 = vsel %vm1062, 0.0, -1e+30
          %v1079 = vsel %vm1063, 0.0, -1e+30
          %v1080 = vsel %vm1064, 0.0, -1e+30
          %v1081 = vsel %vm1065, 0.0, -1e+30
          %v1082 = vsel %vm1066, 0.0, -1e+30
          %v1083 = vsel %vm1067, 0.0, -1e+30
          %v1084 = vsel %vm1068, 0.0, -1e+30
          %v1085 = vsel %vm1069, 0.0, -1e+30
          %v1086 = vsel %vm1070, 0.0, -1e+30
          %v1087 = vsel %vm1071, 0.0, -1e+30
          %v1088 = vsel %vm1072, 0.0, -1e+30
          %v1089 = vsel %vm1073, 0.0, -1e+30
          %vm1090 = vcmask 7168
          %1091 = vst.msk [vmem:[#allocation6] sm:$0xff] %vm1090, %v1074
          %1092 = vst.msk [vmem:[#allocation6 + $0x8] sm:$0xff] %vm1090, %v1075
          %1093 = vst.msk [vmem:[#allocation6 + $0x10] sm:$0xff] %vm1090, %v1076
          %1094 = vst.msk [vmem:[#allocation6 + $0x18] sm:$0xff] %vm1090, %v1077
          %1095 = vst.msk [vmem:[#allocation6 + $0x20] sm:$0xff] %vm1090, %v1078
          %1096 = vst.msk [vmem:[#allocation6 + $0x28] sm:$0xff] %vm1090, %v1079
          %1097 = vst.msk [vmem:[#allocation6 + $0x30] sm:$0xff] %vm1090, %v1080
          %1098 = vst.msk [vmem:[#allocation6 + $0x38] sm:$0xff] %vm1090, %v1081
          %1099 = vst.msk [vmem:[#allocation6 + $0x40] sm:$0xff] %vm1090, %v1082
          %1100 = vst.msk [vmem:[#allocation6 + $0x48] sm:$0xff] %vm1090, %v1083
          %1101 = vst.msk [vmem:[#allocation6 + $0x50] sm:$0xff] %vm1090, %v1084
          %1102 = vst.msk [vmem:[#allocation6 + $0x58] sm:$0xff] %vm1090, %v1085
          %1103 = vst.msk [vmem:[#allocation6 + $0x60] sm:$0xff] %vm1090, %v1086
          %1104 = vst.msk [vmem:[#allocation6 + $0x68] sm:$0xff] %vm1090, %v1087
          %1105 = vst.msk [vmem:[#allocation6 + $0x70] sm:$0xff] %vm1090, %v1088
          %1106 = vst.msk [vmem:[#allocation6 + $0x78] sm:$0xff] %vm1090, %v1089
        $region60: #{tpu_custom_call.1} parent=51 // pred_fallthru
          _
        %s1107 = smul.u32 %s28, 128
        %s1108 = sshra.s32 %s1107, 7
        %s1109 = sand.u32 %s1107, 127
        %s1110 = scalar_lea.vmem %s331, %s1108
        %v1111 = vld [vmem:[%s1110] sm:$0xff]
        %v1112 = vld [vmem:[%s1110 + $0x8] sm:$0xff]
        %s1113 = smul.addr %s1108, 4
        %s1114 = scalar_lea.vmem [#allocation2], %s1113
        %v1115 = vld [vmem:[%s1114] sm:$0xf]
        %v1116 = vld [vmem:[%s1114 + $0x4] sm:$0xf]
        %v1117 = vld [vmem:[#allocation3] sm:$0xf]
        %v1118 = vld [vmem:[#allocation3 + $0x4] sm:$0xf]
        %v1119 = vld [vmem:[#allocation6] sm:$0xff]
        %v1120 = vld [vmem:[#allocation6 + $0x8] sm:$0xff]
        %v1121 = vld [vmem:[#allocation6 + $0x10] sm:$0xff]
        %v1122 = vld [vmem:[#allocation6 + $0x18] sm:$0xff]
        %v1123 = vld [vmem:[#allocation6 + $0x20] sm:$0xff]
        %v1124 = vld [vmem:[#allocation6 + $0x28] sm:$0xff]
        %v1125 = vld [vmem:[#allocation6 + $0x30] sm:$0xff]
        %v1126 = vld [vmem:[#allocation6 + $0x38] sm:$0xff]
        %v1127 = vld [vmem:[#allocation6 + $0x40] sm:$0xff]
        %v1128 = vld [vmem:[#allocation6 + $0x48] sm:$0xff]
        %v1129 = vld [vmem:[#allocation6 + $0x50] sm:$0xff]
        %v1130 = vld [vmem:[#allocation6 + $0x58] sm:$0xff]
        %v1131 = vld [vmem:[#allocation6 + $0x60] sm:$0xff]
        %v1132 = vld [vmem:[#allocation6 + $0x68] sm:$0xff]
        %v1133 = vld [vmem:[#allocation6 + $0x70] sm:$0xff]
        %v1134 = vld [vmem:[#allocation6 + $0x78] sm:$0xff]
        %1136 = vset.pattern.permute.xlu0 0
        %1137 = vperm.xlu0 %1136, %v1119
        %v1138 = vpop.permute.xlu0 %1137
        %1141 = vset.pattern.permute.xlu0 0
        %1142 = vperm.xlu0 %1141, %v1120
        %v1143 = vpop.permute.xlu0 %1142
        %1146 = vset.pattern.permute.xlu0 0
        %1147 = vperm.xlu0 %1146, %v1121
        %v1148 = vpop.permute.xlu0 %1147
        %1151 = vset.pattern.permute.xlu0 0
        %1152 = vperm.xlu0 %1151, %v1122
        %v1153 = vpop.permute.xlu0 %1152
        %1156 = vset.pattern.permute.xlu0 0
        %1157 = vperm.xlu0 %1156, %v1123
        %v1158 = vpop.permute.xlu0 %1157
        %1161 = vset.pattern.permute.xlu0 0
        %1162 = vperm.xlu0 %1161, %v1124
        %v1163 = vpop.permute.xlu0 %1162
        %1166 = vset.pattern.permute.xlu0 0
        %1167 = vperm.xlu0 %1166, %v1125
        %v1168 = vpop.permute.xlu0 %1167
        %1171 = vset.pattern.permute.xlu0 0
        %1172 = vperm.xlu0 %1171, %v1126
        %v1173 = vpop.permute.xlu0 %1172
        %1176 = vset.pattern.permute.xlu0 0
        %1177 = vperm.xlu0 %1176, %v1127
        %v1178 = vpop.permute.xlu0 %1177
        %1181 = vset.pattern.permute.xlu0 0
        %1182 = vperm.xlu0 %1181, %v1128
        %v1183 = vpop.permute.xlu0 %1182
        %1186 = vset.pattern.permute.xlu0 0
        %1187 = vperm.xlu0 %1186, %v1129
        %v1188 = vpop.permute.xlu0 %1187
        %1191 = vset.pattern.permute.xlu0 0
        %1192 = vperm.xlu0 %1191, %v1130
        %v1193 = vpop.permute.xlu0 %1192
        %1196 = vset.pattern.permute.xlu0 0
        %1197 = vperm.xlu0 %1196, %v1131
        %v1198 = vpop.permute.xlu0 %1197
        %1201 = vset.pattern.permute.xlu0 0
        %1202 = vperm.xlu0 %1201, %v1132
        %v1203 = vpop.permute.xlu0 %1202
        %1206 = vset.pattern.permute.xlu0 0
        %1207 = vperm.xlu0 %1206, %v1133
        %v1208 = vpop.permute.xlu0 %1207
        %1211 = vset.pattern.permute.xlu0 0
        %1212 = vperm.xlu0 %1211, %v1134
        %v1213 = vpop.permute.xlu0 %1212
        %v1217 = vunpack.c.l.b16 %v1117
        %v1218 = vunpack.c.l.b16 %v1118
        %v1219 = vpack.c.b16 %v1218, %v1217
        %1221 = vxpose.xlu0.c.b16.start [1/8] %v1219, 128
        %1222 = vxpose.xlu0.c.b16.cont [2/8] 0, 128
        %1223 = vxpose.xlu0.c.b16.cont [3/8] 0, 128
        %1224 = vxpose.xlu0.c.b16.cont [4/8] 0, 128
        %1225 = vxpose.xlu0.c.b16.cont [5/8] 0, 128
        %1226 = vxpose.xlu0.c.b16.cont [6/8] 0, 128
        %1227 = vxpose.xlu0.c.b16.cont [7/8] 0, 128
        %1228 = vxpose.xlu0.c.b16.end [8/8] 0, 128
        %v1229 = vpop.trf.xlu0
        %v1230 = vpop.trf.xlu0
        %v1231 = vpop.trf.xlu0
        %v1232 = vpop.trf.xlu0
        %v1233 = vpop.trf.xlu0
        %v1234 = vpop.trf.xlu0
        %v1235 = vpop.trf.xlu0
        %v1236 = vpop.trf.xlu0
        %v1239 = vunpack.c.l.b16 %v1115
        %v1240 = vunpack.c.l.b16 %v1116
        %v1241 = vpack.c.b16 %v1240, %v1239
        %vm1243 = vcmask 130048
        %v1245 = vsel %vm1243, %v1229, 0
        %v1248 = vsel %vm1243, %v1230, 0
        %v1251 = vsel %vm1243, %v1231, 0
        %v1254 = vsel %vm1243, %v1232, 0
        %v1257 = vsel %vm1243, %v1233, 0
        %v1260 = vsel %vm1243, %v1234, 0
        %v1263 = vsel %vm1243, %v1235, 0
        %v1266 = vsel %vm1243, %v1236, 0
        %1268 = vmatprep.subr.bf16.mxu0 0
        %1269 = vmatpush1.bf16.msra.mxu0 0
        %1270 = vmatprep.subr.bf16.mxu0 0
        %1271 = vmatpush1.bf16.msra.mxu0 0
        %1272 = vmatprep.subr.bf16.mxu0 0
        %1273 = vmatpush1.bf16.msra.mxu0 0
        %1274 = vmatprep.subr.bf16.mxu0 0
        %1275 = vmatpush1.bf16.msra.mxu0 0
        %1276 = vmatprep.subr.bf16.mxu0 0
        %1277 = vmatpush1.bf16.msra.mxu0 0
        %1278 = vmatprep.subr.bf16.mxu0 0
        %1279 = vmatpush1.bf16.msra.mxu0 0
        %1280 = vmatprep.subr.bf16.mxu0 0
        %1281 = vmatpush1.bf16.msra.mxu0 0
        %1282 = vmatprep.subr.bf16.mxu0 0
        %1283 = vmatpush1.bf16.msra.mxu0 %v1241
        %1284 = vmatprep.subr.bf16.mxu0 0
        %1285 = vmatpush2.bf16.msra.mxu0 0
        %1286 = vmatprep.subr.bf16.mxu0 0
        %1287 = vmatpush2.bf16.msra.mxu0 0
        %1288 = vmatprep.subr.bf16.mxu0 0
        %1289 = vmatpush2.bf16.msra.mxu0 0
        %1290 = vmatprep.subr.bf16.mxu0 0
        %1291 = vmatpush2.bf16.msra.mxu0 0
        %1292 = vmatprep.subr.bf16.mxu0 0
        %1293 = vmatpush2.bf16.msra.mxu0 0
        %1294 = vmatprep.subr.bf16.mxu0 0
        %1295 = vmatpush2.bf16.msra.mxu0 0
        %1296 = vmatprep.subr.bf16.mxu0 0
        %1297 = vmatpush2.bf16.msra.mxu0 0
        %1298 = vmatprep.subr.bf16.mxu0 0
        %1299 = vmatpush2.bf16.msra.mxu0 0
        %1300 = vmatprep.mubr.bf16.mxu0 0
        %1301 = vmatmul.mubr.bf16.gmra.mxu0 %v1245
        %v1302 = vpop.f32.mrf.mxu0
        %v1303 = vadd.f32 %v1138, %v1302
        %v1304 = vpop.f32.mrf.mxu0
        %v1305 = vpop.f32.mrf.mxu0
        %v1306 = vadd.f32 %v1143, %v1305
        %v1307 = vpop.f32.mrf.mxu0
        %1308 = vmatprep.mubr.bf16.mxu0 0
        %1309 = vmatmul.mubr.bf16.gmra.mxu0 %v1248
        %v1310 = vpop.f32.mrf.mxu0
        %v1311 = vadd.f32 %v1148, %v1310
        %v1312 = vpop.f32.mrf.mxu0
        %v1313 = vpop.f32.mrf.mxu0
        %v1314 = vadd.f32 %v1153, %v1313
        %v1315 = vpop.f32.mrf.mxu0
        %1316 = vmatprep.mubr.bf16.mxu0 0
        %1317 = vmatmul.mubr.bf16.gmra.mxu0 %v1251
        %v1318 = vpop.f32.mrf.mxu0
        %v1319 = vadd.f32 %v1158, %v1318
        %v1320 = vpop.f32.mrf.mxu0
        %v1321 = vpop.f32.mrf.mxu0
        %v1322 = vadd.f32 %v1163, %v1321
        %v1323 = vpop.f32.mrf.mxu0
        %1324 = vmatprep.mubr.bf16.mxu0 0
        %1325 = vmatmul.mubr.bf16.gmra.mxu0 %v1254
        %v1326 = vpop.f32.mrf.mxu0
        %v1327 = vadd.f32 %v1168, %v1326
        %v1328 = vpop.f32.mrf.mxu0
        %v1329 = vpop.f32.mrf.mxu0
        %v1330 = vadd.f32 %v1173, %v1329
        %v1331 = vpop.f32.mrf.mxu0
        %1332 = vmatprep.mubr.bf16.mxu0 0
        %1333 = vmatmul.mubr.bf16.gmra.mxu0 %v1257
        %v1334 = vpop.f32.mrf.mxu0
        %v1335 = vadd.f32 %v1178, %v1334
        %v1336 = vpop.f32.mrf.mxu0
        %v1337 = vpop.f32.mrf.mxu0
        %v1338 = vadd.f32 %v1183, %v1337
        %v1339 = vpop.f32.mrf.mxu0
        %1340 = vmatprep.mubr.bf16.mxu0 0
        %1341 = vmatmul.mubr.bf16.gmra.mxu0 %v1260
        %v1342 = vpop.f32.mrf.mxu0
        %v1343 = vadd.f32 %v1188, %v1342
        %v1344 = vpop.f32.mrf.mxu0
        %v1345 = vpop.f32.mrf.mxu0
        %v1346 = vadd.f32 %v1193, %v1345
        %v1347 = vpop.f32.mrf.mxu0
        %1348 = vmatprep.mubr.bf16.mxu0 0
        %1349 = vmatmul.mubr.bf16.gmra.mxu0 %v1263
        %v1350 = vpop.f32.mrf.mxu0
        %v1351 = vadd.f32 %v1198, %v1350
        %v1352 = vpop.f32.mrf.mxu0
        %v1353 = vpop.f32.mrf.mxu0
        %v1354 = vadd.f32 %v1203, %v1353
        %v1355 = vpop.f32.mrf.mxu0
        %1356 = vmatprep.mubr.bf16.mxu0 0
        %1357 = vmatmul.mubr.bf16.gmra.mxu0 %v1266
        %v1358 = vpop.f32.mrf.mxu0
        %v1359 = vadd.f32 %v1208, %v1358
        %v1360 = vpop.f32.mrf.mxu0
        %v1361 = vpop.f32.mrf.mxu0
        %v1362 = vadd.f32 %v1213, %v1361
        %v1363 = vpop.f32.mrf.mxu0
        %1364 = vdwg.mxu0
        %v1365 = vmax.f32 %v1303, %v1319
        %v1366 = vmax.f32 %v1306, %v1322
        %v1367 = vmax.f32 %v1311, %v1327
        %v1368 = vmax.f32 %v1314, %v1330
        %v1369 = vmax.f32 %v1365, %v1335
        %v1370 = vmax.f32 %v1366, %v1338
        %v1371 = vmax.f32 %v1367, %v1343
        %v1372 = vmax.f32 %v1368, %v1346
        %v1373 = vmax.f32 %v1369, %v1351
        %v1374 = vmax.f32 %v1370, %v1354
        %v1375 = vmax.f32 %v1371, %v1359
        %v1376 = vmax.f32 %v1372, %v1362
        %v1377 = vmax.f32 %v1373, %v1374
        %v1378 = vmax.f32 %v1375, %v1376
        %v1379 = vmax.f32 %v1377, %v1378
        %v1380 = vrot.slane %v1379, 4
        %v1381 = vmax.f32 %v1379, %v1380
        %v1382 = vrot.slane %v1381, 2
        %v1383 = vmax.f32 %v1381, %v1382
        %v1384 = vrot.slane %v1383, 1
        %v1385 = vmax.f32 %v1383, %v1384
        %v1386 = vsub.f32 %v1303, %v1385
        %v1387 = vsub.f32 %v1306, %v1385
        %v1388 = vsub.f32 %v1311, %v1385
        %v1389 = vsub.f32 %v1314, %v1385
        %v1390 = vsub.f32 %v1319, %v1385
        %v1391 = vsub.f32 %v1322, %v1385
        %v1392 = vsub.f32 %v1327, %v1385
        %v1393 = vsub.f32 %v1330, %v1385
        %v1394 = vsub.f32 %v1335, %v1385
        %v1395 = vsub.f32 %v1338, %v1385
        %v1396 = vsub.f32 %v1343, %v1385
        %v1397 = vsub.f32 %v1346, %v1385
        %v1398 = vsub.f32 %v1351, %v1385
        %v1399 = vsub.f32 %v1354, %v1385
        %v1400 = vsub.f32 %v1359, %v1385
        %v1401 = vsub.f32 %v1362, %v1385
        %v1402 = vmul.f32 %v1386, 1.442695
        %v1403 = vpow.pop %v1402
        %v1404 = vmul.f32 %v1387, 1.442695
        %v1405 = vpow.pop %v1404
        %v1406 = vmul.f32 %v1388, 1.442695
        %v1407 = vpow.pop %v1406
        %v1408 = vmul.f32 %v1389, 1.442695
        %v1409 = vpow.pop %v1408
        %v1410 = vmul.f32 %v1390, 1.442695
        %v1411 = vpow.pop %v1410
        %v1412 = vmul.f32 %v1391, 1.442695
        %v1413 = vpow.pop %v1412
        %v1414 = vmul.f32 %v1392, 1.442695
        %v1415 = vpow.pop %v1414
        %v1416 = vmul.f32 %v1393, 1.442695
        %v1417 = vpow.pop %v1416
        %v1418 = vmul.f32 %v1394, 1.442695
        %v1419 = vpow.pop %v1418
        %v1420 = vmul.f32 %v1395, 1.442695
        %v1421 = vpow.pop %v1420
        %v1422 = vmul.f32 %v1396, 1.442695
        %v1423 = vpow.pop %v1422
        %v1424 = vmul.f32 %v1397, 1.442695
        %v1425 = vpow.pop %v1424
        %v1426 = vmul.f32 %v1398, 1.442695
        %v1427 = vpow.pop %v1426
        %v1428 = vmul.f32 %v1399, 1.442695
        %v1429 = vpow.pop %v1428
        %v1430 = vmul.f32 %v1400, 1.442695
        %v1431 = vpow.pop %v1430
        %v1432 = vmul.f32 %v1401, 1.442695
        %v1433 = vpow.pop %v1432
        %v1434 = vpack.c.bf16 %v1405, %v1403
        %v1435 = vpack.c.bf16 %v1409, %v1407
        %v1436 = vpack.c.bf16 %v1413, %v1411
        %v1437 = vpack.c.bf16 %v1417, %v1415
        %v1438 = vpack.c.bf16 %v1421, %v1419
        %v1439 = vpack.c.bf16 %v1425, %v1423
        %v1440 = vpack.c.bf16 %v1429, %v1427
        %v1441 = vpack.c.bf16 %v1433, %v1431
        %v1442 = vld [vmem:[#allocation4] sm:$0xf]
        %v1443 = vld [vmem:[#allocation4 + $0x4] sm:$0xf]
        %v1444 = vld [vmem:[#allocation4 + $0x8] sm:$0xf]
        %v1445 = vld [vmem:[#allocation4 + $0xc] sm:$0xf]
        %v1450 = vunpack.c.l.b16 %v1442
        %v1451 = vunpack.c.l.b16 %v1443
        %v1452 = vunpack.c.l.b16 %v1444
        %v1453 = vunpack.c.l.b16 %v1445
        %v1454 = vpack.c.b16 %v1451, %v1450
        %v1455 = vpack.c.b16 %v1453, %v1452
        %1458 = vmatprep.subr.bf16.mxu0 0
        %1459 = vmatpush1.bf16.msra.mxu0 %v1441
        %1460 = vmatprep.subr.bf16.mxu0 0
        %1461 = vmatpush1.bf16.msra.mxu0 %v1440
        %1462 = vmatprep.subr.bf16.mxu0 0
        %1463 = vmatpush1.bf16.msra.mxu0 %v1439
        %1464 = vmatprep.subr.bf16.mxu0 0
        %1465 = vmatpush1.bf16.msra.mxu0 %v1438
        %1466 = vmatprep.subr.bf16.mxu0 0
        %1467 = vmatpush1.bf16.msra.mxu0 %v1437
        %1468 = vmatprep.subr.bf16.mxu0 0
        %1469 = vmatpush1.bf16.msra.mxu0 %v1436
        %1470 = vmatprep.subr.bf16.mxu0 0
        %1471 = vmatpush1.bf16.msra.mxu0 %v1435
        %1472 = vmatprep.subr.bf16.mxu0 0
        %1473 = vmatpush1.bf16.msra.mxu0 %v1434
        %1474 = vmatprep.subr.bf16.mxu0 0
        %1475 = vmatpush2.bf16.msra.mxu0 0
        %1476 = vmatprep.subr.bf16.mxu0 0
        %1477 = vmatpush2.bf16.msra.mxu0 0
        %1478 = vmatprep.subr.bf16.mxu0 0
        %1479 = vmatpush2.bf16.msra.mxu0 0
        %1480 = vmatprep.subr.bf16.mxu0 0
        %1481 = vmatpush2.bf16.msra.mxu0 0
        %1482 = vmatprep.subr.bf16.mxu0 0
        %1483 = vmatpush2.bf16.msra.mxu0 0
        %1484 = vmatprep.subr.bf16.mxu0 0
        %1485 = vmatpush2.bf16.msra.mxu0 0
        %1486 = vmatprep.subr.bf16.mxu0 0
        %1487 = vmatpush2.bf16.msra.mxu0 0
        %1488 = vmatprep.subr.bf16.mxu0 0
        %1489 = vmatpush2.bf16.msra.mxu0 0
        %1490 = vmatprep.mubr.bf16.mxu0 0
        %1491 = vmatmul.mubr.bf16.gmra.mxu0 %v1454
        %v1492 = vpop.f32.mrf.mxu0
        %v1493 = vadd.f32 0.0, %v1492
        %v1494 = vpop.f32.mrf.mxu0
        %v1495 = vpop.f32.mrf.mxu0
        %v1496 = vadd.f32 0.0, %v1495
        %v1497 = vpop.f32.mrf.mxu0
        %1498 = vmatprep.mubr.bf16.mxu0 0
        %1499 = vmatmul.mubr.bf16.gmra.mxu0 %v1455
        %v1500 = vpop.f32.mrf.mxu0
        %v1501 = vadd.f32 0.0, %v1500
        %v1502 = vpop.f32.mrf.mxu0
        %v1503 = vpop.f32.mrf.mxu0
        %v1504 = vpop.f32.mrf.mxu0
        %1505 = vdwg.mxu0
        %v1506 = vrcp.pop %v1501
        %v1507 = vld [vmem:[#allocation5] sm:$0xf]
        %v1508 = vld [vmem:[#allocation5 + $0x4] sm:$0xf]
        %v1509 = vpack.c.bf16 %v1112, %v1111
        %v1512 = vunpack.c.l.b16 %v1507
        %v1513 = vunpack.c.l.b16 %v1508
        %v1514 = vpack.c.b16 %v1513, %v1512
        %v1516 = vsel %vm1243, %v1514, 0
        %1518 = vmatprep.subr.bf16.mxu0 0
        %1519 = vmatpush1.bf16.msra.mxu0 0
        %1520 = vmatprep.subr.bf16.mxu0 0
        %1521 = vmatpush1.bf16.msra.mxu0 0
        %1522 = vmatprep.subr.bf16.mxu0 0
        %1523 = vmatpush1.bf16.msra.mxu0 0
        %1524 = vmatprep.subr.bf16.mxu0 0
        %1525 = vmatpush1.bf16.msra.mxu0 0
        %1526 = vmatprep.subr.bf16.mxu0 0
        %1527 = vmatpush1.bf16.msra.mxu0 0
        %1528 = vmatprep.subr.bf16.mxu0 0
        %1529 = vmatpush1.bf16.msra.mxu0 0
        %1530 = vmatprep.subr.bf16.mxu0 0
        %1531 = vmatpush1.bf16.msra.mxu0 0
        %1532 = vmatprep.subr.bf16.mxu0 0
        %1533 = vmatpush1.bf16.msra.mxu0 %v1509
        %1534 = vmatprep.subr.bf16.mxu0 0
        %1535 = vmatpush2.bf16.msra.mxu0 0
        %1536 = vmatprep.subr.bf16.mxu0 0
        %1537 = vmatpush2.bf16.msra.mxu0 0
        %1538 = vmatprep.subr.bf16.mxu0 0
        %1539 = vmatpush2.bf16.msra.mxu0 0
        %1540 = vmatprep.subr.bf16.mxu0 0
        %1541 = vmatpush2.bf16.msra.mxu0 0
        %1542 = vmatprep.subr.bf16.mxu0 0
        %1543 = vmatpush2.bf16.msra.mxu0 0
        %1544 = vmatprep.subr.bf16.mxu0 0
        %1545 = vmatpush2.bf16.msra.mxu0 0
        %1546 = vmatprep.subr.bf16.mxu0 0
        %1547 = vmatpush2.bf16.msra.mxu0 0
        %1548 = vmatprep.subr.bf16.mxu0 0
        %1549 = vmatpush2.bf16.msra.mxu0 0
        %1550 = vmatprep.mubr.bf16.mxu0 0
        %1551 = vmatmul.mubr.bf16.gmra.mxu0 %v1516
        %v1552 = vpop.f32.mrf.mxu0
        %v1553 = vadd.f32 0.0, %v1552
        %v1554 = vpop.f32.mrf.mxu0
        %v1555 = vpop.f32.mrf.mxu0
        %v1556 = vadd.f32 0.0, %v1555
        %v1557 = vpop.f32.mrf.mxu0
        %1558 = vdwg.mxu0
        %s1559 = sld [smem:[#allocation7]]
        %v1560 = vstv %s1559
        %v1561 = vmul.f32 %v1560, %v1506
        %v1562 = vlaneseq
        %v1563 = vshrl.u32 %v1562, 7
        %v1564 = vsub.s32 0, %v1563
        %v1565 = vrot.slane %v1561, %v1564
        %v1566 = vmul.f32 %v1565, %v1493
        %v1567 = vmul.f32 %v1565, %v1496
        %v1568 = vadd.f32 %v1566, %v1553
        %v1569 = vadd.f32 %v1567, %v1556
        %v1570 = vmul.f32 %v1111, 2.0
        %v1571 = vmul.f32 %v1112, 2.0
        %v1572 = vadd.f32 %v1568, %v1570
        %v1573 = vadd.f32 %v1569, %v1571
        %1574 = vst [vmem:[%s326] sm:$0xff] %v1572
        %1575 = vst [vmem:[%s326 + $0x8] sm:$0xff] %v1573
        %s1576 = sand.u32 %s218, 1
        %s1577 = scalar_lea.sflag [#allocation8], %s1576
        %s1578 = sand.u32 %s218, 1
        %s1579 = smul.addr %s1578, 16
        %s1580 = scalar_lea.vmem [#allocation10], %s1579
        // Predicated region
        $region61: #{tpu_custom_call.1} parent=51 // pred_check
          %p1581 = pneg %p228
        $region62: #{tpu_custom_call.1} parent=51 // pred_check_branch
          %1583 = sbr.rel (%p1581) target = $region64
        $region63: #{tpu_custom_call.1} parent=51 // pred_region
          %s1585 = ssub.s32 256, 256
          %1586 = vsyncadd %s1577, %s1585
          %s1587 = smul.addr %s27, 2
          %s1588 = sadd.s32 %s28, %s1587
          %s1589 = smul.addr %s1588, 128
          %s1590 = scalar_lea.hbm %s8, %s1589
          %s1591 = sshll.u32 %s1580, 4
          %s1592 = int_to_ptr.vmem [resolvable:$true] %s1591
          %1597 = dma.vmem_to_hbm [thread:$0]  %s1592, 256, %s1590, %s1577, 128, 128, 8
        $region64: #{tpu_custom_call.1} parent=51 // pred_fallthru
          _
      $region52: #{tpu_custom_call.1} parent=5 // pred_fallthru
        _
      %p1598 = scmp.le.s32.totalorder 2, %s18
      // Predicated region
      $region65: #{tpu_custom_call.1} parent=5 // pred_check
        %p1599 = pneg %p1598
      $region66: #{tpu_custom_call.1} parent=5 // pred_check_branch
        %1601 = sbr.rel (%p1599) target = $region68
      $region67: #{tpu_custom_call.1} parent=5 // pred_region
        %s1602 = ssub.s32 %s18, 2
        // Predicated region
        $region69: #{tpu_custom_call.1} parent=67 // pred_check
          %p1603 = pneg %p234
        $region70: #{tpu_custom_call.1} parent=67 // pred_check_branch
          %1605 = sbr.rel (%p1603) target = $region72
        $region71: #{tpu_custom_call.1} parent=67 // pred_region
          %s1606 = sand.u32 %s219, 1
          %s1607 = scalar_lea.sflag [#allocation8], %s1606
          %s1608 = sand.u32 %s219, 1
          %s1609 = smul.addr %s1608, 16
          %s1610 = scalar_lea.vmem [#allocation10], %s1609
          %1611 = dma.done %s1607, 256
        $region72: #{tpu_custom_call.1} parent=67 // pred_fallthru
          _
      $region68: #{tpu_custom_call.1} parent=5 // pred_fallthru
        _
    $region6: #{tpu_custom_call.1} parent=1 // loop_footer
      %s22 = sadd.s32 1, %s18
    $region7: #{tpu_custom_call.1} parent=1 // loop_footer_branch
      %17 = sbr.rel target = $region3
    $region8: #{tpu_custom_call.1} parent=1 // loop_exit
      _
    %1612 = vsyncpa [#allocation8], 1
    %s1613 = scalar_lea.sflag [#allocation8], 1
    %1614 = vsyncpa %s1613, 1
    %1615 = vsyncpa [#allocation9], 1
    %s1616 = scalar_lea.sflag [#allocation9], 1
    %1617 = vsyncpa %s1616, 1

// kernel: tpu_custom_call.1
$region0: #{tpu_custom_call.1}
  #allocation0 [shape = 'u32[]', space=smem, size = 0x4, offset = 0x4, fixed_abs, tag = 'smem constant byte address 0x4 - core index']
  #allocation1 [shape = 'u32[144,128]{1,0:T(1,128)}', space=vmem, size = 0x12000, scoped, tag = 'internal scratch']
  #allocation2 [shape = 'bf16[16,128]{1,0:T(8,128)(2,1)}', space=vmem, size = 0x1000, scoped, tag = 'scratch operand']
  #allocation3 [shape = 'bf16[16,128]{1,0:T(8,128)(2,1)}', space=vmem, size = 0x1000, scoped, tag = 'scratch operand']
  #allocation4 [shape = 'bf16[32,128]{1,0:T(8,128)(2,1)}', space=vmem, size = 0x2000, scoped, tag = 'scratch operand']
  #allocation5 [shape = 'bf16[16,16]{1,0:T(8,128)(2,1)}', space=vmem, size = 0x1000, scoped, tag = 'scratch operand']
  #allocation6 [shape = 'f32[128,1]{1,0:T(8,128)}', space=vmem, size = 0x10000, scoped, tag = 'scratch operand']
  %s0 = inlined_call_operand.vmem [shape: f32[2,16,128], index: 0, kind: input, shape index: {}]
  %s1 = inlined_call_operand.vmem [shape: bf16[3,16,16], index: 1, kind: input, shape index: {}]
  %s2 = inlined_call_operand.vmem [shape: f32[16,1], index: 2, kind: input, shape index: {}]
  %s3 = inlined_call_operand.vmem [shape: bf16[3,16,16], index: 3, kind: input, shape index: {}]
  %s4 = inlined_call_operand.vmem [shape: f32[16,1], index: 4, kind: input, shape index: {}]
  %s5 = inlined_call_operand.vmem [shape: bf16[32,16], index: 5, kind: input, shape index: {}]
  %s6 = inlined_call_operand.vmem [shape: f32[32,1], index: 6, kind: input, shape index: {}]
  %s7 = inlined_call_operand.vmem [shape: f32[2], index: 7, kind: input, shape index: {}]
  %s8 = inlined_call_operand.hbm [shape: f32[2,16,128], index: 8, kind: output, shape index: {}]
  %s9 = sld [smem:[#allocation0]]
  $region73: #{tpu_custom_call.1} parent=0
    _
  %s11 = ssub.s32 1, %s9
  %s12 = scalar_select 0, %s11, %s9
  $region1: #{tpu_custom_call.1} parent=0
    #allocation7 [shape = 'u8[512]{0}', space=smem, size = 0x200, scoped, tag = 'input window, operand 7, single buffered']
    #allocation8 [shape = 's32[2]{0}', space=sflag, size = 0x8, scoped, tag = 'scoped memory for tpu_custom_call.1']
    #allocation9 [shape = 's32[2]{0}', space=sflag, size = 0x8, scoped, tag = 'scoped memory for tpu_custom_call.1']
    #allocation10 [shape = 'u8[16384]{0}', space=vmem, size = 0x4000, scoped, tag = 'output window, operand 0']
    %13 = vsyncpa [#allocation9], 0
    %14 = vsyncpa [#allocation8], 0
    %s15 = scalar_lea.sflag [#allocation8], 1
    %16 = vsyncpa %s15, 0
    loop: start=0, step=1, limit=4
    $region2: #{tpu_custom_call.1} parent=1 // loop_pre_header
      _
    $region3: #{tpu_custom_call.1} parent=1 // loop_header
      %s18 = sphi 0, %s22
      %p19 = scmp.ge.s32.totalorder %s18, 4
      %s25 = sphi 0, %s37
      %s26 = sphi 0, %s33
      %s27 = sphi 0, %s25
      %s28 = sphi 0, %s26
      %s29 = sphi 0, %s27
      %s30 = sphi 0, %s28
      %s40 = sphi 0, %s42
      %s43 = sphi 0, %s40
      %s44 = sphi 0, %s43
      %s60 = sphi 0, %s44
      %s64 = sphi 0, %s64
      %s66 = sphi 0, %s64
      %s67 = sphi 0, %s66
      %s81 = sphi 0, %s67
      %s85 = sphi 0, %s85
      %s87 = sphi 0, %s85
      %s88 = sphi 0, %s87
      %s102 = sphi 0, %s88
      %s106 = sphi 0, %s106
      %s108 = sphi 0, %s106
      %s109 = sphi 0, %s108
      %s123 = sphi 0, %s109
      %s127 = sphi 0, %s127
      %s129 = sphi 0, %s127
      %s130 = sphi 0, %s129
      %s144 = sphi 0, %s130
      %s148 = sphi 0, %s148
      %s150 = sphi 0, %s148
      %s151 = sphi 0, %s150
      %s165 = sphi 0, %s151
      %s169 = sphi 0, %s169
      %s171 = sphi 0, %s169
      %s172 = sphi 0, %s171
      %s186 = sphi 0, %s172
      %s190 = sphi 0, %s190
      %s192 = sphi 0, %s190
      %s193 = sphi 0, %s192
      %s207 = sphi 0, %s193
      %s215 = sphi 0, %s217
      %s218 = sphi 0, %s215
      %s219 = sphi 0, %s218
      %s235 = sphi 0, %s219
    $region4: #{tpu_custom_call.1} parent=1 // loop_header_branch
      %21 = sbr.rel (%p19) target = $region8
    $region5: #{tpu_custom_call.1} parent=1 // loop_body
      %s23 = ssub.s32 %s18, 1
      %s24 = ssub.s32 %s18, 2
      %s31 = sadd.s32 1, %s26
      %p32 = scmp.ge.s32.totalorder %s31, 1
      %s33 = scalar_select %p32, 0, %s31
      %s34 = sadd.s32 1, %s25
      %s35 = scalar_select %p32, %s34, %s25
      %p36 = scmp.ge.s32.totalorder %s35, 2
      %s37 = scalar_select %p36, 0, %s35
      %s38 = ssub.s32 %s25, %s37
      %p39 = scmp.eq.s32.totalorder %s38, 0
      %s41 = sadd.s32 %s40, 1
      %s42 = scalar_select %p39, %s40, %s41
      %p45 = pneg %p39
      %p46 = scmp.eq.s32.totalorder %s18, 1
      %p47 = por %p45, %p46
      %p48 = scmp.ne.s32.totalorder %s40, %s43
      %p49 = scmp.eq.s32.totalorder %s18, 0
      %p50 = por %p48, %p49
      %p51 = scmp.ne.s32.totalorder %s40, %s43
      %p52 = scmp.eq.s32.totalorder %s23, 1
      %p53 = por %p51, %p52
      %p54 = scmp.ne.s32.totalorder %s43, %s44
      %p55 = scmp.eq.s32.totalorder %s23, 0
      %p56 = por %p54, %p55
      %p57 = scmp.ne.s32.totalorder %s43, %s44
      %p58 = scmp.eq.s32.totalorder %s24, 1
      %p59 = por %p57, %p58
      %p61 = scmp.ne.s32.totalorder %s44, %s60
      %p62 = scmp.eq.s32.totalorder %s24, 0
      %p63 = por %p61, %p62
      %s65 = sadd.s32 %s64, 1
      %p68 = scmp.eq.s32.totalorder %s18, 1
      %p69 = scmp.ne.s32.totalorder %s64, %s66
      %p70 = scmp.eq.s32.totalorder %s18, 0
      %p71 = por %p69, %p70
      %p72 = scmp.ne.s32.totalorder %s64, %s66
      %p73 = scmp.eq.s32.totalorder %s23, 1
      %p74 = por %p72, %p73
      %p75 = scmp.ne.s32.totalorder %s66, %s67
      %p76 = scmp.eq.s32.totalorder %s23, 0
      %p77 = por %p75, %p76
      %p78 = scmp.ne.s32.totalorder %s66, %s67
      %p79 = scmp.eq.s32.totalorder %s24, 1
      %p80 = por %p78, %p79
      %p82 = scmp.ne.s32.totalorder %s67, %s81
      %p83 = scmp.eq.s32.totalorder %s24, 0
      %p84 = por %p82, %p83
      %s86 = sadd.s32 %s85, 1
      %p89 = scmp.eq.s32.totalorder %s18, 1
      %p90 = scmp.ne.s32.totalorder %s85, %s87
      %p91 = scmp.eq.s32.totalorder %s18, 0
      %p92 = por %p90, %p91
      %p93 = scmp.ne.s32.totalorder %s85, %s87
      %p94 = scmp.eq.s32.totalorder %s23, 1
      %p95 = por %p93, %p94
      %p96 = scmp.ne.s32.totalorder %s87, %s88
      %p97 = scmp.eq.s32.totalorder %s23, 0
      %p98 = por %p96, %p97
      %p99 = scmp.ne.s32.totalorder %s87, %s88
      %p100 = scmp.eq.s32.totalorder %s24, 1
      %p101 = por %p99, %p100
      %p103 = scmp.ne.s32.totalorder %s88, %s102
      %p104 = scmp.eq.s32.totalorder %s24, 0
      %p105 = por %p103, %p104
      %s107 = sadd.s32 %s106, 1
      %p110 = scmp.eq.s32.totalorder %s18, 1
      %p111 = scmp.ne.s32.totalorder %s106, %s108
      %p112 = scmp.eq.s32.totalorder %s18, 0
      %p113 = por %p111, %p112
      %p114 = scmp.ne.s32.totalorder %s106, %s108
      %p115 = scmp.eq.s32.totalorder %s23, 1
      %p116 = por %p114, %p115
      %p117 = scmp.ne.s32.totalorder %s108, %s109
      %p118 = scmp.eq.s32.totalorder %s23, 0
      %p119 = por %p117, %p118
      %p120 = scmp.ne.s32.totalorder %s108, %s109
      %p121 = scmp.eq.s32.totalorder %s24, 1
      %p122 = por %p120, %p121
      %p124 = scmp.ne.s32.totalorder %s109, %s123
      %p125 = scmp.eq.s32.totalorder %s24, 0
      %p126 = por %p124, %p125
      %s128 = sadd.s32 %s127, 1
      %p131 = scmp.eq.s32.totalorder %s18, 1
      %p132 = scmp.ne.s32.totalorder %s127, %s129
      %p133 = scmp.eq.s32.totalorder %s18, 0
      %p134 = por %p132, %p133
      %p135 = scmp.ne.s32.totalorder %s127, %s129
      %p136 = scmp.eq.s32.totalorder %s23, 1
      %p137 = por %p135, %p136
      %p138 = scmp.ne.s32.totalorder %s129, %s130
      %p139 = scmp.eq.s32.totalorder %s23, 0
      %p140 = por %p138, %p139
      %p141 = scmp.ne.s32.totalorder %s129, %s130
      %p142 = scmp.eq.s32.totalorder %s24, 1
      %p143 = por %p141, %p142
      %p145 = scmp.ne.s32.totalorder %s130, %s144
      %p146 = scmp.eq.s32.totalorder %s24, 0
      %p147 = por %p145, %p146
      %s149 = sadd.s32 %s148, 1
      %p152 = scmp.eq.s32.totalorder %s18, 1
      %p153 = scmp.ne.s32.totalorder %s148, %s150
      %p154 = scmp.eq.s32.totalorder %s18, 0
      %p155 = por %p153, %p154
      %p156 = scmp.ne.s32.totalorder %s148, %s150
      %p157 = scmp.eq.s32.totalorder %s23, 1
      %p158 = por %p156, %p157
      %p159 = scmp.ne.s32.totalorder %s150, %s151
      %p160 = scmp.eq.s32.totalorder %s23, 0
      %p161 = por %p159, %p160
      %p162 = scmp.ne.s32.totalorder %s150, %s151
      %p163 = scmp.eq.s32.totalorder %s24, 1
      %p164 = por %p162, %p163
      %p166 = scmp.ne.s32.totalorder %s151, %s165
      %p167 = scmp.eq.s32.totalorder %s24, 0
      %p168 = por %p166, %p167
      %s170 = sadd.s32 %s169, 1
      %p173 = scmp.eq.s32.totalorder %s18, 1
      %p174 = scmp.ne.s32.totalorder %s169, %s171
      %p175 = scmp.eq.s32.totalorder %s18, 0
      %p176 = por %p174, %p175
      %p177 = scmp.ne.s32.totalorder %s169, %s171
      %p178 = scmp.eq.s32.totalorder %s23, 1
      %p179 = por %p177, %p178
      %p180 = scmp.ne.s32.totalorder %s171, %s172
      %p181 = scmp.eq.s32.totalorder %s23, 0
      %p182 = por %p180, %p181
      %p183 = scmp.ne.s32.totalorder %s171, %s172
      %p184 = scmp.eq.s32.totalorder %s24, 1
      %p185 = por %p183, %p184
      %p187 = scmp.ne.s32.totalorder %s172, %s186
      %p188 = scmp.eq.s32.totalorder %s24, 0
      %p189 = por %p187, %p188
      %s191 = sadd.s32 %s190, 1
      %p194 = scmp.eq.s32.totalorder %s18, 1
      %p195 = scmp.ne.s32.totalorder %s190, %s192
      %p196 = scmp.eq.s32.totalorder %s18, 0
      %p197 = por %p195, %p196
      %p198 = scmp.ne.s32.totalorder %s190, %s192
      %p199 = scmp.eq.s32.totalorder %s23, 1
      %p200 = por %p198, %p199
      %p201 = scmp.ne.s32.totalorder %s192, %s193
      %p202 = scmp.eq.s32.totalorder %s23, 0
      %p203 = por %p201, %p202
      %p204 = scmp.ne.s32.totalorder %s192, %s193
      %p205 = scmp.eq.s32.totalorder %s24, 1
      %p206 = por %p204, %p205
      %p208 = scmp.ne.s32.totalorder %s193, %s207
      %p209 = scmp.eq.s32.totalorder %s24, 0
      %p210 = por %p208, %p209
      %s211 = ssub.s32 %s25, %s37
      %s212 = ssub.s32 %s26, %s33
      %s213 = sor.u32 %s211, %s212
      %p214 = scmp.eq.s32.totalorder %s213, 0
      %s216 = sadd.s32 %s215, 1
      %s217 = scalar_select %p214, %s215, %s216
      %p220 = pneg %p214
      %p221 = scmp.eq.s32.totalorder %s18, 1
      %p222 = por %p220, %p221
      %p223 = scmp.ne.s32.totalorder %s215, %s218
      %p224 = scmp.eq.s32.totalorder %s18, 0
      %p225 = por %p223, %p224
      %p226 = scmp.ne.s32.totalorder %s215, %s218
      %p227 = scmp.eq.s32.totalorder %s23, 1
      %p228 = por %p226, %p227
      %p229 = scmp.ne.s32.totalorder %s218, %s219
      %p230 = scmp.eq.s32.totalorder %s23, 0
      %p231 = por %p229, %p230
      %p232 = scmp.ne.s32.totalorder %s218, %s219
      %p233 = scmp.eq.s32.totalorder %s24, 1
      %p234 = por %p232, %p233
      %p236 = scmp.ne.s32.totalorder %s219, %s235
      %p237 = scmp.eq.s32.totalorder %s24, 0
      %p238 = por %p236, %p237
      %p239 = scmp.le.s32.totalorder 1, %s18
      %p240 = scmp.lt.s32.totalorder %s18, 3
      %p241 = pnand %p239, %p240
      %p242 = pneg %p241
      // Predicated region
      $region9: #{tpu_custom_call.1} parent=5 // pred_check
        _
      $region10: #{tpu_custom_call.1} parent=5 // pred_check_branch
        %244 = sbr.rel (%p241) target = $region12
      $region11: #{tpu_custom_call.1} parent=5 // pred_region
        %s245 = ssub.s32 %s18, 1
        // Predicated region
        $region13: #{tpu_custom_call.1} parent=11 // pred_check
          %p246 = pneg %p77
        $region14: #{tpu_custom_call.1} parent=11 // pred_check_branch
          %248 = sbr.rel (%p246) target = $region16
        $region15: #{tpu_custom_call.1} parent=11 // pred_region
          _
        $region16: #{tpu_custom_call.1} parent=11 // pred_fallthru
          _
        // Predicated region
        $region17: #{tpu_custom_call.1} parent=11 // pred_check
          %p249 = pneg %p98
        $region18: #{tpu_custom_call.1} parent=11 // pred_check_branch
          %251 = sbr.rel (%p249) target = $region20
        $region19: #{tpu_custom_call.1} parent=11 // pred_region
          _
        $region20: #{tpu_custom_call.1} parent=11 // pred_fallthru
          _
        // Predicated region
        $region21: #{tpu_custom_call.1} parent=11 // pred_check
          %p252 = pneg %p119
        $region22: #{tpu_custom_call.1} parent=11 // pred_check_branch
          %254 = sbr.rel (%p252) target = $region24
        $region23: #{tpu_custom_call.1} parent=11 // pred_region
          _
        $region24: #{tpu_custom_call.1} parent=11 // pred_fallthru
          _
        // Predicated region
        $region25: #{tpu_custom_call.1} parent=11 // pred_check
          %p255 = pneg %p140
        $region26: #{tpu_custom_call.1} parent=11 // pred_check_branch
          %257 = sbr.rel (%p255) target = $region28
        $region27: #{tpu_custom_call.1} parent=11 // pred_region
          _
        $region28: #{tpu_custom_call.1} parent=11 // pred_fallthru
          _
        // Predicated region
        $region29: #{tpu_custom_call.1} parent=11 // pred_check
          %p258 = pneg %p161
        $region30: #{tpu_custom_call.1} parent=11 // pred_check_branch
          %260 = sbr.rel (%p258) target = $region32
        $region31: #{tpu_custom_call.1} parent=11 // pred_region
          _
        $region32: #{tpu_custom_call.1} parent=11 // pred_fallthru
          _
        // Predicated region
        $region33: #{tpu_custom_call.1} parent=11 // pred_check
          %p261 = pneg %p182
        $region34: #{tpu_custom_call.1} parent=11 // pred_check_branch
          %263 = sbr.rel (%p261) target = $region36
        $region35: #{tpu_custom_call.1} parent=11 // pred_region
          _
        $region36: #{tpu_custom_call.1} parent=11 // pred_fallthru
          _
        // Predicated region
        $region37: #{tpu_custom_call.1} parent=11 // pred_check
          %p264 = pneg %p203
        $region38: #{tpu_custom_call.1} parent=11 // pred_check_branch
          %266 = sbr.rel (%p264) target = $region40
        $region39: #{tpu_custom_call.1} parent=11 // pred_region
          %s268 = ssub.s32 16, 16
          %269 = vsyncadd [#allocation9], %s268
          %s271 = sshll.u32 %s7, 4
          %s272 = int_to_ptr.vmem [resolvable:$true] %s271
          %274 = dma.vmem_to_smem %s272, 16, [#allocation7], [#allocation9]
        $region40: #{tpu_custom_call.1} parent=11 // pred_fallthru
          _
      $region12: #{tpu_custom_call.1} parent=5 // pred_fallthru
        _
      %p275 = scmp.lt.s32.totalorder %s18, 2
      // Predicated region
      $region41: #{tpu_custom_call.1} parent=5 // pred_check
        %p276 = pneg %p275
      $region42: #{tpu_custom_call.1} parent=5 // pred_check_branch
        %278 = sbr.rel (%p276) target = $region44
      $region43: #{tpu_custom_call.1} parent=5 // pred_region
        // Predicated region
        $region45: #{tpu_custom_call.1} parent=43 // pred_check
          %p279 = pneg %p50
        $region46: #{tpu_custom_call.1} parent=43 // pred_check_branch
          %281 = sbr.rel (%p279) target = $region48
        $region47: #{tpu_custom_call.1} parent=43 // pred_region
          %p282 = scmp.lt.s32.totalorder %s25, 1
          %s283 = scalar_select %p282, %s25, 1
          %s284 = smul.addr %s283, 2
          %s285 = smul.addr %s284, 8
          %s286 = scalar_lea.vmem %s0, %s285
        $region48: #{tpu_custom_call.1} parent=43 // pred_fallthru
          _
      $region44: #{tpu_custom_call.1} parent=5 // pred_fallthru
        _
      %p287 = scmp.le.s32.totalorder 1, %s18
      %p288 = scmp.lt.s32.totalorder %s18, 3
      %p289 = pnand %p287, %p288
      %p290 = pneg %p289
      // Predicated region
      $region49: #{tpu_custom_call.1} parent=5 // pred_check
        _
      $region50: #{tpu_custom_call.1} parent=5 // pred_check_branch
        %292 = sbr.rel (%p289) target = $region52
      $region51: #{tpu_custom_call.1} parent=5 // pred_region
        %s293 = ssub.s32 %s18, 1
        // Predicated region
        $region53: #{tpu_custom_call.1} parent=51 // pred_check
          %p294 = pneg %p203
        $region54: #{tpu_custom_call.1} parent=51 // pred_check_branch
          %296 = sbr.rel (%p294) target = $region56
        $region55: #{tpu_custom_call.1} parent=51 // pred_region
          %297 = dma.done [#allocation9], 16
        $region56: #{tpu_custom_call.1} parent=51 // pred_fallthru
          _
        %298 = sfence
        %p299 = scmp.lt.s32.totalorder %s27, 1
        %s300 = scalar_select %p299, %s27, 1
        %s301 = smul.addr %s300, 2
        %s302 = smul.addr %s301, 8
        %s303 = scalar_lea.vmem %s0, %s302
        %p304 = pneg %p56
        %p305 = pneg %p53
        %p306 = pneg %p77
        %p307 = pneg %p74
        %p308 = pneg %p98
        %p309 = pneg %p95
        %p310 = pneg %p119
        %p311 = pneg %p116
        %p312 = pneg %p140
        %p313 = pneg %p137
        %p314 = pneg %p161
        %p315 = pneg %p158
        %p316 = pneg %p182
        %p317 = pneg %p179
        %p318 = pneg %p203
        %p319 = pneg %p200
        %p320 = pneg %p231
        %p321 = pneg %p228
        %s322 = sand.u32 %s218, 1
        %s323 = scalar_lea.sflag [#allocation8], %s322
        %s324 = sand.u32 %s218, 1
        %s325 = smul.addr %s324, 16
        %s326 = scalar_lea.vmem [#allocation10], %s325
        %p327 = scmp.lt.s32.totalorder %s27, 1
        %s328 = scalar_select %p327, %s27, 1
        %s329 = smul.addr %s328, 2
        %s330 = smul.addr %s329, 8
        %s331 = scalar_lea.vmem %s0, %s330
        %p333 = scmp.eq.s32.totalorder %s28, 0
        // Predicated region
        $region57: #{tpu_custom_call.1} parent=51 // pred_check
          %p334 = pneg %p333
        $region58: #{tpu_custom_call.1} parent=51 // pred_check_branch
          %336 = sbr.rel (%p334) target = $region60
        $region59: #{tpu_custom_call.1} parent=51 // pred_region
          %v337 = vld [vmem:[%s331] sm:$0xff]
          %v338 = vld [vmem:[%s331 + $0x8] sm:$0xff]
          %v339 = vpack.c.bf16 %v338, %v337
          %v340 = vlaneseq
          %v341 = vand.u32 %v340, 127
          %vm342 = vcmp.lt.s32.totalorder %v341, 0
          %v343 = vsub.s32 0, %v341
          %v344 = vsel %vm342, %v343, %v341
          %v345 = vshrl.u32 %v344, 3
          %v346 = vand.u32 %v344, 7
          %v347 = vsub.s32 0, %v346
          %v348 = vsel %vm342, %v347, %v346
          %vm349 = vcmp.ne.s32.totalorder %v348, 0
          %vm350 = vcmp.lt.s32.totalorder %v348, 0
          %vm351 = vmand %vm350, %vm349
          %v352 = vadd.s32 %v348, 8
          %v353 = vsel %vm351, %v352, %v348
          %s354 = scalar_lea.vmem %s1, 8
          %v355 = vld [vmem:[%s354] sm:$0xf]
          %v356 = vld [vmem:[%s354 + $0x4] sm:$0xf]
          %v357 = vld [vmem:[%s1] sm:$0xf]
          %v358 = vld [vmem:[%s1 + $0x4] sm:$0xf]
          %vm359 = vcmp.ne.s32.totalorder %v353, 0
          %360 = vrot.lane.b32.xlu0 %v337, 1
          %v361 = vpop.permute.xlu0 %360
          %362 = vrot.lane.b32.xlu0 %v338, 1
          %v363 = vpop.permute.xlu0 %362
          %v364 = vsel %vm359, 1, 0
          %vm365 = vcmp.eq.s32.totalorder %v364, 1
          %v366 = vsel %vm365, %v361, 0.0
          %v367 = vsel %vm365, %v363, 0.0
          %v368 = vpack.c.bf16 %v367, %v366
          %v371 = vunpack.c.l.b16 %v357
          %v372 = vunpack.c.l.b16 %v358
          %v373 = vpack.c.b16 %v372, %v371
          %vm374 = vcmask 130048
          %v376 = vsel %vm374, %v373, 0
          %378 = vmatprep.subr.bf16.mxu0 0
          %379 = vmatpush1.bf16.msra.mxu0 0
          %380 = vmatprep.subr.bf16.mxu0 0
          %381 = vmatpush1.bf16.msra.mxu0 0
          %382 = vmatprep.subr.bf16.mxu0 0
          %383 = vmatpush1.bf16.msra.mxu0 0
          %384 = vmatprep.subr.bf16.mxu0 0
          %385 = vmatpush1.bf16.msra.mxu0 0
          %386 = vmatprep.subr.bf16.mxu0 0
          %387 = vmatpush1.bf16.msra.mxu0 0
          %388 = vmatprep.subr.bf16.mxu0 0
          %389 = vmatpush1.bf16.msra.mxu0 0
          %390 = vmatprep.subr.bf16.mxu0 0
          %391 = vmatpush1.bf16.msra.mxu0 0
          %392 = vmatprep.subr.bf16.mxu0 0
          %393 = vmatpush1.bf16.msra.mxu0 %v368
          %394 = vmatprep.subr.bf16.mxu0 0
          %395 = vmatpush2.bf16.msra.mxu0 0
          %396 = vmatprep.subr.bf16.mxu0 0
          %397 = vmatpush2.bf16.msra.mxu0 0
          %398 = vmatprep.subr.bf16.mxu0 0
          %399 = vmatpush2.bf16.msra.mxu0 0
          %400 = vmatprep.subr.bf16.mxu0 0
          %401 = vmatpush2.bf16.msra.mxu0 0
          %402 = vmatprep.subr.bf16.mxu0 0
          %403 = vmatpush2.bf16.msra.mxu0 0
          %404 = vmatprep.subr.bf16.mxu0 0
          %405 = vmatpush2.bf16.msra.mxu0 0
          %406 = vmatprep.subr.bf16.mxu0 0
          %407 = vmatpush2.bf16.msra.mxu0 0
          %408 = vmatprep.subr.bf16.mxu0 0
          %409 = vmatpush2.bf16.msra.mxu0 0
          %410 = vmatprep.mubr.bf16.mxu0 0
          %411 = vmatmul.mubr.bf16.gmra.mxu0 %v376
          %v412 = vpop.f32.mrf.mxu0
          %v413 = vadd.f32 0.0, %v412
          %v414 = vpop.f32.mrf.mxu0
          %v415 = vpop.f32.mrf.mxu0
          %v416 = vadd.f32 0.0, %v415
          %v417 = vpop.f32.mrf.mxu0
          %418 = vdwg.mxu0
          %v421 = vunpack.c.l.b16 %v355
          %v422 = vunpack.c.l.b16 %v356
          %v423 = vpack.c.b16 %v422, %v421
          %v425 = vsel %vm374, %v423, 0
          %427 = vmatprep.subr.bf16.mxu0 0
          %428 = vmatpush1.bf16.msra.mxu0 0
          %429 = vmatprep.subr.bf16.mxu0 0
          %430 = vmatpush1.bf16.msra.mxu0 0
          %431 = vmatprep.subr.bf16.mxu0 0
          %432 = vmatpush1.bf16.msra.mxu0 0
          %433 = vmatprep.subr.bf16.mxu0 0
          %434 = vmatpush1.bf16.msra.mxu0 0
          %435 = vmatprep.subr.bf16.mxu0 0
          %436 = vmatpush1.bf16.msra.mxu0 0
          %437 = vmatprep.subr.bf16.mxu0 0
          %438 = vmatpush1.bf16.msra.mxu0 0
          %439 = vmatprep.subr.bf16.mxu0 0
          %440 = vmatpush1.bf16.msra.mxu0 0
          %441 = vmatprep.subr.bf16.mxu0 0
          %442 = vmatpush1.bf16.msra.mxu0 %v339
          %443 = vmatprep.subr.bf16.mxu0 0
          %444 = vmatpush2.bf16.msra.mxu0 0
          %445 = vmatprep.subr.bf16.mxu0 0
          %446 = vmatpush2.bf16.msra.mxu0 0
          %447 = vmatprep.subr.bf16.mxu0 0
          %448 = vmatpush2.bf16.msra.mxu0 0
          %449 = vmatprep.subr.bf16.mxu0 0
          %450 = vmatpush2.bf16.msra.mxu0 0
          %451 = vmatprep.subr.bf16.mxu0 0
          %452 = vmatpush2.bf16.msra.mxu0 0
          %453 = vmatprep.subr.bf16.mxu0 0
          %454 = vmatpush2.bf16.msra.mxu0 0
          %455 = vmatprep.subr.bf16.mxu0 0
          %456 = vmatpush2.bf16.msra.mxu0 0
          %457 = vmatprep.subr.bf16.mxu0 0
          %458 = vmatpush2.bf16.msra.mxu0 0
          %459 = vmatprep.mubr.bf16.mxu0 0
          %460 = vmatmul.mubr.bf16.gmra.mxu0 %v425
          %v461 = vpop.f32.mrf.mxu0
          %v462 = vadd.f32 %v413, %v461
          %v463 = vpop.f32.mrf.mxu0
          %v464 = vpop.f32.mrf.mxu0
          %v465 = vadd.f32 %v416, %v464
          %v466 = vpop.f32.mrf.mxu0
          %467 = vdwg.mxu0
          %s468 = scalar_lea.vmem %s1, 16
          %v469 = vld [vmem:[%s468] sm:$0xf]
          %v470 = vld [vmem:[%s468 + $0x4] sm:$0xf]
          %vm471 = vcmp.ne.s32.totalorder %v353, 7
          %472 = vrot.lane.b32.xlu0 %v337, 127
          %v473 = vpop.permute.xlu0 %472
          %474 = vrot.lane.b32.xlu0 %v338, 127
          %v475 = vpop.permute.xlu0 %474
          %v476 = vsel %vm471, 1, 0
          %vm477 = vcmp.eq.s32.totalorder %v476, 1
          %v478 = vsel %vm477, %v473, 0.0
          %v479 = vsel %vm477, %v475, 0.0
          %v480 = vpack.c.bf16 %v479, %v478
          %v483 = vunpack.c.l.b16 %v469
          %v484 = vunpack.c.l.b16 %v470
          %v485 = vpack.c.b16 %v484, %v483
          %v487 = vsel %vm374, %v485, 0
          %489 = vmatprep.subr.bf16.mxu0 0
          %490 = vmatpush1.bf16.msra.mxu0 0
          %491 = vmatprep.subr.bf16.mxu0 0
          %492 = vmatpush1.bf16.msra.mxu0 0
          %493 = vmatprep.subr.bf16.mxu0 0
          %494 = vmatpush1.bf16.msra.mxu0 0
          %495 = vmatprep.subr.bf16.mxu0 0
          %496 = vmatpush1.bf16.msra.mxu0 0
          %497 = vmatprep.subr.bf16.mxu0 0
          %498 = vmatpush1.bf16.msra.mxu0 0
          %499 = vmatprep.subr.bf16.mxu0 0
          %500 = vmatpush1.bf16.msra.mxu0 0
          %501 = vmatprep.subr.bf16.mxu0 0
          %502 = vmatpush1.bf16.msra.mxu0 0
          %503 = vmatprep.subr.bf16.mxu0 0
          %504 = vmatpush1.bf16.msra.mxu0 %v480
          %505 = vmatprep.subr.bf16.mxu0 0
          %506 = vmatpush2.bf16.msra.mxu0 0
          %507 = vmatprep.subr.bf16.mxu0 0
          %508 = vmatpush2.bf16.msra.mxu0 0
          %509 = vmatprep.subr.bf16.mxu0 0
          %510 = vmatpush2.bf16.msra.mxu0 0
          %511 = vmatprep.subr.bf16.mxu0 0
          %512 = vmatpush2.bf16.msra.mxu0 0
          %513 = vmatprep.subr.bf16.mxu0 0
          %514 = vmatpush2.bf16.msra.mxu0 0
          %515 = vmatprep.subr.bf16.mxu0 0
          %516 = vmatpush2.bf16.msra.mxu0 0
          %517 = vmatprep.subr.bf16.mxu0 0
          %518 = vmatpush2.bf16.msra.mxu0 0
          %519 = vmatprep.subr.bf16.mxu0 0
          %520 = vmatpush2.bf16.msra.mxu0 0
          %521 = vmatprep.mubr.bf16.mxu0 0
          %522 = vmatmul.mubr.bf16.gmra.mxu0 %v487
          %v523 = vpop.f32.mrf.mxu0
          %v524 = vadd.f32 0.0, %v523
          %v525 = vpop.f32.mrf.mxu0
          %v526 = vpop.f32.mrf.mxu0
          %v527 = vadd.f32 0.0, %v526
          %v528 = vpop.f32.mrf.mxu0
          %529 = vdwg.mxu0
          %v530 = vadd.f32 %v462, %v524
          %v531 = vadd.f32 %v465, %v527
          %v532 = vld [vmem:[%s2] sm:$0xff]
          %v533 = vld [vmem:[%s2 + $0x8] sm:$0xff]
          %535 = vset.pattern.permute.xlu0 0
          %536 = vperm.xlu0 %535, %v532
          %v537 = vpop.permute.xlu0 %536
          %540 = vset.pattern.permute.xlu0 0
          %541 = vperm.xlu0 %540, %v533
          %v542 = vpop.permute.xlu0 %541
          %v544 = vadd.f32 %v530, %v537
          %v545 = vadd.f32 %v531, %v542
          %v546 = vmax.f32 %v544, 0.0
          %v547 = vmax.f32 %v545, 0.0
          %v548 = vpack.c.bf16 %v547, %v546
          %v550 = vunpack.c.l.b16 %v548
          %v551 = vunpack.c.h.b16 %v548
          %v552 = vpack.c.b16 %v550, %v550
          %v553 = vpack.c.b16 %v551, %v551
          %556 = vst [vmem:[#allocation2] sm:$0xf] %v552
          %557 = vst [vmem:[#allocation2 + $0x4] sm:$0xf] %v553
          %s558 = scalar_lea.vmem %s3, 8
          %v559 = vld [vmem:[%s558] sm:$0xf]
          %v560 = vld [vmem:[%s558 + $0x4] sm:$0xf]
          %v561 = vld [vmem:[%s3] sm:$0xf]
          %v562 = vld [vmem:[%s3 + $0x4] sm:$0xf]
          %vm563 = vcmp.ge.s32.totalorder %v341, 8
          %564 = vrot.lane.b32.xlu0 %v337, 8
          %v565 = vpop.permute.xlu0 %564
          %566 = vrot.lane.b32.xlu0 %v338, 8
          %v567 = vpop.permute.xlu0 %566
          %v568 = vsel %vm563, 1, 0
          %vm569 = vcmp.eq.s32.totalorder %v568, 1
          %v570 = vsel %vm569, %v565, 0.0
          %v571 = vsel %vm569, %v567, 0.0
          %v572 = vpack.c.bf16 %v571, %v570
          %v575 = vunpack.c.l.b16 %v561
          %v576 = vunpack.c.l.b16 %v562
          %v577 = vpack.c.b16 %v576, %v575
          %v579 = vsel %vm374, %v577, 0
          %581 = vmatprep.subr.bf16.mxu0 0
          %582 = vmatpush1.bf16.msra.mxu0 0
          %583 = vmatprep.subr.bf16.mxu0 0
          %584 = vmatpush1.bf16.msra.mxu0 0
          %585 = vmatprep.subr.bf16.mxu0 0
          %586 = vmatpush1.bf16.msra.mxu0 0
          %587 = vmatprep.subr.bf16.mxu0 0
          %588 = vmatpush1.bf16.msra.mxu0 0
          %589 = vmatprep.subr.bf16.mxu0 0
          %590 = vmatpush1.bf16.msra.mxu0 0
          %591 = vmatprep.subr.bf16.mxu0 0
          %592 = vmatpush1.bf16.msra.mxu0 0
          %593 = vmatprep.subr.bf16.mxu0 0
          %594 = vmatpush1.bf16.msra.mxu0 0
          %595 = vmatprep.subr.bf16.mxu0 0
          %596 = vmatpush1.bf16.msra.mxu0 %v572
          %597 = vmatprep.subr.bf16.mxu0 0
          %598 = vmatpush2.bf16.msra.mxu0 0
          %599 = vmatprep.subr.bf16.mxu0 0
          %600 = vmatpush2.bf16.msra.mxu0 0
          %601 = vmatprep.subr.bf16.mxu0 0
          %602 = vmatpush2.bf16.msra.mxu0 0
          %603 = vmatprep.subr.bf16.mxu0 0
          %604 = vmatpush2.bf16.msra.mxu0 0
          %605 = vmatprep.subr.bf16.mxu0 0
          %606 = vmatpush2.bf16.msra.mxu0 0
          %607 = vmatprep.subr.bf16.mxu0 0
          %608 = vmatpush2.bf16.msra.mxu0 0
          %609 = vmatprep.subr.bf16.mxu0 0
          %610 = vmatpush2.bf16.msra.mxu0 0
          %611 = vmatprep.subr.bf16.mxu0 0
          %612 = vmatpush2.bf16.msra.mxu0 0
          %613 = vmatprep.mubr.bf16.mxu0 0
          %614 = vmatmul.mubr.bf16.gmra.mxu0 %v579
          %v615 = vpop.f32.mrf.mxu0
          %v616 = vadd.f32 0.0, %v615
          %v617 = vpop.f32.mrf.mxu0
          %v618 = vpop.f32.mrf.mxu0
          %v619 = vadd.f32 0.0, %v618
          %v620 = vpop.f32.mrf.mxu0
          %621 = vdwg.mxu0
          %v624 = vunpack.c.l.b16 %v559
          %v625 = vunpack.c.l.b16 %v560
          %v626 = vpack.c.b16 %v625, %v624
          %v628 = vsel %vm374, %v626, 0
          %630 = vmatprep.subr.bf16.mxu0 0
          %631 = vmatpush1.bf16.msra.mxu0 0
          %632 = vmatprep.subr.bf16.mxu0 0
          %633 = vmatpush1.bf16.msra.mxu0 0
          %634 = vmatprep.subr.bf16.mxu0 0
          %635 = vmatpush1.bf16.msra.mxu0 0
          %636 = vmatprep.subr.bf16.mxu0 0
          %637 = vmatpush1.bf16.msra.mxu0 0
          %638 = vmatprep.subr.bf16.mxu0 0
          %639 = vmatpush1.bf16.msra.mxu0 0
          %640 = vmatprep.subr.bf16.mxu0 0
          %641 = vmatpush1.bf16.msra.mxu0 0
          %642 = vmatprep.subr.bf16.mxu0 0
          %643 = vmatpush1.bf16.msra.mxu0 0
          %644 = vmatprep.subr.bf16.mxu0 0
          %645 = vmatpush1.bf16.msra.mxu0 %v339
          %646 = vmatprep.subr.bf16.mxu0 0
          %647 = vmatpush2.bf16.msra.mxu0 0
          %648 = vmatprep.subr.bf16.mxu0 0
          %649 = vmatpush2.bf16.msra.mxu0 0
          %650 = vmatprep.subr.bf16.mxu0 0
          %651 = vmatpush2.bf16.msra.mxu0 0
          %652 = vmatprep.subr.bf16.mxu0 0
          %653 = vmatpush2.bf16.msra.mxu0 0
          %654 = vmatprep.subr.bf16.mxu0 0
          %655 = vmatpush2.bf16.msra.mxu0 0
          %656 = vmatprep.subr.bf16.mxu0 0
          %657 = vmatpush2.bf16.msra.mxu0 0
          %658 = vmatprep.subr.bf16.mxu0 0
          %659 = vmatpush2.bf16.msra.mxu0 0
          %660 = vmatprep.subr.bf16.mxu0 0
          %661 = vmatpush2.bf16.msra.mxu0 0
          %662 = vmatprep.mubr.bf16.mxu0 0
          %663 = vmatmul.mubr.bf16.gmra.mxu0 %v628
          %v664 = vpop.f32.mrf.mxu0
          %v665 = vadd.f32 %v616, %v664
          %v666 = vpop.f32.mrf.mxu0
          %v667 = vpop.f32.mrf.mxu0
          %v668 = vadd.f32 %v619, %v667
          %v669 = vpop.f32.mrf.mxu0
          %670 = vdwg.mxu0
          %s671 = scalar_lea.vmem %s3, 16
          %v672 = vld [vmem:[%s671] sm:$0xf]
          %v673 = vld [vmem:[%s671 + $0x4] sm:$0xf]
          %vm674 = vcmp.lt.s32.totalorder %v341, 56
          %675 = vrot.lane.b32.xlu0 %v337, 120
          %v676 = vpop.permute.xlu0 %675
          %677 = vrot.lane.b32.xlu0 %v338, 120
          %v678 = vpop.permute.xlu0 %677
          %v679 = vsel %vm674, 1, 0
          %vm680 = vcmp.eq.s32.totalorder %v679, 1
          %v681 = vsel %vm680, %v676, 0.0
          %v682 = vsel %vm680, %v678, 0.0
          %v683 = vpack.c.bf16 %v682, %v681
          %v686 = vunpack.c.l.b16 %v672
          %v687 = vunpack.c.l.b16 %v673
          %v688 = vpack.c.b16 %v687, %v686
          %v690 = vsel %vm374, %v688, 0
          %692 = vmatprep.subr.bf16.mxu0 0
          %693 = vmatpush1.bf16.msra.mxu0 0
          %694 = vmatprep.subr.bf16.mxu0 0
          %695 = vmatpush1.bf16.msra.mxu0 0
          %696 = vmatprep.subr.bf16.mxu0 0
          %697 = vmatpush1.bf16.msra.mxu0 0
          %698 = vmatprep.subr.bf16.mxu0 0
          %699 = vmatpush1.bf16.msra.mxu0 0
          %700 = vmatprep.subr.bf16.mxu0 0
          %701 = vmatpush1.bf16.msra.mxu0 0
          %702 = vmatprep.subr.bf16.mxu0 0
          %703 = vmatpush1.bf16.msra.mxu0 0
          %704 = vmatprep.subr.bf16.mxu0 0
          %705 = vmatpush1.bf16.msra.mxu0 0
          %706 = vmatprep.subr.bf16.mxu0 0
          %707 = vmatpush1.bf16.msra.mxu0 %v683
          %708 = vmatprep.subr.bf16.mxu0 0
          %709 = vmatpush2.bf16.msra.mxu0 0
          %710 = vmatprep.subr.bf16.mxu0 0
          %711 = vmatpush2.bf16.msra.mxu0 0
          %712 = vmatprep.subr.bf16.mxu0 0
          %713 = vmatpush2.bf16.msra.mxu0 0
          %714 = vmatprep.subr.bf16.mxu0 0
          %715 = vmatpush2.bf16.msra.mxu0 0
          %716 = vmatprep.subr.bf16.mxu0 0
          %717 = vmatpush2.bf16.msra.mxu0 0
          %718 = vmatprep.subr.bf16.mxu0 0
          %719 = vmatpush2.bf16.msra.mxu0 0
          %720 = vmatprep.subr.bf16.mxu0 0
          %721 = vmatpush2.bf16.msra.mxu0 0
          %722 = vmatprep.subr.bf16.mxu0 0
          %723 = vmatpush2.bf16.msra.mxu0 0
          %724 = vmatprep.mubr.bf16.mxu0 0
          %725 = vmatmul.mubr.bf16.gmra.mxu0 %v690
          %v726 = vpop.f32.mrf.mxu0
          %v727 = vadd.f32 0.0, %v726
          %v728 = vpop.f32.mrf.mxu0
          %v729 = vpop.f32.mrf.mxu0
          %v730 = vadd.f32 0.0, %v729
          %v731 = vpop.f32.mrf.mxu0
          %732 = vdwg.mxu0
          %v733 = vadd.f32 %v665, %v727
          %v734 = vadd.f32 %v668, %v730
          %v735 = vld [vmem:[%s4] sm:$0xff]
          %v736 = vld [vmem:[%s4 + $0x8] sm:$0xff]
          %738 = vset.pattern.permute.xlu0 0
          %739 = vperm.xlu0 %738, %v735
          %v740 = vpop.permute.xlu0 %739
          %743 = vset.pattern.permute.xlu0 0
          %744 = vperm.xlu0 %743, %v736
          %v745 = vpop.permute.xlu0 %744
          %v747 = vadd.f32 %v733, %v740
          %v748 = vadd.f32 %v734, %v745
          %v749 = vmax.f32 %v747, 0.0
          %v750 = vmax.f32 %v748, 0.0
          %v751 = vpack.c.bf16 %v750, %v749
          %v753 = vunpack.c.l.b16 %v751
          %v754 = vunpack.c.h.b16 %v751
          %v755 = vpack.c.b16 %v753, %v753
          %v756 = vpack.c.b16 %v754, %v754
          %759 = vst [vmem:[#allocation3] sm:$0xf] %v755
          %760 = vst [vmem:[#allocation3 + $0x4] sm:$0xf] %v756
          %v761 = vld [vmem:[%s5] sm:$0xf]
          %v762 = vld [vmem:[%s5 + $0x4] sm:$0xf]
          %v763 = vld [vmem:[%s5 + $0x8] sm:$0xf]
          %v764 = vld [vmem:[%s5 + $0xc] sm:$0xf]
          %v765 = vld [vmem:[%s6] sm:$0xff]
          %v766 = vld [vmem:[%s6 + $0x8] sm:$0xff]
          %v767 = vld [vmem:[%s6 + $0x10] sm:$0xff]
          %v768 = vld [vmem:[%s6 + $0x18] sm:$0xff]
          %770 = vset.pattern.permute.xlu0 0
          %771 = vperm.xlu0 %770, %v765
          %v772 = vpop.permute.xlu0 %771
          %775 = vset.pattern.permute.xlu0 0
          %776 = vperm.xlu0 %775, %v766
          %v777 = vpop.permute.xlu0 %776
          %780 = vset.pattern.permute.xlu0 0
          %781 = vperm.xlu0 %780, %v767
          %v782 = vpop.permute.xlu0 %781
          %785 = vset.pattern.permute.xlu0 0
          %786 = vperm.xlu0 %785, %v768
          %v787 = vpop.permute.xlu0 %786
          %v793 = vunpack.c.l.b16 %v761
          %v794 = vunpack.c.l.b16 %v762
          %v795 = vunpack.c.l.b16 %v763
          %v796 = vunpack.c.l.b16 %v764
          %v797 = vpack.c.b16 %v794, %v793
          %v798 = vpack.c.b16 %v796, %v795
          %v800 = vsel %vm374, %v797, 0
          %v803 = vsel %vm374, %v798, 0
          %805 = vmatprep.subr.bf16.mxu0 0
          %806 = vmatpush1.bf16.msra.mxu0 0
          %807 = vmatprep.subr.bf16.mxu0 0
          %808 = vmatpush1.bf16.msra.mxu0 0
          %809 = vmatprep.subr.bf16.mxu0 0
          %810 = vmatpush1.bf16.msra.mxu0 0
          %811 = vmatprep.subr.bf16.mxu0 0
          %812 = vmatpush1.bf16.msra.mxu0 0
          %813 = vmatprep.subr.bf16.mxu0 0
          %814 = vmatpush1.bf16.msra.mxu0 0
          %815 = vmatprep.subr.bf16.mxu0 0
          %816 = vmatpush1.bf16.msra.mxu0 0
          %817 = vmatprep.subr.bf16.mxu0 0
          %818 = vmatpush1.bf16.msra.mxu0 0
          %819 = vmatprep.subr.bf16.mxu0 0
          %820 = vmatpush1.bf16.msra.mxu0 %v339
          %821 = vmatprep.subr.bf16.mxu0 0
          %822 = vmatpush2.bf16.msra.mxu0 0
          %823 = vmatprep.subr.bf16.mxu0 0
          %824 = vmatpush2.bf16.msra.mxu0 0
          %825 = vmatprep.subr.bf16.mxu0 0
          %826 = vmatpush2.bf16.msra.mxu0 0
          %827 = vmatprep.subr.bf16.mxu0 0
          %828 = vmatpush2.bf16.msra.mxu0 0
          %829 = vmatprep.subr.bf16.mxu0 0
          %830 = vmatpush2.bf16.msra.mxu0 0
          %831 = vmatprep.subr.bf16.mxu0 0
          %832 = vmatpush2.bf16.msra.mxu0 0
          %833 = vmatprep.subr.bf16.mxu0 0
          %834 = vmatpush2.bf16.msra.mxu0 0
          %835 = vmatprep.subr.bf16.mxu0 0
          %836 = vmatpush2.bf16.msra.mxu0 0
          %837 = vmatprep.mubr.bf16.mxu0 0
          %838 = vmatmul.mubr.bf16.gmra.mxu0 %v800
          %v839 = vpop.f32.mrf.mxu0
          %v840 = vadd.f32 %v772, %v839
          %v841 = vpop.f32.mrf.mxu0
          %v842 = vpop.f32.mrf.mxu0
          %v843 = vadd.f32 %v777, %v842
          %v844 = vpop.f32.mrf.mxu0
          %845 = vmatprep.mubr.bf16.mxu0 0
          %846 = vmatmul.mubr.bf16.gmra.mxu0 %v803
          %v847 = vpop.f32.mrf.mxu0
          %v848 = vadd.f32 %v782, %v847
          %v849 = vpop.f32.mrf.mxu0
          %v850 = vpop.f32.mrf.mxu0
          %v851 = vadd.f32 %v787, %v850
          %v852 = vpop.f32.mrf.mxu0
          %853 = vdwg.mxu0
          %v854 = vpack.c.bf16 %v843, %v840
          %v855 = vpack.c.bf16 %v851, %v848
          %v858 = vunpack.c.l.b16 %v854
          %v859 = vunpack.c.h.b16 %v854
          %v860 = vunpack.c.l.b16 %v855
          %v861 = vunpack.c.h.b16 %v855
          %v862 = vpack.c.b16 %v858, %v858
          %v863 = vpack.c.b16 %v859, %v859
          %v864 = vpack.c.b16 %v860, %v860
          %v865 = vpack.c.b16 %v861, %v861
          %870 = vst [vmem:[#allocation4] sm:$0xf] %v862
          %871 = vst [vmem:[#allocation4 + $0x4] sm:$0xf] %v863
          %872 = vst [vmem:[#allocation4 + $0x8] sm:$0xf] %v864
          %873 = vst [vmem:[#allocation4 + $0xc] sm:$0xf] %v865
          %v874 = vunpack.c.l.bf16 %v339
          %v875 = vunpack.c.h.bf16 %v339
          %v876 = vsub.f32 %v337, %v874
          %v877 = vsub.f32 %v338, %v875
          %v878 = vpack.c.bf16 %v877, %v876
          %879 = vmatprep.subr.bf16.mxu0 0
          %880 = vmatpush1.bf16.xpose.msra.mxu0 0
          %881 = vmatprep.subr.bf16.mxu0 0
          %882 = vmatpush1.bf16.xpose.msra.mxu0 0
          %883 = vmatprep.subr.bf16.mxu0 0
          %884 = vmatpush1.bf16.xpose.msra.mxu0 0
          %885 = vmatprep.subr.bf16.mxu0 0
          %886 = vmatpush1.bf16.xpose.msra.mxu0 0
          %887 = vmatprep.subr.bf16.mxu0 0
          %888 = vmatpush1.bf16.xpose.msra.mxu0 0
          %889 = vmatprep.subr.bf16.mxu0 0
          %890 = vmatpush1.bf16.xpose.msra.mxu0 0
          %891 = vmatprep.subr.bf16.mxu0 0
          %892 = vmatpush1.bf16.xpose.msra.mxu0 0
          %893 = vmatprep.subr.bf16.mxu0 0
          %894 = vmatpush1.bf16.xpose.msra.mxu0 %v878
          %895 = vmatprep.subr.bf16.mxu0 0
          %896 = vmatpush2.bf16.xpose.msra.mxu0 0
          %897 = vmatprep.subr.bf16.mxu0 0
          %898 = vmatpush2.bf16.xpose.msra.mxu0 0
          %899 = vmatprep.subr.bf16.mxu0 0
          %900 = vmatpush2.bf16.xpose.msra.mxu0 0
          %901 = vmatprep.subr.bf16.mxu0 0
          %902 = vmatpush2.bf16.xpose.msra.mxu0 0
          %903 = vmatprep.subr.bf16.mxu0 0
          %904 = vmatpush2.bf16.xpose.msra.mxu0 0
          %905 = vmatprep.subr.bf16.mxu0 0
          %906 = vmatpush2.bf16.xpose.msra.mxu0 0
          %907 = vmatprep.subr.bf16.mxu0 0
          %908 = vmatpush2.bf16.xpose.msra.mxu0 0
          %909 = vmatprep.subr.bf16.mxu0 0
          %910 = vmatpush2.bf16.xpose.msra.mxu0 0
          %911 = vmatprep.mubr.bf16.mxu0 0
          %912 = vmatmul.mubr.bf16.gmra.mxu0 %v339
          %v913 = vpop.f32.mrf.mxu0
          %v914 = vadd.f32 0.0, %v913
          %v915 = vpop.f32.mrf.mxu0
          %v916 = vpop.f32.mrf.mxu0
          %v917 = vadd.f32 0.0, %v916
          %v918 = vpop.f32.mrf.mxu0
          %919 = vdwg.mxu0
          %920 = vmatprep.subr.bf16.mxu0 0
          %921 = vmatpush1.bf16.xpose.msra.mxu0 0
          %922 = vmatprep.subr.bf16.mxu0 0
          %923 = vmatpush1.bf16.xpose.msra.mxu0 0
          %924 = vmatprep.subr.bf16.mxu0 0
          %925 = vmatpush1.bf16.xpose.msra.mxu0 0
          %926 = vmatprep.subr.bf16.mxu0 0
          %927 = vmatpush1.bf16.xpose.msra.mxu0 0
          %928 = vmatprep.subr.bf16.mxu0 0
          %929 = vmatpush1.bf16.xpose.msra.mxu0 0
          %930 = vmatprep.subr.bf16.mxu0 0
          %931 = vmatpush1.bf16.xpose.msra.mxu0 0
          %932 = vmatprep.subr.bf16.mxu0 0
          %933 = vmatpush1.bf16.xpose.msra.mxu0 0
          %934 = vmatprep.subr.bf16.mxu0 0
          %935 = vmatpush1.bf16.xpose.msra.mxu0 %v339
          %936 = vmatprep.subr.bf16.mxu0 0
          %937 = vmatpush2.bf16.xpose.msra.mxu0 0
          %938 = vmatprep.subr.bf16.mxu0 0
          %939 = vmatpush2.bf16.xpose.msra.mxu0 0
          %940 = vmatprep.subr.bf16.mxu0 0
          %941 = vmatpush2.bf16.xpose.msra.mxu0 0
          %942 = vmatprep.subr.bf16.mxu0 0
          %943 = vmatpush2.bf16.xpose.msra.mxu0 0
          %944 = vmatprep.subr.bf16.mxu0 0
          %945 = vmatpush2.bf16.xpose.msra.mxu0 0
          %946 = vmatprep.subr.bf16.mxu0 0
          %947 = vmatpush2.bf16.xpose.msra.mxu0 0
          %948 = vmatprep.subr.bf16.mxu0 0
          %949 = vmatpush2.bf16.xpose.msra.mxu0 0
          %950 = vmatprep.subr.bf16.mxu0 0
          %951 = vmatpush2.bf16.xpose.msra.mxu0 0
          %952 = vmatprep.mubr.bf16.mxu0 0
          %953 = vmatmul.mubr.bf16.gmra.mxu0 %v339
          %v954 = vpop.f32.mrf.mxu0
          %v955 = vadd.f32 %v914, %v954
          %v956 = vpop.f32.mrf.mxu0
          %v957 = vpop.f32.mrf.mxu0
          %v958 = vadd.f32 %v917, %v957
          %v959 = vpop.f32.mrf.mxu0
          %960 = vdwg.mxu0
          %961 = vmatprep.subr.bf16.mxu0 0
          %962 = vmatpush1.bf16.xpose.msra.mxu0 0
          %963 = vmatprep.subr.bf16.mxu0 0
          %964 = vmatpush1.bf16.xpose.msra.mxu0 0
          %965 = vmatprep.subr.bf16.mxu0 0
          %966 = vmatpush1.bf16.xpose.msra.mxu0 0
          %967 = vmatprep.subr.bf16.mxu0 0
          %968 = vmatpush1.bf16.xpose.msra.mxu0 0
          %969 = vmatprep.subr.bf16.mxu0 0
          %970 = vmatpush1.bf16.xpose.msra.mxu0 0
          %971 = vmatprep.subr.bf16.mxu0 0
          %972 = vmatpush1.bf16.xpose.msra.mxu0 0
          %973 = vmatprep.subr.bf16.mxu0 0
          %974 = vmatpush1.bf16.xpose.msra.mxu0 0
          %975 = vmatprep.subr.bf16.mxu0 0
          %976 = vmatpush1.bf16.xpose.msra.mxu0 %v339
          %977 = vmatprep.subr.bf16.mxu0 0
          %978 = vmatpush2.bf16.xpose.msra.mxu0 0
          %979 = vmatprep.subr.bf16.mxu0 0
          %980 = vmatpush2.bf16.xpose.msra.mxu0 0
          %981 = vmatprep.subr.bf16.mxu0 0
          %982 = vmatpush2.bf16.xpose.msra.mxu0 0
          %983 = vmatprep.subr.bf16.mxu0 0
          %984 = vmatpush2.bf16.xpose.msra.mxu0 0
          %985 = vmatprep.subr.bf16.mxu0 0
          %986 = vmatpush2.bf16.xpose.msra.mxu0 0
          %987 = vmatprep.subr.bf16.mxu0 0
          %988 = vmatpush2.bf16.xpose.msra.mxu0 0
          %989 = vmatprep.subr.bf16.mxu0 0
          %990 = vmatpush2.bf16.xpose.msra.mxu0 0
          %991 = vmatprep.subr.bf16.mxu0 0
          %992 = vmatpush2.bf16.xpose.msra.mxu0 0
          %993 = vmatprep.mubr.bf16.mxu0 0
          %994 = vmatmul.mubr.bf16.gmra.mxu0 %v878
          %v995 = vpop.f32.mrf.mxu0
          %v996 = vadd.f32 0.0, %v995
          %v997 = vpop.f32.mrf.mxu0
          %v998 = vpop.f32.mrf.mxu0
          %v999 = vadd.f32 0.0, %v998
          %v1000 = vpop.f32.mrf.mxu0
          %1001 = vdwg.mxu0
          %v1002 = vadd.f32 %v955, %v996
          %v1003 = vadd.f32 %v958, %v999
          %v1004 = vsel %vm374, %v1002, inf
          %1005 = vmin.xlane.f32.xlu0 %v1004
          %v1006 = vpop.xlane.xlu0 %1005
          %v1007 = vsel %vm374, %v1003, inf
          %1008 = vmin.xlane.f32.xlu0 %v1007
          %v1009 = vpop.xlane.xlu0 %1008
          %v1010 = vsub.f32 %v1006, %v1002
          %v1011 = vsub.f32 %v1009, %v1003
          %v1012 = vmul.f32 %v1010, 1.442695
          %v1013 = vpow.pop %v1012
          %v1014 = vmul.f32 %v1011, 1.442695
          %v1015 = vpow.pop %v1014
          %v1016 = vsel %vm374, %v1013, 0.0
          %1017 = vadd.xlane.f32.xlu0 %v1016
          %v1018 = vpop.xlane.xlu0 %1017
          %v1019 = vsel %vm374, %v1015, 0.0
          %1020 = vadd.xlane.f32.xlu0 %v1019
          %v1021 = vpop.xlane.xlu0 %1020
          %v1022 = vrcp.pop %v1018
          %v1023 = vrcp.pop %v1021
          %s1024 = sld [smem:[#allocation7 + $0x1]]
          %v1025 = vstv %s1024
          %v1026 = vmul.f32 %v1025, %v1022
          %v1027 = vmul.f32 %v1025, %v1023
          %v1028 = vmul.f32 %v1026, %v1013
          %v1029 = vmul.f32 %v1027, %v1015
          %v1030 = vpack.c.bf16 %v1029, %v1028
          %v1032 = vunpack.c.l.b16 %v1030
          %v1033 = vunpack.c.h.b16 %v1030
          %v1034 = vpack.c.b16 %v1032, %v1032
          %v1035 = vpack.c.b16 %v1033, %v1033
          %vm1038 = vcmask 125952
          %1039 = vst.msk [vmem:[#allocation5] sm:$0xf] %vm1038, %v1034
          %1040 = vst.msk [vmem:[#allocation5 + $0x4] sm:$0xf] %vm1038, %v1035
          %v1041 = vlaneseq
          %v1042 = vshrl.u32 %v1041, 7
          %v1043 = vadd.s32 %v1042, 8
          %v1044 = vadd.s32 %v1042, 16
          %v1045 = vadd.s32 %v1042, 24
          %v1046 = vadd.s32 %v1042, 32
          %v1047 = vadd.s32 %v1042, 40
          %v1048 = vadd.s32 %v1042, 48
          %v1049 = vadd.s32 %v1042, 56
          %v1050 = vadd.s32 %v1042, 64
          %v1051 = vadd.s32 %v1042, 72
          %v1052 = vadd.s32 %v1042, 80
          %v1053 = vadd.s32 %v1042, 88
          %v1054 = vadd.s32 %v1042, 96
          %v1055 = vadd.s32 %v1042, 104
          %v1056 = vadd.s32 %v1042, 112
          %v1057 = vadd.s32 %v1042, 120
          %vm1058 = vcmp.lt.s32.totalorder %v1042, 64
          %vm1059 = vcmp.lt.s32.totalorder %v1043, 64
          %vm1060 = vcmp.lt.s32.totalorder %v1044, 64
          %vm1061 = vcmp.lt.s32.totalorder %v1045, 64
          %vm1062 = vcmp.lt.s32.totalorder %v1046, 64
          %vm1063 = vcmp.lt.s32.totalorder %v1047, 64
          %vm1064 = vcmp.lt.s32.totalorder %v1048, 64
          %vm1065 = vcmp.lt.s32.totalorder %v1049, 64
          %vm1066 = vcmp.lt.s32.totalorder %v1050, 64
          %vm1067 = vcmp.lt.s32.totalorder %v1051, 64
          %vm1068 = vcmp.lt.s32.totalorder %v1052, 64
          %vm1069 = vcmp.lt.s32.totalorder %v1053, 64
          %vm1070 = vcmp.lt.s32.totalorder %v1054, 64
          %vm1071 = vcmp.lt.s32.totalorder %v1055, 64
          %vm1072 = vcmp.lt.s32.totalorder %v1056, 64
          %vm1073 = vcmp.lt.s32.totalorder %v1057, 64
          %v1074 = vsel %vm1058, 0.0, -1e+30
          %v1075 = vsel %vm1059, 0.0, -1e+30
          %v1076 = vsel %vm1060, 0.0, -1e+30
          %v1077 = vsel %vm1061, 0.0, -1e+30
          %v1078 = vsel %vm1062, 0.0, -1e+30
          %v1079 = vsel %vm1063, 0.0, -1e+30
          %v1080 = vsel %vm1064, 0.0, -1e+30
          %v1081 = vsel %vm1065, 0.0, -1e+30
          %v1082 = vsel %vm1066, 0.0, -1e+30
          %v1083 = vsel %vm1067, 0.0, -1e+30
          %v1084 = vsel %vm1068, 0.0, -1e+30
          %v1085 = vsel %vm1069, 0.0, -1e+30
          %v1086 = vsel %vm1070, 0.0, -1e+30
          %v1087 = vsel %vm1071, 0.0, -1e+30
          %v1088 = vsel %vm1072, 0.0, -1e+30
          %v1089 = vsel %vm1073, 0.0, -1e+30
          %vm1090 = vcmask 7168
          %1091 = vst.msk [vmem:[#allocation6] sm:$0xff] %vm1090, %v1074
          %1092 = vst.msk [vmem:[#allocation6 + $0x8] sm:$0xff] %vm1090, %v1075
          %1093 = vst.msk [vmem:[#allocation6 + $0x10] sm:$0xff] %vm1090, %v1076
          %1094 = vst.msk [vmem:[#allocation6 + $0x18] sm:$0xff] %vm1090, %v1077
          %1095 = vst.msk [vmem:[#allocation6 + $0x20] sm:$0xff] %vm1090, %v1078
          %1096 = vst.msk [vmem:[#allocation6 + $0x28] sm:$0xff] %vm1090, %v1079
          %1097 = vst.msk [vmem:[#allocation6 + $0x30] sm:$0xff] %vm1090, %v1080
          %1098 = vst.msk [vmem:[#allocation6 + $0x38] sm:$0xff] %vm1090, %v1081
          %1099 = vst.msk [vmem:[#allocation6 + $0x40] sm:$0xff] %vm1090, %v1082
          %1100 = vst.msk [vmem:[#allocation6 + $0x48] sm:$0xff] %vm1090, %v1083
          %1101 = vst.msk [vmem:[#allocation6 + $0x50] sm:$0xff] %vm1090, %v1084
          %1102 = vst.msk [vmem:[#allocation6 + $0x58] sm:$0xff] %vm1090, %v1085
          %1103 = vst.msk [vmem:[#allocation6 + $0x60] sm:$0xff] %vm1090, %v1086
          %1104 = vst.msk [vmem:[#allocation6 + $0x68] sm:$0xff] %vm1090, %v1087
          %1105 = vst.msk [vmem:[#allocation6 + $0x70] sm:$0xff] %vm1090, %v1088
          %1106 = vst.msk [vmem:[#allocation6 + $0x78] sm:$0xff] %vm1090, %v1089
        $region60: #{tpu_custom_call.1} parent=51 // pred_fallthru
          _
        %s1107 = smul.u32 %s28, 128
        %s1108 = sshra.s32 %s1107, 7
        %s1109 = sand.u32 %s1107, 127
        %s1110 = scalar_lea.vmem %s331, %s1108
        %v1111 = vld [vmem:[%s1110] sm:$0xff]
        %v1112 = vld [vmem:[%s1110 + $0x8] sm:$0xff]
        %s1113 = smul.addr %s1108, 4
        %s1114 = scalar_lea.vmem [#allocation2], %s1113
        %v1115 = vld [vmem:[%s1114] sm:$0xf]
        %v1116 = vld [vmem:[%s1114 + $0x4] sm:$0xf]
        %v1117 = vld [vmem:[#allocation3] sm:$0xf]
        %v1118 = vld [vmem:[#allocation3 + $0x4] sm:$0xf]
        %v1119 = vld [vmem:[#allocation6] sm:$0xff]
        %v1120 = vld [vmem:[#allocation6 + $0x8] sm:$0xff]
        %v1121 = vld [vmem:[#allocation6 + $0x10] sm:$0xff]
        %v1122 = vld [vmem:[#allocation6 + $0x18] sm:$0xff]
        %v1123 = vld [vmem:[#allocation6 + $0x20] sm:$0xff]
        %v1124 = vld [vmem:[#allocation6 + $0x28] sm:$0xff]
        %v1125 = vld [vmem:[#allocation6 + $0x30] sm:$0xff]
        %v1126 = vld [vmem:[#allocation6 + $0x38] sm:$0xff]
        %v1127 = vld [vmem:[#allocation6 + $0x40] sm:$0xff]
        %v1128 = vld [vmem:[#allocation6 + $0x48] sm:$0xff]
        %v1129 = vld [vmem:[#allocation6 + $0x50] sm:$0xff]
        %v1130 = vld [vmem:[#allocation6 + $0x58] sm:$0xff]
        %v1131 = vld [vmem:[#allocation6 + $0x60] sm:$0xff]
        %v1132 = vld [vmem:[#allocation6 + $0x68] sm:$0xff]
        %v1133 = vld [vmem:[#allocation6 + $0x70] sm:$0xff]
        %v1134 = vld [vmem:[#allocation6 + $0x78] sm:$0xff]
        %1136 = vset.pattern.permute.xlu0 0
        %1137 = vperm.xlu0 %1136, %v1119
        %v1138 = vpop.permute.xlu0 %1137
        %1141 = vset.pattern.permute.xlu0 0
        %1142 = vperm.xlu0 %1141, %v1120
        %v1143 = vpop.permute.xlu0 %1142
        %1146 = vset.pattern.permute.xlu0 0
        %1147 = vperm.xlu0 %1146, %v1121
        %v1148 = vpop.permute.xlu0 %1147
        %1151 = vset.pattern.permute.xlu0 0
        %1152 = vperm.xlu0 %1151, %v1122
        %v1153 = vpop.permute.xlu0 %1152
        %1156 = vset.pattern.permute.xlu0 0
        %1157 = vperm.xlu0 %1156, %v1123
        %v1158 = vpop.permute.xlu0 %1157
        %1161 = vset.pattern.permute.xlu0 0
        %1162 = vperm.xlu0 %1161, %v1124
        %v1163 = vpop.permute.xlu0 %1162
        %1166 = vset.pattern.permute.xlu0 0
        %1167 = vperm.xlu0 %1166, %v1125
        %v1168 = vpop.permute.xlu0 %1167
        %1171 = vset.pattern.permute.xlu0 0
        %1172 = vperm.xlu0 %1171, %v1126
        %v1173 = vpop.permute.xlu0 %1172
        %1176 = vset.pattern.permute.xlu0 0
        %1177 = vperm.xlu0 %1176, %v1127
        %v1178 = vpop.permute.xlu0 %1177
        %1181 = vset.pattern.permute.xlu0 0
        %1182 = vperm.xlu0 %1181, %v1128
        %v1183 = vpop.permute.xlu0 %1182
        %1186 = vset.pattern.permute.xlu0 0
        %1187 = vperm.xlu0 %1186, %v1129
        %v1188 = vpop.permute.xlu0 %1187
        %1191 = vset.pattern.permute.xlu0 0
        %1192 = vperm.xlu0 %1191, %v1130
        %v1193 = vpop.permute.xlu0 %1192
        %1196 = vset.pattern.permute.xlu0 0
        %1197 = vperm.xlu0 %1196, %v1131
        %v1198 = vpop.permute.xlu0 %1197
        %1201 = vset.pattern.permute.xlu0 0
        %1202 = vperm.xlu0 %1201, %v1132
        %v1203 = vpop.permute.xlu0 %1202
        %1206 = vset.pattern.permute.xlu0 0
        %1207 = vperm.xlu0 %1206, %v1133
        %v1208 = vpop.permute.xlu0 %1207
        %1211 = vset.pattern.permute.xlu0 0
        %1212 = vperm.xlu0 %1211, %v1134
        %v1213 = vpop.permute.xlu0 %1212
        %v1217 = vunpack.c.l.b16 %v1117
        %v1218 = vunpack.c.l.b16 %v1118
        %v1219 = vpack.c.b16 %v1218, %v1217
        %1221 = vxpose.xlu0.c.b16.start [1/8] %v1219, 128
        %1222 = vxpose.xlu0.c.b16.cont [2/8] 0, 128
        %1223 = vxpose.xlu0.c.b16.cont [3/8] 0, 128
        %1224 = vxpose.xlu0.c.b16.cont [4/8] 0, 128
        %1225 = vxpose.xlu0.c.b16.cont [5/8] 0, 128
        %1226 = vxpose.xlu0.c.b16.cont [6/8] 0, 128
        %1227 = vxpose.xlu0.c.b16.cont [7/8] 0, 128
        %1228 = vxpose.xlu0.c.b16.end [8/8] 0, 128
        %v1229 = vpop.trf.xlu0
        %v1230 = vpop.trf.xlu0
        %v1231 = vpop.trf.xlu0
        %v1232 = vpop.trf.xlu0
        %v1233 = vpop.trf.xlu0
        %v1234 = vpop.trf.xlu0
        %v1235 = vpop.trf.xlu0
        %v1236 = vpop.trf.xlu0
        %v1239 = vunpack.c.l.b16 %v1115
        %v1240 = vunpack.c.l.b16 %v1116
        %v1241 = vpack.c.b16 %v1240, %v1239
        %vm1243 = vcmask 130048
        %v1245 = vsel %vm1243, %v1229, 0
        %v1248 = vsel %vm1243, %v1230, 0
        %v1251 = vsel %vm1243, %v1231, 0
        %v1254 = vsel %vm1243, %v1232, 0
        %v1257 = vsel %vm1243, %v1233, 0
        %v1260 = vsel %vm1243, %v1234, 0
        %v1263 = vsel %vm1243, %v1235, 0
        %v1266 = vsel %vm1243, %v1236, 0
        %1268 = vmatprep.subr.bf16.mxu0 0
        %1269 = vmatpush1.bf16.msra.mxu0 0
        %1270 = vmatprep.subr.bf16.mxu0 0
        %1271 = vmatpush1.bf16.msra.mxu0 0
        %1272 = vmatprep.subr.bf16.mxu0 0
        %1273 = vmatpush1.bf16.msra.mxu0 0
        %1274 = vmatprep.subr.bf16.mxu0 0
        %1275 = vmatpush1.bf16.msra.mxu0 0
        %1276 = vmatprep.subr.bf16.mxu0 0
        %1277 = vmatpush1.bf16.msra.mxu0 0
        %1278 = vmatprep.subr.bf16.mxu0 0
        %1279 = vmatpush1.bf16.msra.mxu0 0
        %1280 = vmatprep.subr.bf16.mxu0 0
        %1281 = vmatpush1.bf16.msra.mxu0 0
        %1282 = vmatprep.subr.bf16.mxu0 0
        %1283 = vmatpush1.bf16.msra.mxu0 %v1241
        %1284 = vmatprep.subr.bf16.mxu0 0
        %1285 = vmatpush2.bf16.msra.mxu0 0
        %1286 = vmatprep.subr.bf16.mxu0 0
        %1287 = vmatpush2.bf16.msra.mxu0 0
        %1288 = vmatprep.subr.bf16.mxu0 0
        %1289 = vmatpush2.bf16.msra.mxu0 0
        %1290 = vmatprep.subr.bf16.mxu0 0
        %1291 = vmatpush2.bf16.msra.mxu0 0
        %1292 = vmatprep.subr.bf16.mxu0 0
        %1293 = vmatpush2.bf16.msra.mxu0 0
        %1294 = vmatprep.subr.bf16.mxu0 0
        %1295 = vmatpush2.bf16.msra.mxu0 0
        %1296 = vmatprep.subr.bf16.mxu0 0
        %1297 = vmatpush2.bf16.msra.mxu0 0
        %1298 = vmatprep.subr.bf16.mxu0 0
        %1299 = vmatpush2.bf16.msra.mxu0 0
        %1300 = vmatprep.mubr.bf16.mxu0 0
        %1301 = vmatmul.mubr.bf16.gmra.mxu0 %v1245
        %v1302 = vpop.f32.mrf.mxu0
        %v1303 = vadd.f32 %v1138, %v1302
        %v1304 = vpop.f32.mrf.mxu0
        %v1305 = vpop.f32.mrf.mxu0
        %v1306 = vadd.f32 %v1143, %v1305
        %v1307 = vpop.f32.mrf.mxu0
        %1308 = vmatprep.mubr.bf16.mxu0 0
        %1309 = vmatmul.mubr.bf16.gmra.mxu0 %v1248
        %v1310 = vpop.f32.mrf.mxu0
        %v1311 = vadd.f32 %v1148, %v1310
        %v1312 = vpop.f32.mrf.mxu0
        %v1313 = vpop.f32.mrf.mxu0
        %v1314 = vadd.f32 %v1153, %v1313
        %v1315 = vpop.f32.mrf.mxu0
        %1316 = vmatprep.mubr.bf16.mxu0 0
        %1317 = vmatmul.mubr.bf16.gmra.mxu0 %v1251
        %v1318 = vpop.f32.mrf.mxu0
        %v1319 = vadd.f32 %v1158, %v1318
        %v1320 = vpop.f32.mrf.mxu0
        %v1321 = vpop.f32.mrf.mxu0
        %v1322 = vadd.f32 %v1163, %v1321
        %v1323 = vpop.f32.mrf.mxu0
        %1324 = vmatprep.mubr.bf16.mxu0 0
        %1325 = vmatmul.mubr.bf16.gmra.mxu0 %v1254
        %v1326 = vpop.f32.mrf.mxu0
        %v1327 = vadd.f32 %v1168, %v1326
        %v1328 = vpop.f32.mrf.mxu0
        %v1329 = vpop.f32.mrf.mxu0
        %v1330 = vadd.f32 %v1173, %v1329
        %v1331 = vpop.f32.mrf.mxu0
        %1332 = vmatprep.mubr.bf16.mxu0 0
        %1333 = vmatmul.mubr.bf16.gmra.mxu0 %v1257
        %v1334 = vpop.f32.mrf.mxu0
        %v1335 = vadd.f32 %v1178, %v1334
        %v1336 = vpop.f32.mrf.mxu0
        %v1337 = vpop.f32.mrf.mxu0
        %v1338 = vadd.f32 %v1183, %v1337
        %v1339 = vpop.f32.mrf.mxu0
        %1340 = vmatprep.mubr.bf16.mxu0 0
        %1341 = vmatmul.mubr.bf16.gmra.mxu0 %v1260
        %v1342 = vpop.f32.mrf.mxu0
        %v1343 = vadd.f32 %v1188, %v1342
        %v1344 = vpop.f32.mrf.mxu0
        %v1345 = vpop.f32.mrf.mxu0
        %v1346 = vadd.f32 %v1193, %v1345
        %v1347 = vpop.f32.mrf.mxu0
        %1348 = vmatprep.mubr.bf16.mxu0 0
        %1349 = vmatmul.mubr.bf16.gmra.mxu0 %v1263
        %v1350 = vpop.f32.mrf.mxu0
        %v1351 = vadd.f32 %v1198, %v1350
        %v1352 = vpop.f32.mrf.mxu0
        %v1353 = vpop.f32.mrf.mxu0
        %v1354 = vadd.f32 %v1203, %v1353
        %v1355 = vpop.f32.mrf.mxu0
        %1356 = vmatprep.mubr.bf16.mxu0 0
        %1357 = vmatmul.mubr.bf16.gmra.mxu0 %v1266
        %v1358 = vpop.f32.mrf.mxu0
        %v1359 = vadd.f32 %v1208, %v1358
        %v1360 = vpop.f32.mrf.mxu0
        %v1361 = vpop.f32.mrf.mxu0
        %v1362 = vadd.f32 %v1213, %v1361
        %v1363 = vpop.f32.mrf.mxu0
        %1364 = vdwg.mxu0
        %v1365 = vmax.f32 %v1303, %v1319
        %v1366 = vmax.f32 %v1306, %v1322
        %v1367 = vmax.f32 %v1311, %v1327
        %v1368 = vmax.f32 %v1314, %v1330
        %v1369 = vmax.f32 %v1365, %v1335
        %v1370 = vmax.f32 %v1366, %v1338
        %v1371 = vmax.f32 %v1367, %v1343
        %v1372 = vmax.f32 %v1368, %v1346
        %v1373 = vmax.f32 %v1369, %v1351
        %v1374 = vmax.f32 %v1370, %v1354
        %v1375 = vmax.f32 %v1371, %v1359
        %v1376 = vmax.f32 %v1372, %v1362
        %v1377 = vmax.f32 %v1373, %v1374
        %v1378 = vmax.f32 %v1375, %v1376
        %v1379 = vmax.f32 %v1377, %v1378
        %v1380 = vrot.slane %v1379, 4
        %v1381 = vmax.f32 %v1379, %v1380
        %v1382 = vrot.slane %v1381, 2
        %v1383 = vmax.f32 %v1381, %v1382
        %v1384 = vrot.slane %v1383, 1
        %v1385 = vmax.f32 %v1383, %v1384
        %v1386 = vsub.f32 %v1303, %v1385
        %v1387 = vsub.f32 %v1306, %v1385
        %v1388 = vsub.f32 %v1311, %v1385
        %v1389 = vsub.f32 %v1314, %v1385
        %v1390 = vsub.f32 %v1319, %v1385
        %v1391 = vsub.f32 %v1322, %v1385
        %v1392 = vsub.f32 %v1327, %v1385
        %v1393 = vsub.f32 %v1330, %v1385
        %v1394 = vsub.f32 %v1335, %v1385
        %v1395 = vsub.f32 %v1338, %v1385
        %v1396 = vsub.f32 %v1343, %v1385
        %v1397 = vsub.f32 %v1346, %v1385
        %v1398 = vsub.f32 %v1351, %v1385
        %v1399 = vsub.f32 %v1354, %v1385
        %v1400 = vsub.f32 %v1359, %v1385
        %v1401 = vsub.f32 %v1362, %v1385
        %v1402 = vmul.f32 %v1386, 1.442695
        %v1403 = vpow.pop %v1402
        %v1404 = vmul.f32 %v1387, 1.442695
        %v1405 = vpow.pop %v1404
        %v1406 = vmul.f32 %v1388, 1.442695
        %v1407 = vpow.pop %v1406
        %v1408 = vmul.f32 %v1389, 1.442695
        %v1409 = vpow.pop %v1408
        %v1410 = vmul.f32 %v1390, 1.442695
        %v1411 = vpow.pop %v1410
        %v1412 = vmul.f32 %v1391, 1.442695
        %v1413 = vpow.pop %v1412
        %v1414 = vmul.f32 %v1392, 1.442695
        %v1415 = vpow.pop %v1414
        %v1416 = vmul.f32 %v1393, 1.442695
        %v1417 = vpow.pop %v1416
        %v1418 = vmul.f32 %v1394, 1.442695
        %v1419 = vpow.pop %v1418
        %v1420 = vmul.f32 %v1395, 1.442695
        %v1421 = vpow.pop %v1420
        %v1422 = vmul.f32 %v1396, 1.442695
        %v1423 = vpow.pop %v1422
        %v1424 = vmul.f32 %v1397, 1.442695
        %v1425 = vpow.pop %v1424
        %v1426 = vmul.f32 %v1398, 1.442695
        %v1427 = vpow.pop %v1426
        %v1428 = vmul.f32 %v1399, 1.442695
        %v1429 = vpow.pop %v1428
        %v1430 = vmul.f32 %v1400, 1.442695
        %v1431 = vpow.pop %v1430
        %v1432 = vmul.f32 %v1401, 1.442695
        %v1433 = vpow.pop %v1432
        %v1434 = vpack.c.bf16 %v1405, %v1403
        %v1435 = vpack.c.bf16 %v1409, %v1407
        %v1436 = vpack.c.bf16 %v1413, %v1411
        %v1437 = vpack.c.bf16 %v1417, %v1415
        %v1438 = vpack.c.bf16 %v1421, %v1419
        %v1439 = vpack.c.bf16 %v1425, %v1423
        %v1440 = vpack.c.bf16 %v1429, %v1427
        %v1441 = vpack.c.bf16 %v1433, %v1431
        %v1442 = vld [vmem:[#allocation4] sm:$0xf]
        %v1443 = vld [vmem:[#allocation4 + $0x4] sm:$0xf]
        %v1444 = vld [vmem:[#allocation4 + $0x8] sm:$0xf]
        %v1445 = vld [vmem:[#allocation4 + $0xc] sm:$0xf]
        %v1450 = vunpack.c.l.b16 %v1442
        %v1451 = vunpack.c.l.b16 %v1443
        %v1452 = vunpack.c.l.b16 %v1444
        %v1453 = vunpack.c.l.b16 %v1445
        %v1454 = vpack.c.b16 %v1451, %v1450
        %v1455 = vpack.c.b16 %v1453, %v1452
        %1458 = vmatprep.subr.bf16.mxu0 0
        %1459 = vmatpush1.bf16.msra.mxu0 %v1441
        %1460 = vmatprep.subr.bf16.mxu0 0
        %1461 = vmatpush1.bf16.msra.mxu0 %v1440
        %1462 = vmatprep.subr.bf16.mxu0 0
        %1463 = vmatpush1.bf16.msra.mxu0 %v1439
        %1464 = vmatprep.subr.bf16.mxu0 0
        %1465 = vmatpush1.bf16.msra.mxu0 %v1438
        %1466 = vmatprep.subr.bf16.mxu0 0
        %1467 = vmatpush1.bf16.msra.mxu0 %v1437
        %1468 = vmatprep.subr.bf16.mxu0 0
        %1469 = vmatpush1.bf16.msra.mxu0 %v1436
        %1470 = vmatprep.subr.bf16.mxu0 0
        %1471 = vmatpush1.bf16.msra.mxu0 %v1435
        %1472 = vmatprep.subr.bf16.mxu0 0
        %1473 = vmatpush1.bf16.msra.mxu0 %v1434
        %1474 = vmatprep.subr.bf16.mxu0 0
        %1475 = vmatpush2.bf16.msra.mxu0 0
        %1476 = vmatprep.subr.bf16.mxu0 0
        %1477 = vmatpush2.bf16.msra.mxu0 0
        %1478 = vmatprep.subr.bf16.mxu0 0
        %1479 = vmatpush2.bf16.msra.mxu0 0
        %1480 = vmatprep.subr.bf16.mxu0 0
        %1481 = vmatpush2.bf16.msra.mxu0 0
        %1482 = vmatprep.subr.bf16.mxu0 0
        %1483 = vmatpush2.bf16.msra.mxu0 0
        %1484 = vmatprep.subr.bf16.mxu0 0
        %1485 = vmatpush2.bf16.msra.mxu0 0
        %1486 = vmatprep.subr.bf16.mxu0 0
        %1487 = vmatpush2.bf16.msra.mxu0 0
        %1488 = vmatprep.subr.bf16.mxu0 0
        %1489 = vmatpush2.bf16.msra.mxu0 0
        %1490 = vmatprep.mubr.bf16.mxu0 0
        %1491 = vmatmul.mubr.bf16.gmra.mxu0 %v1454
        %v1492 = vpop.f32.mrf.mxu0
        %v1493 = vadd.f32 0.0, %v1492
        %v1494 = vpop.f32.mrf.mxu0
        %v1495 = vpop.f32.mrf.mxu0
        %v1496 = vadd.f32 0.0, %v1495
        %v1497 = vpop.f32.mrf.mxu0
        %1498 = vmatprep.mubr.bf16.mxu0 0
        %1499 = vmatmul.mubr.bf16.gmra.mxu0 %v1455
        %v1500 = vpop.f32.mrf.mxu0
        %v1501 = vadd.f32 0.0, %v1500
        %v1502 = vpop.f32.mrf.mxu0
        %v1503 = vpop.f32.mrf.mxu0
        %v1504 = vpop.f32.mrf.mxu0
        %1505 = vdwg.mxu0
        %v1506 = vrcp.pop %v1501
        %v1507 = vld [vmem:[#allocation5] sm:$0xf]
        %v1508 = vld [vmem:[#allocation5 + $0x4] sm:$0xf]
        %v1509 = vpack.c.bf16 %v1112, %v1111
        %v1512 = vunpack.c.l.b16 %v1507
        %v1513 = vunpack.c.l.b16 %v1508
        %v1514 = vpack.c.b16 %v1513, %v1512
        %v1516 = vsel %vm1243, %v1514, 0
        %1518 = vmatprep.subr.bf16.mxu0 0
        %1519 = vmatpush1.bf16.msra.mxu0 0
        %1520 = vmatprep.subr.bf16.mxu0 0
        %1521 = vmatpush1.bf16.msra.mxu0 0
        %1522 = vmatprep.subr.bf16.mxu0 0
        %1523 = vmatpush1.bf16.msra.mxu0 0
        %1524 = vmatprep.subr.bf16.mxu0 0
        %1525 = vmatpush1.bf16.msra.mxu0 0
        %1526 = vmatprep.subr.bf16.mxu0 0
        %1527 = vmatpush1.bf16.msra.mxu0 0
        %1528 = vmatprep.subr.bf16.mxu0 0
        %1529 = vmatpush1.bf16.msra.mxu0 0
        %1530 = vmatprep.subr.bf16.mxu0 0
        %1531 = vmatpush1.bf16.msra.mxu0 0
        %1532 = vmatprep.subr.bf16.mxu0 0
        %1533 = vmatpush1.bf16.msra.mxu0 %v1509
        %1534 = vmatprep.subr.bf16.mxu0 0
        %1535 = vmatpush2.bf16.msra.mxu0 0
        %1536 = vmatprep.subr.bf16.mxu0 0
        %1537 = vmatpush2.bf16.msra.mxu0 0
        %1538 = vmatprep.subr.bf16.mxu0 0
        %1539 = vmatpush2.bf16.msra.mxu0 0
        %1540 = vmatprep.subr.bf16.mxu0 0
        %1541 = vmatpush2.bf16.msra.mxu0 0
        %1542 = vmatprep.subr.bf16.mxu0 0
        %1543 = vmatpush2.bf16.msra.mxu0 0
        %1544 = vmatprep.subr.bf16.mxu0 0
        %1545 = vmatpush2.bf16.msra.mxu0 0
        %1546 = vmatprep.subr.bf16.mxu0 0
        %1547 = vmatpush2.bf16.msra.mxu0 0
        %1548 = vmatprep.subr.bf16.mxu0 0
        %1549 = vmatpush2.bf16.msra.mxu0 0
        %1550 = vmatprep.mubr.bf16.mxu0 0
        %1551 = vmatmul.mubr.bf16.gmra.mxu0 %v1516
        %v1552 = vpop.f32.mrf.mxu0
        %v1553 = vadd.f32 0.0, %v1552
        %v1554 = vpop.f32.mrf.mxu0
        %v1555 = vpop.f32.mrf.mxu0
        %v1556 = vadd.f32 0.0, %v1555
        %v1557 = vpop.f32.mrf.mxu0
        %1558 = vdwg.mxu0
        %s1559 = sld [smem:[#allocation7]]
        %v1560 = vstv %s1559
        %v1561 = vmul.f32 %v1560, %v1506
        %v1562 = vlaneseq
        %v1563 = vshrl.u32 %v1562, 7
        %v1564 = vsub.s32 0, %v1563
        %v1565 = vrot.slane %v1561, %v1564
        %v1566 = vmul.f32 %v1565, %v1493
        %v1567 = vmul.f32 %v1565, %v1496
        %v1568 = vadd.f32 %v1566, %v1553
        %v1569 = vadd.f32 %v1567, %v1556
        %v1570 = vmul.f32 %v1111, 2.0
        %v1571 = vmul.f32 %v1112, 2.0
        %v1572 = vadd.f32 %v1568, %v1570
        %v1573 = vadd.f32 %v1569, %v1571
        %1574 = vst [vmem:[%s326] sm:$0xff] %v1572
        %1575 = vst [vmem:[%s326 + $0x8] sm:$0xff] %v1573
        %s1576 = sand.u32 %s218, 1
        %s1577 = scalar_lea.sflag [#allocation8], %s1576
        %s1578 = sand.u32 %s218, 1
        %s1579 = smul.addr %s1578, 16
        %s1580 = scalar_lea.vmem [#allocation10], %s1579
        // Predicated region
        $region61: #{tpu_custom_call.1} parent=51 // pred_check
          %p1581 = pneg %p228
        $region62: #{tpu_custom_call.1} parent=51 // pred_check_branch
          %1583 = sbr.rel (%p1581) target = $region64
        $region63: #{tpu_custom_call.1} parent=51 // pred_region
          %s1585 = ssub.s32 256, 256
          %1586 = vsyncadd %s1577, %s1585
          %s1587 = smul.addr %s27, 2
          %s1588 = sadd.s32 %s28, %s1587
          %s1589 = smul.addr %s1588, 128
          %s1590 = scalar_lea.hbm %s8, %s1589
          %s1591 = sshll.u32 %s1580, 4
          %s1592 = int_to_ptr.vmem [resolvable:$true] %s1591
          %1597 = dma.vmem_to_hbm [thread:$0]  %s1592, 256, %s1590, %s1577, 128, 128, 8
        $region64: #{tpu_custom_call.1} parent=51 // pred_fallthru
          _
      $region52: #{tpu_custom_call.1} parent=5 // pred_fallthru
        _
      %p1598 = scmp.le.s32.totalorder 2, %s18
      // Predicated region
      $region65: #{tpu_custom_call.1} parent=5 // pred_check
        %p1599 = pneg %p1598
      $region66: #{tpu_custom_call.1} parent=5 // pred_check_branch
        %1601 = sbr.rel (%p1599) target = $region68
      $region67: #{tpu_custom_call.1} parent=5 // pred_region
        %s1602 = ssub.s32 %s18, 2
        // Predicated region
        $region69: #{tpu_custom_call.1} parent=67 // pred_check
          %p1603 = pneg %p234
        $region70: #{tpu_custom_call.1} parent=67 // pred_check_branch
          %1605 = sbr.rel (%p1603) target = $region72
        $region71: #{tpu_custom_call.1} parent=67 // pred_region
          %s1606 = sand.u32 %s219, 1
          %s1607 = scalar_lea.sflag [#allocation8], %s1606
          %s1608 = sand.u32 %s219, 1
          %s1609 = smul.addr %s1608, 16
          %s1610 = scalar_lea.vmem [#allocation10], %s1609
          %1611 = dma.done %s1607, 256
        $region72: #{tpu_custom_call.1} parent=67 // pred_fallthru
          _
      $region68: #{tpu_custom_call.1} parent=5 // pred_fallthru
        _
    $region6: #{tpu_custom_call.1} parent=1 // loop_footer
      %s22 = sadd.s32 1, %s18
    $region7: #{tpu_custom_call.1} parent=1 // loop_footer_branch
      %17 = sbr.rel target = $region3
    $region8: #{tpu_custom_call.1} parent=1 // loop_exit
      _
    %1612 = vsyncpa [#allocation8], 1
    %s1613 = scalar_lea.sflag [#allocation8], 1
    %1614 = vsyncpa %s1613, 1
    %1615 = vsyncpa [#allocation9], 1
    %s1616 = scalar_lea.sflag [#allocation9], 1
    %1617 = vsyncpa %s1616, 1

</llo_original>
